<compile_context>
chip_gen: v5e
topology: v5e:2x2
jax: 0.10.0
libtpu: 0.0.40
codegen_flags: <defaults>
</compile_context>

<pallas_src>
import math
import functools

import jax
import jax.numpy as jnp
from jax import lax
from jax.experimental import pallas as pl
from jax.experimental.pallas import tpu as pltpu

# ---- model hyperparameters (small, consistent with Encoder.__init__) ----
VOCAB = 50
D_MODEL = 32
N_LAYERS = 2
HEADS = 4
D_K = D_MODEL // HEADS        # 8
D_HALF = D_K // 2             # 4
HH = HEADS * D_HALF           # 16
D_FF = 2048                   # FeedForward default d_ff=2048
EPS = 1e-6
B = 2
S = 8
N_TOK = B * S                 # 16


# --------------------------------------------------------------------------
# Per-layer fused kernel (grid axis = layer; residual carried in VMEM scratch)
# --------------------------------------------------------------------------
def _encoder_layer_kernel(x_ref, mask_ref, cost_ref, sint_ref,
                          na_ref, nb_ref, fa_ref, fb_ref,
                          wqkv_ref, bqkv_ref, wo_ref, bo_ref,
                          w1_ref, b1_ref, w2_ref, b2_ref,
                          o_ref, x_acc, *, heads, d_k):
    n_tok, d_model = x_ref.shape
    half = d_k // 2
    hh = heads * half

    def norm(x, a, bparam):
        # alpha * (x - mean) / (std_unbiased + eps) + bias   (matches torch.std)
        mean = jnp.mean(x, axis=-1, keepdims=True)
        xc = x - mean
        var = jnp.sum(xc * xc, axis=-1, keepdims=True) * (1.0 / (d_model - 1))
        return a * xc / (jnp.sqrt(var) + EPS) + bparam

    l = pl.program_id(0)

    @pl.when(l == 0)
    def _():
        x_acc[...] = x_ref[...]          # load the embedded tokens once

    x = x_acc[...]                       # (N, D) running residual (f32)
    na = na_ref[0]                       # (2, D)  this layer's norm_1/norm_2 alpha
    nb = nb_ref[0]                       # (2, D)

    # ------------------------- attention sub-block -------------------------
    xn = norm(x, na[0:1], nb[0:1])
    # Single lane-dense QKV projection.  Column layout (head-major within each
    # block): [q-half1 | q-half2 | k-half1 | k-half2 | v]; q columns already
    # carry the 1/sqrt(d_k) score scale.
    qkv = jnp.dot(xn, wqkv_ref[0],
                  preferred_element_type=jnp.float32) + bqkv_ref[0]   # (N, 3D)
    qkvT = qkv.T                                                      # (3D, N)

    q1 = qkvT[0:hh]
    q2 = qkvT[hh:2 * hh]
    k1 = qkvT[2 * hh:3 * hh]
    k2 = qkvT[3 * hh:4 * hh]
    v = qkvT[4 * hh:4 * hh + heads * d_k]                             # (D, N)

    # RoPE: purely elementwise in the half-split (evens|odds) layout; the q/k
    # weight columns were pre-permuted so no pair-swap / rotation is needed.
    cosT = cost_ref[...]                                              # (H*half, N)
    sinT = sint_ref[...]
    q1r = q1 * cosT - q2 * sinT
    q2r = q2 * cosT + q1 * sinT
    k1r = k1 * cosT - k2 * sinT
    k2r = k2 * cosT + k1 * sinT

    # Head-batched scores over both halves (== full head-dim dot product);
    # scale already folded into Wq.
    q1h = q1r.reshape(heads, half, n_tok)
    q2h = q2r.reshape(heads, half, n_tok)
    k1h = k1r.reshape(heads, half, n_tok)
    k2h = k2r.reshape(heads, half, n_tok)
    dn = (((1,), (1,)), ((0,), (0,)))
    scores = (lax.dot_general(q1h, k1h, dn, preferred_element_type=jnp.float32)
              + lax.dot_general(q2h, k2h, dn, preferred_element_type=jnp.float32))
    scores = scores + mask_ref[...]                 # additive mask (0 / -1e9)
    scores = scores - jnp.max(scores, axis=-1, keepdims=True)
    e = jnp.exp(scores)
    probs = e * pl.reciprocal(jnp.sum(e, axis=-1, keepdims=True), approx=True)

    vh = v.reshape(heads, d_k, n_tok)               # (H, dk, N)
    ctxT = lax.dot_general(vh, probs, (((2,), (2,)), ((0,), (0,))),
                           preferred_element_type=jnp.float32)        # (H, dk, N)
    ctx = ctxT.reshape(heads * d_k, n_tok).T        # (N, D)  concat-heads layout
    attn = jnp.dot(ctx, wo_ref[0],
                   preferred_element_type=jnp.float32) + bo_ref[0]    # (N, D)
    x = x + attn

    # ------------------------ feed-forward sub-block ------------------------
    xn2 = norm(x, na[1:2], nb[1:2])
    h = jnp.dot(xn2.astype(jnp.bfloat16), w1_ref[0],
                preferred_element_type=jnp.float32) + b1_ref[0]
    h = jnp.maximum(h, 0.0)
    ff = jnp.dot(h.astype(jnp.bfloat16), w2_ref[0],
                 preferred_element_type=jnp.float32) + b2_ref[0]
    x = x + ff

    x_acc[...] = x

    @pl.when(l == pl.num_programs(0) - 1)
    def _():
        o_ref[...] = norm(x, fa_ref[...], fb_ref[...])   # final Norm


def encoder_pallas(x_flat, mask_add, cosT, sinT, p):
    n_tok, d_model = x_flat.shape
    kernel = functools.partial(_encoder_layer_kernel, heads=HEADS, d_k=D_K)
    grid_spec = pltpu.PrefetchScalarGridSpec(
        num_scalar_prefetch=0,
        grid=(N_LAYERS,),
        in_specs=[
            pl.BlockSpec((n_tok, d_model), lambda l: (0, 0)),              # x (step 0 only)
            pl.BlockSpec((n_tok, n_tok), lambda l: (0, 0)),                # additive mask
            pl.BlockSpec((HH, n_tok), lambda l: (0, 0)),                   # cos^T
            pl.BlockSpec((HH, n_tok), lambda l: (0, 0)),                   # sin^T
            pl.BlockSpec((1, 2, d_model), lambda l: (l, 0, 0)),            # norm alpha
            pl.BlockSpec((1, 2, d_model), lambda l: (l, 0, 0)),            # norm bias
            pl.BlockSpec((1, d_model), lambda l: (0, 0)),                  # final alpha
            pl.BlockSpec((1, d_model), lambda l: (0, 0)),                  # final bias
            pl.BlockSpec((1, d_model, 3 * d_model), lambda l: (l, 0, 0)),  # wqkv
            pl.BlockSpec((1, 1, 3 * d_model), lambda l: (l, 0, 0)),        # bqkv
            pl.BlockSpec((1, d_model, d_model), lambda l: (l, 0, 0)),      # wo
            pl.BlockSpec((1, 1, d_model), lambda l: (l, 0, 0)),            # bo
            pl.BlockSpec((1, d_model, D_FF), lambda l: (l, 0, 0)),         # w1 (bf16)
            pl.BlockSpec((1, 1, D_FF), lambda l: (l, 0, 0)),               # b1
            pl.BlockSpec((1, D_FF, d_model), lambda l: (l, 0, 0)),         # w2 (bf16)
            pl.BlockSpec((1, 1, d_model), lambda l: (l, 0, 0)),            # b2
        ],
        out_specs=pl.BlockSpec((n_tok, d_model), lambda l: (0, 0)),
        scratch_shapes=[pltpu.VMEM((n_tok, d_model), jnp.float32)],
    )
    return pl.pallas_call(
        kernel,
        out_shape=jax.ShapeDtypeStruct((n_tok, d_model), jnp.float32),
        grid_spec=grid_spec,
        compiler_params=pltpu.CompilerParams(dimension_semantics=("arbitrary",)),
        cost_estimate=pl.CostEstimate(
            flops=17_000_000,
            transcendentals=2 * HEADS * n_tok * n_tok * N_LAYERS,
            bytes_accessed=600_000),
    )(x_flat, mask_add, cosT, sinT,
      p["norm_a"], p["norm_b"], p["fin_a"], p["fin_b"],
      p["wqkv"], p["bqkv"], p["wo"], p["bo"],
      p["w1"], p["b1"], p["w2"], p["b2"])


# --------------------------------------------------------------------------
# Parameter construction (deterministic, in-script), RoPE cache, mask glue
# --------------------------------------------------------------------------
def _linear_init(key, fan_in, fan_out):
    kw, kb = jax.random.split(key)
    bound = 1.0 / math.sqrt(fan_in)
    w = jax.random.uniform(kw, (fan_in, fan_out), jnp.float32, -bound, bound)
    b = jax.random.uniform(kb, (fan_out,), jnp.float32, -bound, bound)
    return w, b


def _half_split(w, b):
    """x@W weight (D,D) / bias (D,) -> (even-cols, odd-cols) per head, head-major."""
    wh = w.reshape(D_MODEL, HEADS, D_K)
    bh = b.reshape(HEADS, D_K)
    w_ev = wh[:, :, 0::2].reshape(D_MODEL, HEADS * D_HALF)
    w_od = wh[:, :, 1::2].reshape(D_MODEL, HEADS * D_HALF)
    b_ev = bh[:, 0::2].reshape(HEADS * D_HALF)
    b_od = bh[:, 1::2].reshape(HEADS * D_HALF)
    return w_ev, w_od, b_ev, b_od


def init_params(key):
    keys = jax.random.split(key, 1 + 6 * N_LAYERS)
    embed = jax.random.normal(keys[0], (VOCAB, D_MODEL), jnp.float32)
    qscale = 1.0 / math.sqrt(D_K)

    wqkv_l, bqkv_l, wo_l, bo_l = [], [], [], []
    w1_l, b1_l, w2_l, b2_l = [], [], [], []
    na_l, nb_l = [], []
    ki = 1
    for _ in range(N_LAYERS):
        wq, bq = _linear_init(keys[ki], D_MODEL, D_MODEL); ki += 1
        wk, bk = _linear_init(keys[ki], D_MODEL, D_MODEL); ki += 1
        wv, bv = _linear_init(keys[ki], D_MODEL, D_MODEL); ki += 1
        wo, bo = _linear_init(keys[ki], D_MODEL, D_MODEL); ki += 1
        w1, b1 = _linear_init(keys[ki], D_MODEL, D_FF);    ki += 1
        w2, b2 = _linear_init(keys[ki], D_FF, D_MODEL);    ki += 1

        # Fold 1/sqrt(d_k) into the q projection (RoPE is linear per pair, so
        # pre-scaling q is exact).  Permute q/k columns to evens|odds per head.
        q1w, q2w, q1b, q2b = _half_split(wq * qscale, bq * qscale)
        k1w, k2w, k1b, k2b = _half_split(wk, bk)
        wqkv_l.append(jnp.concatenate([q1w, q2w, k1w, k2w, wv], axis=1))   # (D, 3D)
        bqkv_l.append(jnp.concatenate([q1b, q2b, k1b, k2b, bv]
                                      ).reshape(1, 3 * D_MODEL))           # (1, 3D)
        wo_l.append(wo)                                                    # (D, D)
        bo_l.append(bo.reshape(1, D_MODEL))
        w1_l.append(w1.astype(jnp.bfloat16)); b1_l.append(b1.reshape(1, D_FF))
        w2_l.append(w2.astype(jnp.bfloat16)); b2_l.append(b2.reshape(1, D_MODEL))
        na_l.append(jnp.ones((2, D_MODEL), jnp.float32))     # norm_1 / norm_2 alpha
        nb_l.append(jnp.zeros((2, D_MODEL), jnp.float32))    # norm_1 / norm_2 bias

    stacks = {
        "norm_a": jnp.stack(na_l), "norm_b": jnp.stack(nb_l),              # (L,2,D)
        "fin_a": jnp.ones((1, D_MODEL), jnp.float32),
        "fin_b": jnp.zeros((1, D_MODEL), jnp.float32),
        "wqkv": jnp.stack(wqkv_l), "bqkv": jnp.stack(bqkv_l),
        "wo": jnp.stack(wo_l), "bo": jnp.stack(bo_l),
        "w1": jnp.stack(w1_l), "b1": jnp.stack(b1_l),
        "w2": jnp.stack(w2_l), "b2": jnp.stack(b2_l),
    }
    return {"embed": embed, "stacks": stacks}


def build_rope_t(seq_len, d_k, batch, base=10000.0):
    """Transposed cos/sin caches, tiled over batch (sublane) and heads (rows):
    shape (HEADS*d_k//2, batch*seq_len), matching the transposed q/k layout."""
    theta = 1.0 / (base ** (jnp.arange(0, d_k, 2, dtype=jnp.float32) / d_k))
    pos = jnp.arange(seq_len, dtype=jnp.float32)
    ang = jnp.outer(pos, theta)                                 # (S, half)
    cos = jnp.tile(jnp.tile(jnp.cos(ang), (batch, 1)), (1, HEADS))   # (B*S, H*half)
    sin = jnp.tile(jnp.tile(jnp.sin(ang), (batch, 1)), (1, HEADS))
    return cos.T, sin.T                                         # (H*half, B*S)


def build_attn_mask_add(mask):
    """(B, 1, S) key-validity mask -> (B*S, B*S) ADDITIVE attention mask:
    0 where attention is allowed, -1e9 where blocked (cross-batch or invalid key)."""
    b, _, s = mask.shape
    key_ok = mask.reshape(b * s).astype(jnp.float32)
    bidx = jnp.repeat(jnp.arange(b), s)
    same = (bidx[:, None] == bidx[None, :]).astype(jnp.float32)
    attend = same * key_ok[None, :]
    return (attend - 1.0) * 1000000000.0


# --------------------------------------------------------------------------
# Encoder forward (embedding gather + mask/RoPE prep in JAX glue, rest fused)
# --------------------------------------------------------------------------
def encoder_forward(params, src, mask):
    b, s = src.shape
    # TODO(synk): nn.Embedding gather stays as plain JAX indexing (glue).
    x = params["embed"][src].reshape(b * s, D_MODEL)
    mask_add = build_attn_mask_add(mask)
    cosT, sinT = build_rope_t(s, D_K, b)
    out = encoder_pallas(x, mask_add, cosT, sinT, params["stacks"])
    return out.reshape(b, s, D_MODEL)


if __name__ == "__main__":
    key = jax.random.PRNGKey(0)
    k_params, k_src = jax.random.split(key)
    params = init_params(k_params)

    src = jax.random.randint(k_src, (B, S), 0, VOCAB)            # (B, S) token ids
    lengths = jnp.array([S, S - 2])
    mask = (jnp.arange(S)[None, :] < lengths[:, None]).astype(jnp.float32)[:, None, :]

    fwd = jax.jit(encoder_forward)
    out = jax.block_until_ready(fwd(params, src, mask))
    assert out.shape == (B, S, D_MODEL) and out.dtype == jnp.float32
    assert bool(jnp.all(jnp.isfinite(out)))
    print("KERNEL_OK")
</pallas_src>

<mosaic_0001>
module attributes {stable_mosaic.version = 11 : i64} {
  func.func @_encoder_layer_kernel(%arg0: i32, %arg1: memref<16x32xf32, #tpu.memory_space<vmem>>, %arg2: memref<16x16xf32, #tpu.memory_space<vmem>>, %arg3: memref<16x16xf32, #tpu.memory_space<vmem>>, %arg4: memref<16x16xf32, #tpu.memory_space<vmem>>, %arg5: memref<1x2x32xf32, #tpu.memory_space<vmem>>, %arg6: memref<1x2x32xf32, #tpu.memory_space<vmem>>, %arg7: memref<1x32xf32, #tpu.memory_space<vmem>>, %arg8: memref<1x32xf32, #tpu.memory_space<vmem>>, %arg9: memref<1x32x96xf32, #tpu.memory_space<vmem>>, %arg10: memref<1x1x96xf32, #tpu.memory_space<vmem>>, %arg11: memref<1x32x32xf32, #tpu.memory_space<vmem>>, %arg12: memref<1x1x32xf32, #tpu.memory_space<vmem>>, %arg13: memref<1x32x2048xbf16, #tpu.memory_space<vmem>>, %arg14: memref<1x1x2048xf32, #tpu.memory_space<vmem>>, %arg15: memref<1x2048x32xbf16, #tpu.memory_space<vmem>>, %arg16: memref<1x1x32xf32, #tpu.memory_space<vmem>>, %arg17: memref<16x32xf32, #tpu.memory_space<vmem>>, %arg18: memref<16x32xf32, #tpu.memory_space<vmem>>) attributes {dimension_semantics = [#tpu.dimension_semantics<arbitrary>], iteration_bounds = array<i64: 2>, scalar_prefetch = 0 : i64, scratch_operands = 1 : i64, tpu.core_type = #tpu.core_type<tc>, window_params = [{pipeline_mode = #tpu.pipeline_mode<synchronous>, transform_indices = @transform_0, window_bounds = array<i64: 16, 32>}, {pipeline_mode = #tpu.pipeline_mode<synchronous>, transform_indices = @transform_1, window_bounds = array<i64: 16, 16>}, {pipeline_mode = #tpu.pipeline_mode<synchronous>, transform_indices = @transform_2, window_bounds = array<i64: 16, 16>}, {pipeline_mode = #tpu.pipeline_mode<synchronous>, transform_indices = @transform_3, window_bounds = array<i64: 16, 16>}, {transform_indices = @transform_4, window_bounds = array<i64: 1, 2, 32>}, {transform_indices = @transform_5, window_bounds = array<i64: 1, 2, 32>}, {pipeline_mode = #tpu.pipeline_mode<synchronous>, transform_indices = @transform_6, window_bounds = array<i64: 1, 32>}, {pipeline_mode = #tpu.pipeline_mode<synchronous>, transform_indices = @transform_7, window_bounds = array<i64: 1, 32>}, {transform_indices = @transform_8, window_bounds = array<i64: 1, 32, 96>}, {transform_indices = @transform_9, window_bounds = array<i64: 1, 1, 96>}, {transform_indices = @transform_10, window_bounds = array<i64: 1, 32, 32>}, {transform_indices = @transform_11, window_bounds = array<i64: 1, 1, 32>}, {transform_indices = @transform_12, window_bounds = array<i64: 1, 32, 2048>}, {transform_indices = @transform_13, window_bounds = array<i64: 1, 1, 2048>}, {transform_indices = @transform_14, window_bounds = array<i64: 1, 2048, 32>}, {transform_indices = @transform_15, window_bounds = array<i64: 1, 1, 32>}, {pipeline_mode = #tpu.pipeline_mode<synchronous>, transform_indices = @transform_16, window_bounds = array<i64: 16, 32>}]} {
    %c0_i32 = arith.constant 0 : i32
    %0 = arith.cmpi eq, %arg0, %c0_i32 : i32
    %1 = arith.extui %0 : i1 to i32
    %c0_i32_0 = arith.constant 0 : i32
    %2 = arith.cmpi ne, %1, %c0_i32_0 : i32
    scf.if %2 {
      %c0_60 = arith.constant 0 : index
      %c0_61 = arith.constant 0 : index
      %135 = vector.load %arg1[%c0_60, %c0_61] : memref<16x32xf32, #tpu.memory_space<vmem>>, vector<16x32xf32>
      %c0_62 = arith.constant 0 : index
      %c0_63 = arith.constant 0 : index
      %136 = vector.load %arg18[%c0_62, %c0_63] : memref<16x32xf32, #tpu.memory_space<vmem>>, vector<16x32xf32>
      tpu.vector_store %arg18[%c0_62, %c0_63], %135 {strides = array<i32>} : memref<16x32xf32, #tpu.memory_space<vmem>>, vector<16x32xf32>,
    } else {
    }
    %c0 = arith.constant 0 : index
    %c0_1 = arith.constant 0 : index
    %3 = vector.load %arg18[%c0, %c0_1] : memref<16x32xf32, #tpu.memory_space<vmem>>, vector<16x32xf32>
    %c0_2 = arith.constant 0 : index
    %c0_3 = arith.constant 0 : index
    %c0_4 = arith.constant 0 : index
    %4 = vector.load %arg5[%c0_2, %c0_3, %c0_4] : memref<1x2x32xf32, #tpu.memory_space<vmem>>, vector<1x2x32xf32>
    %5 = vector.shape_cast %4 : vector<1x2x32xf32> to vector<2x32xf32>
    %c0_5 = arith.constant 0 : index
    %c0_6 = arith.constant 0 : index
    %c0_7 = arith.constant 0 : index
    %6 = vector.load %arg6[%c0_5, %c0_6, %c0_7] : memref<1x2x32xf32, #tpu.memory_space<vmem>>, vector<1x2x32xf32>
    %7 = vector.shape_cast %6 : vector<1x2x32xf32> to vector<2x32xf32>
    %8 = vector.extract_strided_slice %5 {offsets = [0, 0], sizes = [1, 32], strides = [1, 1]} : vector<2x32xf32> to vector<1x32xf32>
    %9 = vector.extract_strided_slice %7 {offsets = [0, 0], sizes = [1, 32], strides = [1, 1]} : vector<2x32xf32> to vector<1x32xf32>
    %cst = arith.constant dense<0.000000e+00> : vector<16xf32>
    %10 = vector.multi_reduction <add>, %3, %cst [1] : vector<16x32xf32> to vector<16xf32>
    %11 = vector.shape_cast %10 : vector<16xf32> to vector<16x1xf32>
    %cst_8 = arith.constant 3.200000e+01 : f32
    %12 = vector.broadcast %cst_8 : f32 to vector<16x1xf32>
    %13 = arith.divf %11, %12 : vector<16x1xf32>
    %14 = vector.broadcast %13 : vector<16x1xf32> to vector<16x32xf32>
    %15 = arith.subf %3, %14 : vector<16x32xf32>
    %16 = arith.mulf %15, %15 : vector<16x32xf32>
    %cst_9 = arith.constant dense<0.000000e+00> : vector<16xf32>
    %17 = vector.multi_reduction <add>, %16, %cst_9 [1] : vector<16x32xf32> to vector<16xf32>
    %18 = vector.shape_cast %17 : vector<16xf32> to vector<16x1xf32>
    %cst_10 = arith.constant 0.0322580636 : f32
    %19 = vector.broadcast %cst_10 : f32 to vector<16x1xf32>
    %20 = arith.mulf %18, %19 : vector<16x1xf32>
    %21 = vector.broadcast %8 : vector<1x32xf32> to vector<16x32xf32>
    %22 = arith.mulf %21, %15 : vector<16x32xf32>
    %23 = math.sqrt %20 : vector<16x1xf32>
    %cst_11 = arith.constant 9.99999997E-7 : f32
    %24 = vector.broadcast %cst_11 : f32 to vector<16x1xf32>
    %25 = arith.addf %23, %24 : vector<16x1xf32>
    %26 = vector.broadcast %25 : vector<16x1xf32> to vector<16x32xf32>
    %27 = arith.divf %22, %26 : vector<16x32xf32>
    %28 = vector.broadcast %9 : vector<1x32xf32> to vector<16x32xf32>
    %29 = arith.addf %27, %28 : vector<16x32xf32>
    %c0_12 = arith.constant 0 : index
    %c0_13 = arith.constant 0 : index
    %c0_14 = arith.constant 0 : index
    %30 = vector.load %arg9[%c0_12, %c0_13, %c0_14] : memref<1x32x96xf32, #tpu.memory_space<vmem>>, vector<1x32x96xf32>
    %31 = vector.shape_cast %30 : vector<1x32x96xf32> to vector<32x96xf32>
    %cst_15 = arith.constant dense<0.000000e+00> : vector<16x96xf32>
    %32 = tpu.matmul %29, %31, %cst_15 {dimension_numbers = #tpu.dot_dimension_numbers<[1], [0], [0], [1], [0, 0, 1, 1], [], []>} : vector<16x32xf32>, vector<32x96xf32>, vector<16x96xf32> -> vector<16x96xf32>
    %c0_16 = arith.constant 0 : index
    %c0_17 = arith.constant 0 : index
    %c0_18 = arith.constant 0 : index
    %33 = vector.load %arg10[%c0_16, %c0_17, %c0_18] : memref<1x1x96xf32, #tpu.memory_space<vmem>>, vector<1x1x96xf32>
    %34 = vector.shape_cast %33 : vector<1x1x96xf32> to vector<1x96xf32>
    %35 = vector.broadcast %34 : vector<1x96xf32> to vector<16x96xf32>
    %36 = arith.addf %32, %35 : vector<16x96xf32>
    %37 = tpu.transpose %36, [1, 0] : vector<16x96xf32> -> vector<96x16xf32>
    %38 = vector.extract_strided_slice %37 {offsets = [0, 0], sizes = [16, 16], strides = [1, 1]} : vector<96x16xf32> to vector<16x16xf32>
    %39 = vector.extract_strided_slice %37 {offsets = [16, 0], sizes = [16, 16], strides = [1, 1]} : vector<96x16xf32> to vector<16x16xf32>
    %40 = vector.extract_strided_slice %37 {offsets = [32, 0], sizes = [16, 16], strides = [1, 1]} : vector<96x16xf32> to vector<16x16xf32>
    %41 = vector.extract_strided_slice %37 {offsets = [48, 0], sizes = [16, 16], strides = [1, 1]} : vector<96x16xf32> to vector<16x16xf32>
    %42 = vector.extract_strided_slice %37 {offsets = [64, 0], sizes = [32, 16], strides = [1, 1]} : vector<96x16xf32> to vector<32x16xf32>
    %c0_19 = arith.constant 0 : index
    %c0_20 = arith.constant 0 : index
    %43 = vector.load %arg3[%c0_19, %c0_20] : memref<16x16xf32, #tpu.memory_space<vmem>>, vector<16x16xf32>
    %c0_21 = arith.constant 0 : index
    %c0_22 = arith.constant 0 : index
    %44 = vector.load %arg4[%c0_21, %c0_22] : memref<16x16xf32, #tpu.memory_space<vmem>>, vector<16x16xf32>
    %45 = arith.mulf %38, %43 : vector<16x16xf32>
    %46 = arith.mulf %39, %44 : vector<16x16xf32>
    %47 = arith.subf %45, %46 : vector<16x16xf32>
    %48 = arith.mulf %39, %43 : vector<16x16xf32>
    %49 = arith.mulf %38, %44 : vector<16x16xf32>
    %50 = arith.addf %48, %49 : vector<16x16xf32>
    %51 = arith.mulf %40, %43 : vector<16x16xf32>
    %52 = arith.mulf %41, %44 : vector<16x16xf32>
    %53 = arith.subf %51, %52 : vector<16x16xf32>
    %54 = arith.mulf %41, %43 : vector<16x16xf32>
    %55 = arith.mulf %40, %44 : vector<16x16xf32>
    %56 = arith.addf %54, %55 : vector<16x16xf32>
    %57 = vector.shape_cast %47 : vector<16x16xf32> to vector<4x4x16xf32>
    %58 = vector.shape_cast %50 : vector<16x16xf32> to vector<4x4x16xf32>
    %59 = vector.shape_cast %53 : vector<16x16xf32> to vector<4x4x16xf32>
    %60 = vector.shape_cast %56 : vector<16x16xf32> to vector<4x4x16xf32>
    %cst_23 = arith.constant dense<0.000000e+00> : vector<4x16x16xf32>
    %61 = tpu.matmul %57, %59, %cst_23 {dimension_numbers = #tpu.dot_dimension_numbers<[1], [1], [2], [2], [0, 0, 0, 2, 1, 2], [0], [0]>} : vector<4x4x16xf32>, vector<4x4x16xf32>, vector<4x16x16xf32> -> vector<4x16x16xf32>
    %cst_24 = arith.constant dense<0.000000e+00> : vector<4x16x16xf32>
    %62 = tpu.matmul %58, %60, %cst_24 {dimension_numbers = #tpu.dot_dimension_numbers<[1], [1], [2], [2], [0, 0, 0, 2, 1, 2], [0], [0]>} : vector<4x4x16xf32>, vector<4x4x16xf32>, vector<4x16x16xf32> -> vector<4x16x16xf32>
    %63 = arith.addf %61, %62 : vector<4x16x16xf32>
    %c0_25 = arith.constant 0 : index
    %c0_26 = arith.constant 0 : index
    %64 = vector.load %arg2[%c0_25, %c0_26] : memref<16x16xf32, #tpu.memory_space<vmem>>, vector<16x16xf32>
    %65 = vector.shape_cast %64 : vector<16x16xf32> to vector<1x16x16xf32>
    %66 = vector.broadcast %65 : vector<1x16x16xf32> to vector<4x16x16xf32>
    %67 = arith.addf %63, %66 : vector<4x16x16xf32>
    %cst_27 = arith.constant dense<0xFF800000> : vector<4x16xf32>
    %68 = vector.multi_reduction <maximumf>, %67, %cst_27 [2] : vector<4x16x16xf32> to vector<4x16xf32>
    %69 = vector.shape_cast %68 : vector<4x16xf32> to vector<4x16x1xf32>
    %70 = vector.broadcast %69 : vector<4x16x1xf32> to vector<4x16x16xf32>
    %71 = arith.subf %67, %70 : vector<4x16x16xf32>
    %72 = math.exp %71 : vector<4x16x16xf32>
    %cst_28 = arith.constant dense<0.000000e+00> : vector<4x16xf32>
    %73 = vector.multi_reduction <add>, %72, %cst_28 [2] : vector<4x16x16xf32> to vector<4x16xf32>
    %74 = vector.shape_cast %73 : vector<4x16xf32> to vector<4x16x1xf32>
    %75 = tpu.reciprocal %74 {approx = true} : vector<4x16x1xf32> -> vector<4x16x1xf32>
    %76 = vector.broadcast %75 : vector<4x16x1xf32> to vector<4x16x16xf32>
    %77 = arith.mulf %72, %76 : vector<4x16x16xf32>
    %78 = vector.shape_cast %42 : vector<32x16xf32> to vector<4x8x16xf32>
    %cst_29 = arith.constant dense<0.000000e+00> : vector<4x8x16xf32>
    %79 = tpu.matmul %78, %77, %cst_29 {dimension_numbers = #tpu.dot_dimension_numbers<[2], [2], [1], [1], [0, 0, 0, 1, 1, 1], [0], [0]>} : vector<4x8x16xf32>, vector<4x16x16xf32>, vector<4x8x16xf32> -> vector<4x8x16xf32>
    %80 = vector.shape_cast %79 : vector<4x8x16xf32> to vector<32x16xf32>
    %81 = tpu.transpose %80, [1, 0] : vector<32x16xf32> -> vector<16x32xf32>
    %c0_30 = arith.constant 0 : index
    %c0_31 = arith.constant 0 : index
    %c0_32 = arith.constant 0 : index
    %82 = vector.load %arg11[%c0_30, %c0_31, %c0_32] : memref<1x32x32xf32, #tpu.memory_space<vmem>>, vector<1x32x32xf32>
    %83 = vector.shape_cast %82 : vector<1x32x32xf32> to vector<32x32xf32>
    %cst_33 = arith.constant dense<0.000000e+00> : vector<16x32xf32>
    %84 = tpu.matmul %81, %83, %cst_33 {dimension_numbers = #tpu.dot_dimension_numbers<[1], [0], [0], [1], [0, 0, 1, 1], [], []>} : vector<16x32xf32>, vector<32x32xf32>, vector<16x32xf32> -> vector<16x32xf32>
    %c0_34 = arith.constant 0 : index
    %c0_35 = arith.constant 0 : index
    %c0_36 = arith.constant 0 : index
    %85 = vector.load %arg12[%c0_34, %c0_35, %c0_36] : memref<1x1x32xf32, #tpu.memory_space<vmem>>, vector<1x1x32xf32>
    %86 = vector.shape_cast %85 : vector<1x1x32xf32> to vector<1x32xf32>
    %87 = vector.broadcast %86 : vector<1x32xf32> to vector<16x32xf32>
    %88 = arith.addf %84, %87 : vector<16x32xf32>
    %89 = arith.addf %3, %88 : vector<16x32xf32>
    %90 = vector.extract_strided_slice %5 {offsets = [1, 0], sizes = [1, 32], strides = [1, 1]} : vector<2x32xf32> to vector<1x32xf32>
    %91 = vector.extract_strided_slice %7 {offsets = [1, 0], sizes = [1, 32], strides = [1, 1]} : vector<2x32xf32> to vector<1x32xf32>
    %cst_37 = arith.constant dense<0.000000e+00> : vector<16xf32>
    %92 = vector.multi_reduction <add>, %89, %cst_37 [1] : vector<16x32xf32> to vector<16xf32>
    %93 = vector.shape_cast %92 : vector<16xf32> to vector<16x1xf32>
    %cst_38 = arith.constant 3.200000e+01 : f32
    %94 = vector.broadcast %cst_38 : f32 to vector<16x1xf32>
    %95 = arith.divf %93, %94 : vector<16x1xf32>
    %96 = vector.broadcast %95 : vector<16x1xf32> to vector<16x32xf32>
    %97 = arith.subf %89, %96 : vector<16x32xf32>
    %98 = arith.mulf %97, %97 : vector<16x32xf32>
    %cst_39 = arith.constant dense<0.000000e+00> : vector<16xf32>
    %99 = vector.multi_reduction <add>, %98, %cst_39 [1] : vector<16x32xf32> to vector<16xf32>
    %100 = vector.shape_cast %99 : vector<16xf32> to vector<16x1xf32>
    %cst_40 = arith.constant 0.0322580636 : f32
    %101 = vector.broadcast %cst_40 : f32 to vector<16x1xf32>
    %102 = arith.mulf %100, %101 : vector<16x1xf32>
    %103 = vector.broadcast %90 : vector<1x32xf32> to vector<16x32xf32>
    %104 = arith.mulf %103, %97 : vector<16x32xf32>
    %105 = math.sqrt %102 : vector<16x1xf32>
    %cst_41 = arith.constant 9.99999997E-7 : f32
    %106 = vector.broadcast %cst_41 : f32 to vector<16x1xf32>
    %107 = arith.addf %105, %106 : vector<16x1xf32>
    %108 = vector.broadcast %107 : vector<16x1xf32> to vector<16x32xf32>
    %109 = arith.divf %104, %108 : vector<16x32xf32>
    %110 = vector.broadcast %91 : vector<1x32xf32> to vector<16x32xf32>
    %111 = arith.addf %109, %110 : vector<16x32xf32>
    %112 = arith.truncf %111 : vector<16x32xf32> to vector<16x32xbf16>
    %c0_42 = arith.constant 0 : index
    %c0_43 = arith.constant 0 : index
    %c0_44 = arith.constant 0 : index
    %113 = vector.load %arg13[%c0_42, %c0_43, %c0_44] : memref<1x32x2048xbf16, #tpu.memory_space<vmem>>, vector<1x32x2048xbf16>
    %114 = vector.shape_cast %113 : vector<1x32x2048xbf16> to vector<32x2048xbf16>
    %cst_45 = arith.constant dense<0.000000e+00> : vector<16x2048xf32>
    %115 = tpu.matmul %112, %114, %cst_45 {dimension_numbers = #tpu.dot_dimension_numbers<[1], [0], [0], [1], [0, 0, 1, 1], [], []>} : vector<16x32xbf16>, vector<32x2048xbf16>, vector<16x2048xf32> -> vector<16x2048xf32>
    %c0_46 = arith.constant 0 : index
    %c0_47 = arith.constant 0 : index
    %c0_48 = arith.constant 0 : index
    %116 = vector.load %arg14[%c0_46, %c0_47, %c0_48] : memref<1x1x2048xf32, #tpu.memory_space<vmem>>, vector<1x1x2048xf32>
    %117 = vector.shape_cast %116 : vector<1x1x2048xf32> to vector<1x2048xf32>
    %118 = vector.broadcast %117 : vector<1x2048xf32> to vector<16x2048xf32>
    %119 = arith.addf %115, %118 : vector<16x2048xf32>
    %cst_49 = arith.constant 0.000000e+00 : f32
    %120 = vector.broadcast %cst_49 : f32 to vector<16x2048xf32>
    %121 = arith.maximumf %119, %120 : vector<16x2048xf32>
    %122 = arith.truncf %121 : vector<16x2048xf32> to vector<16x2048xbf16>
    %c0_50 = arith.constant 0 : index
    %c0_51 = arith.constant 0 : index
    %c0_52 = arith.constant 0 : index
    %123 = vector.load %arg15[%c0_50, %c0_51, %c0_52] : memref<1x2048x32xbf16, #tpu.memory_space<vmem>>, vector<1x2048x32xbf16>
    %124 = vector.shape_cast %123 : vector<1x2048x32xbf16> to vector<2048x32xbf16>
    %cst_53 = arith.constant dense<0.000000e+00> : vector<16x32xf32>
    %125 = tpu.matmul %122, %124, %cst_53 {dimension_numbers = #tpu.dot_dimension_numbers<[1], [0], [0], [1], [0, 0, 1, 1], [], []>} : vector<16x2048xbf16>, vector<2048x32xbf16>, vector<16x32xf32> -> vector<16x32xf32>
    %c0_54 = arith.constant 0 : index
    %c0_55 = arith.constant 0 : index
    %c0_56 = arith.constant 0 : index
    %126 = vector.load %arg16[%c0_54, %c0_55, %c0_56] : memref<1x1x32xf32, #tpu.memory_space<vmem>>, vector<1x1x32xf32>
    %127 = vector.shape_cast %126 : vector<1x1x32xf32> to vector<1x32xf32>
    %128 = vector.broadcast %127 : vector<1x32xf32> to vector<16x32xf32>
    %129 = arith.addf %125, %128 : vector<16x32xf32>
    %130 = arith.addf %89, %129 : vector<16x32xf32>
    %c0_57 = arith.constant 0 : index
    %c0_58 = arith.constant 0 : index
    %131 = vector.load %arg18[%c0_57, %c0_58] : memref<16x32xf32, #tpu.memory_space<vmem>>, vector<16x32xf32>
    tpu.vector_store %arg18[%c0_57, %c0_58], %130 {strides = array<i32>} : memref<16x32xf32, #tpu.memory_space<vmem>>, vector<16x32xf32>,
    %c1_i32 = arith.constant 1 : i32
    %132 = arith.cmpi eq, %arg0, %c1_i32 : i32
    %133 = arith.extui %132 : i1 to i32
    %c0_i32_59 = arith.constant 0 : i32
    %134 = arith.cmpi ne, %133, %c0_i32_59 : i32
    scf.if %134 {
      %c0_60 = arith.constant 0 : index
      %c0_61 = arith.constant 0 : index
      %135 = vector.load %arg7[%c0_60, %c0_61] : memref<1x32xf32, #tpu.memory_space<vmem>>, vector<1x32xf32>
      %c0_62 = arith.constant 0 : index
      %c0_63 = arith.constant 0 : index
      %136 = vector.load %arg8[%c0_62, %c0_63] : memref<1x32xf32, #tpu.memory_space<vmem>>, vector<1x32xf32>
      %cst_64 = arith.constant dense<0.000000e+00> : vector<16xf32>
      %137 = vector.multi_reduction <add>, %130, %cst_64 [1] : vector<16x32xf32> to vector<16xf32>
      %138 = vector.shape_cast %137 : vector<16xf32> to vector<16x1xf32>
      %cst_65 = arith.constant 3.200000e+01 : f32
      %139 = vector.broadcast %cst_65 : f32 to vector<16x1xf32>
      %140 = arith.divf %138, %139 : vector<16x1xf32>
      %141 = vector.broadcast %140 : vector<16x1xf32> to vector<16x32xf32>
      %142 = arith.subf %130, %141 : vector<16x32xf32>
      %143 = arith.mulf %142, %142 : vector<16x32xf32>
      %cst_66 = arith.constant dense<0.000000e+00> : vector<16xf32>
      %144 = vector.multi_reduction <add>, %143, %cst_66 [1] : vector<16x32xf32> to vector<16xf32>
      %145 = vector.shape_cast %144 : vector<16xf32> to vector<16x1xf32>
      %cst_67 = arith.constant 0.0322580636 : f32
      %146 = vector.broadcast %cst_67 : f32 to vector<16x1xf32>
      %147 = arith.mulf %145, %146 : vector<16x1xf32>
      %148 = vector.broadcast %135 : vector<1x32xf32> to vector<16x32xf32>
      %149 = arith.mulf %148, %142 : vector<16x32xf32>
      %150 = math.sqrt %147 : vector<16x1xf32>
      %cst_68 = arith.constant 9.99999997E-7 : f32
      %151 = vector.broadcast %cst_68 : f32 to vector<16x1xf32>
      %152 = arith.addf %150, %151 : vector<16x1xf32>
      %153 = vector.broadcast %152 : vector<16x1xf32> to vector<16x32xf32>
      %154 = arith.divf %149, %153 : vector<16x32xf32>
      %155 = vector.broadcast %136 : vector<1x32xf32> to vector<16x32xf32>
      %156 = arith.addf %154, %155 : vector<16x32xf32>
      %c0_69 = arith.constant 0 : index
      %c0_70 = arith.constant 0 : index
      %157 = vector.load %arg17[%c0_69, %c0_70] : memref<16x32xf32, #tpu.memory_space<vmem>>, vector<16x32xf32>
      tpu.vector_store %arg17[%c0_69, %c0_70], %156 {strides = array<i32>} : memref<16x32xf32, #tpu.memory_space<vmem>>, vector<16x32xf32>,
    } else {
    }
    return
  }
  func.func @transform_0(%arg0: i32) -> (i32, i32) {
    %c0_i32 = arith.constant 0 : i32
    %c0_i32_0 = arith.constant 0 : i32
    %c0_i32_1 = arith.constant 0 : i32
    return %c0_i32, %c0_i32_0 : i32, i32
  }
  func.func @transform_1(%arg0: i32) -> (i32, i32) {
    %c0_i32 = arith.constant 0 : i32
    %c0_i32_0 = arith.constant 0 : i32
    %c0_i32_1 = arith.constant 0 : i32
    return %c0_i32, %c0_i32_0 : i32, i32
  }
  func.func @transform_2(%arg0: i32) -> (i32, i32) {
    %c0_i32 = arith.constant 0 : i32
    %c0_i32_0 = arith.constant 0 : i32
    %c0_i32_1 = arith.constant 0 : i32
    return %c0_i32, %c0_i32_0 : i32, i32
  }
  func.func @transform_3(%arg0: i32) -> (i32, i32) {
    %c0_i32 = arith.constant 0 : i32
    %c0_i32_0 = arith.constant 0 : i32
    %c0_i32_1 = arith.constant 0 : i32
    return %c0_i32, %c0_i32_0 : i32, i32
  }
  func.func @transform_4(%arg0: i32) -> (i32, i32, i32) {
    %c0_i32 = arith.constant 0 : i32
    %c0_i32_0 = arith.constant 0 : i32
    %c0_i32_1 = arith.constant 0 : i32
    return %arg0, %c0_i32, %c0_i32_0 : i32, i32, i32
  }
  func.func @transform_5(%arg0: i32) -> (i32, i32, i32) {
    %c0_i32 = arith.constant 0 : i32
    %c0_i32_0 = arith.constant 0 : i32
    %c0_i32_1 = arith.constant 0 : i32
    return %arg0, %c0_i32, %c0_i32_0 : i32, i32, i32
  }
  func.func @transform_6(%arg0: i32) -> (i32, i32) {
    %c0_i32 = arith.constant 0 : i32
    %c0_i32_0 = arith.constant 0 : i32
    %c0_i32_1 = arith.constant 0 : i32
    return %c0_i32, %c0_i32_0 : i32, i32
  }
  func.func @transform_7(%arg0: i32) -> (i32, i32) {
    %c0_i32 = arith.constant 0 : i32
    %c0_i32_0 = arith.constant 0 : i32
    %c0_i32_1 = arith.constant 0 : i32
    return %c0_i32, %c0_i32_0 : i32, i32
  }
  func.func @transform_8(%arg0: i32) -> (i32, i32, i32) {
    %c0_i32 = arith.constant 0 : i32
    %c0_i32_0 = arith.constant 0 : i32
    %c0_i32_1 = arith.constant 0 : i32
    return %arg0, %c0_i32, %c0_i32_0 : i32, i32, i32
  }
  func.func @transform_9(%arg0: i32) -> (i32, i32, i32) {
    %c0_i32 = arith.constant 0 : i32
    %c0_i32_0 = arith.constant 0 : i32
    %c0_i32_1 = arith.constant 0 : i32
    return %arg0, %c0_i32, %c0_i32_0 : i32, i32, i32
  }
  func.func @transform_10(%arg0: i32) -> (i32, i32, i32) {
    %c0_i32 = arith.constant 0 : i32
    %c0_i32_0 = arith.constant 0 : i32
    %c0_i32_1 = arith.constant 0 : i32
    return %arg0, %c0_i32, %c0_i32_0 : i32, i32, i32
  }
  func.func @transform_11(%arg0: i32) -> (i32, i32, i32) {
    %c0_i32 = arith.constant 0 : i32
    %c0_i32_0 = arith.constant 0 : i32
    %c0_i32_1 = arith.constant 0 : i32
    return %arg0, %c0_i32, %c0_i32_0 : i32, i32, i32
  }
  func.func @transform_12(%arg0: i32) -> (i32, i32, i32) {
    %c0_i32 = arith.constant 0 : i32
    %c0_i32_0 = arith.constant 0 : i32
    %c0_i32_1 = arith.constant 0 : i32
    return %arg0, %c0_i32, %c0_i32_0 : i32, i32, i32
  }
  func.func @transform_13(%arg0: i32) -> (i32, i32, i32) {
    %c0_i32 = arith.constant 0 : i32
    %c0_i32_0 = arith.constant 0 : i32
    %c0_i32_1 = arith.constant 0 : i32
    return %arg0, %c0_i32, %c0_i32_0 : i32, i32, i32
  }
  func.func @transform_14(%arg0: i32) -> (i32, i32, i32) {
    %c0_i32 = arith.constant 0 : i32
    %c0_i32_0 = arith.constant 0 : i32
    %c0_i32_1 = arith.constant 0 : i32
    return %arg0, %c0_i32, %c0_i32_0 : i32, i32, i32
  }
  func.func @transform_15(%arg0: i32) -> (i32, i32, i32) {
    %c0_i32 = arith.constant 0 : i32
    %c0_i32_0 = arith.constant 0 : i32
    %c0_i32_1 = arith.constant 0 : i32
    return %arg0, %c0_i32, %c0_i32_0 : i32, i32, i32
  }
  func.func @transform_16(%arg0: i32) -> (i32, i32) {
    %c0_i32 = arith.constant 0 : i32
    %c0_i32_0 = arith.constant 0 : i32
    %c0_i32_1 = arith.constant 0 : i32
    return %c0_i32, %c0_i32_0 : i32, i32
  }
}

</mosaic_0001>

<llo_original>
// kernel: mul.16
$region0: #{mul.16}
  %s0 = inlined_call_operand.vmem [shape: f32[2,8], index: 0, kind: input, shape index: {}]
  %s1 = inlined_call_operand.vmem [shape: f32[16], index: 1, kind: output, shape index: {}]
  $region1: #{mul.16} parent=0
    #allocation0 [shape = 'u8[4096]{0}', space=vmem, size = 0x1000, scoped, tag = 'scoped mem for output reshape']
    #allocation1 [shape = 'u8[4096]{0}', space=vmem, size = 0x1000, scoped, tag = 'scoped mem for input reshape']
    %s3 = ssub.s32 4, 1
    %v4 = vld [vmem:[%s0] sm:%s3]
    %5 = vst [vmem:[#allocation1] sm:%s3] %v4
    %v6 = vld [vmem:[#allocation1] sm:$0x1]
    %vm7 = vcmask 64512
    %8 = vst.msk [vmem:[#allocation0] sm:$0x1] %vm7, %v6
    %s9 = scalar_lea.vmem [#allocation1], 1
    %v10 = vld [vmem:[%s9] sm:$0x1]
    %11 = vrot.lane.b32.xlu0 %v10, 8
    %v12 = vpop.permute.xlu0 %11
    %vm13 = vcmask 130112
    %14 = vst.msk [vmem:[#allocation0] sm:$0x1] %vm13, %v12
    %s16 = ssub.s32 2, 1
    %v17 = vld [vmem:[#allocation0] sm:%s16]
    %s19 = ssub.s32 2, 1
    %20 = vst [vmem:[%s1] sm:%s19] %v17

// kernel: encoder_forward.1
$region0: #{encoder_forward.1}
  #allocation0 [shape = 'u32[]', space=smem, size = 0x4, offset = 0x4, fixed_abs, tag = 'smem constant byte address 0x4 - core index']
  #allocation1 [shape = 'u32[72,128]{1,0:T(1,128)}', space=vmem, size = 0x9000, scoped, tag = 'internal scratch']
  #allocation2 [shape = 'f32[16,32]{1,0:T(8,128)}', space=vmem, size = 0x2000, scoped, tag = 'scratch operand']
  %s0 = inlined_call_operand.vmem [shape: f32[16,32], index: 0, kind: input, shape index: {}]
  %s1 = inlined_call_operand.vmem [shape: f32[16,16], index: 1, kind: input, shape index: {}]
  %s2 = inlined_call_operand.vmem [shape: f32[16,16], index: 2, kind: input, shape index: {}]
  %s3 = inlined_call_operand.vmem [shape: f32[16,16], index: 3, kind: input, shape index: {}]
  %s4 = inlined_call_operand.vmem [shape: f32[2,2,32], index: 4, kind: input, shape index: {}]
  %s5 = inlined_call_operand.vmem [shape: f32[2,2,32], index: 5, kind: input, shape index: {}]
  %s6 = inlined_call_operand.vmem [shape: f32[1,32], index: 6, kind: input, shape index: {}]
  %s7 = inlined_call_operand.vmem [shape: f32[1,32], index: 7, kind: input, shape index: {}]
  %s8 = inlined_call_operand.vmem [shape: f32[2,32,96], index: 8, kind: input, shape index: {}]
  %s9 = inlined_call_operand.vmem [shape: f32[2,1,96], index: 9, kind: input, shape index: {}]
  %s10 = inlined_call_operand.vmem [shape: f32[2,32,32], index: 10, kind: input, shape index: {}]
  %s11 = inlined_call_operand.vmem [shape: f32[2,1,32], index: 11, kind: input, shape index: {}]
  %s12 = inlined_call_operand.vmem [shape: bf16[2,32,2048], index: 12, kind: input, shape index: {}]
  %s13 = inlined_call_operand.vmem [shape: f32[2,1,2048], index: 13, kind: input, shape index: {}]
  %s14 = inlined_call_operand.vmem [shape: bf16[2,2048,32], index: 14, kind: input, shape index: {}]
  %s15 = inlined_call_operand.vmem [shape: f32[2,1,32], index: 15, kind: input, shape index: {}]
  %s16 = inlined_call_operand.hbm [shape: f32[16,32], index: 16, kind: output, shape index: {}]
  %s17 = sld [smem:[#allocation0]]
  $region105: #{encoder_forward.1} parent=0
    _
  %s19 = ssub.s32 1, %s17
  %s20 = scalar_select 0, %s19, %s17
  $region1: #{encoder_forward.1} parent=0
    #allocation3 [shape = 'u8[8192]{0}', space=vmem, size = 0x2000, scoped, tag = 'output window, operand 0, single buffered']
    #allocation4 [shape = 's32[2]{0}', space=sflag, size = 0x8, scoped, tag = 'scoped memory for encoder_forward.1']
    %21 = vsyncpa [#allocation4], 0
    loop: start=0, step=1, limit=4
    $region2: #{encoder_forward.1} parent=1 // loop_pre_header
      _
    $region3: #{encoder_forward.1} parent=1 // loop_header
      %s23 = sphi 0, %s27
      %p24 = scmp.ge.s32.totalorder %s23, 4
      %s31 = sphi 0, %s31
      %s33 = sphi 0, %s31
      %s34 = sphi 0, %s33
      %s48 = sphi 0, %s34
      %s52 = sphi 0, %s52
      %s54 = sphi 0, %s52
      %s55 = sphi 0, %s54
      %s69 = sphi 0, %s55
      %s73 = sphi 0, %s73
      %s75 = sphi 0, %s73
      %s76 = sphi 0, %s75
      %s90 = sphi 0, %s76
      %s94 = sphi 0, %s94
      %s96 = sphi 0, %s94
      %s97 = sphi 0, %s96
      %s111 = sphi 0, %s97
      %s117 = sphi 0, %s119
      %s120 = sphi 0, %s117
      %s121 = sphi 0, %s120
      %s137 = sphi 0, %s121
      %s143 = sphi 0, %s145
      %s146 = sphi 0, %s143
      %s147 = sphi 0, %s146
      %s163 = sphi 0, %s147
      %s167 = sphi 0, %s167
      %s169 = sphi 0, %s167
      %s170 = sphi 0, %s169
      %s184 = sphi 0, %s170
      %s188 = sphi 0, %s188
      %s190 = sphi 0, %s188
      %s191 = sphi 0, %s190
      %s205 = sphi 0, %s191
      %s211 = sphi 0, %s213
      %s214 = sphi 0, %s211
      %s215 = sphi 0, %s214
      %s231 = sphi 0, %s215
      %s237 = sphi 0, %s239
      %s240 = sphi 0, %s237
      %s241 = sphi 0, %s240
      %s257 = sphi 0, %s241
      %s263 = sphi 0, %s265
      %s266 = sphi 0, %s263
      %s267 = sphi 0, %s266
      %s283 = sphi 0, %s267
      %s289 = sphi 0, %s291
      %s292 = sphi 0, %s289
      %s293 = sphi 0, %s292
      %s309 = sphi 0, %s293
      %s315 = sphi 0, %s317
      %s318 = sphi 0, %s315
      %s319 = sphi 0, %s318
      %s335 = sphi 0, %s319
      %s341 = sphi 0, %s343
      %s344 = sphi 0, %s341
      %s345 = sphi 0, %s344
      %s361 = sphi 0, %s345
      %s367 = sphi 0, %s369
      %s370 = sphi 0, %s367
      %s371 = sphi 0, %s370
      %s387 = sphi 0, %s371
      %s393 = sphi 0, %s395
      %s396 = sphi 0, %s393
      %s397 = sphi 0, %s396
      %s413 = sphi 0, %s397
      %s417 = sphi 0, %s417
      %s419 = sphi 0, %s417
      %s420 = sphi 0, %s419
      %s434 = sphi 0, %s420
    $region4: #{encoder_forward.1} parent=1 // loop_header_branch
      %26 = sbr.rel (%p24) target = $region8
    $region5: #{encoder_forward.1} parent=1 // loop_body
      %s28 = ssub.s32 %s23, 1
      %s29 = ssub.s32 %s23, 2
      %s30 = sadd.s32 %s23, 1
      %s32 = sadd.s32 %s31, 1
      %p35 = scmp.eq.s32.totalorder %s23, 1
      %p36 = scmp.ne.s32.totalorder %s31, %s33
      %p37 = scmp.eq.s32.totalorder %s23, 0
      %p38 = por %p36, %p37
      %p39 = scmp.ne.s32.totalorder %s31, %s33
      %p40 = scmp.eq.s32.totalorder %s28, 1
      %p41 = por %p39, %p40
      %p42 = scmp.ne.s32.totalorder %s33, %s34
      %p43 = scmp.eq.s32.totalorder %s28, 0
      %p44 = por %p42, %p43
      %p45 = scmp.ne.s32.totalorder %s33, %s34
      %p46 = scmp.eq.s32.totalorder %s29, 1
      %p47 = por %p45, %p46
      %p49 = scmp.ne.s32.totalorder %s34, %s48
      %p50 = scmp.eq.s32.totalorder %s29, 0
      %p51 = por %p49, %p50
      %s53 = sadd.s32 %s52, 1
      %p56 = scmp.eq.s32.totalorder %s23, 1
      %p57 = scmp.ne.s32.totalorder %s52, %s54
      %p58 = scmp.eq.s32.totalorder %s23, 0
      %p59 = por %p57, %p58
      %p60 = scmp.ne.s32.totalorder %s52, %s54
      %p61 = scmp.eq.s32.totalorder %s28, 1
      %p62 = por %p60, %p61
      %p63 = scmp.ne.s32.totalorder %s54, %s55
      %p64 = scmp.eq.s32.totalorder %s28, 0
      %p65 = por %p63, %p64
      %p66 = scmp.ne.s32.totalorder %s54, %s55
      %p67 = scmp.eq.s32.totalorder %s29, 1
      %p68 = por %p66, %p67
      %p70 = scmp.ne.s32.totalorder %s55, %s69
      %p71 = scmp.eq.s32.totalorder %s29, 0
      %p72 = por %p70, %p71
      %s74 = sadd.s32 %s73, 1
      %p77 = scmp.eq.s32.totalorder %s23, 1
      %p78 = scmp.ne.s32.totalorder %s73, %s75
      %p79 = scmp.eq.s32.totalorder %s23, 0
      %p80 = por %p78, %p79
      %p81 = scmp.ne.s32.totalorder %s73, %s75
      %p82 = scmp.eq.s32.totalorder %s28, 1
      %p83 = por %p81, %p82
      %p84 = scmp.ne.s32.totalorder %s75, %s76
      %p85 = scmp.eq.s32.totalorder %s28, 0
      %p86 = por %p84, %p85
      %p87 = scmp.ne.s32.totalorder %s75, %s76
      %p88 = scmp.eq.s32.totalorder %s29, 1
      %p89 = por %p87, %p88
      %p91 = scmp.ne.s32.totalorder %s76, %s90
      %p92 = scmp.eq.s32.totalorder %s29, 0
      %p93 = por %p91, %p92
      %s95 = sadd.s32 %s94, 1
      %p98 = scmp.eq.s32.totalorder %s23, 1
      %p99 = scmp.ne.s32.totalorder %s94, %s96
      %p100 = scmp.eq.s32.totalorder %s23, 0
      %p101 = por %p99, %p100
      %p102 = scmp.ne.s32.totalorder %s94, %s96
      %p103 = scmp.eq.s32.totalorder %s28, 1
      %p104 = por %p102, %p103
      %p105 = scmp.ne.s32.totalorder %s96, %s97
      %p106 = scmp.eq.s32.totalorder %s28, 0
      %p107 = por %p105, %p106
      %p108 = scmp.ne.s32.totalorder %s96, %s97
      %p109 = scmp.eq.s32.totalorder %s29, 1
      %p110 = por %p108, %p109
      %p112 = scmp.ne.s32.totalorder %s97, %s111
      %p113 = scmp.eq.s32.totalorder %s29, 0
      %p114 = por %p112, %p113
      %s115 = ssub.s32 %s23, %s30
      %p116 = scmp.eq.s32.totalorder %s115, 0
      %s118 = sadd.s32 %s117, 1
      %s119 = scalar_select %p116, %s117, %s118
      %p122 = pneg %p116
      %p123 = scmp.eq.s32.totalorder %s23, 1
      %p124 = por %p122, %p123
      %p125 = scmp.ne.s32.totalorder %s117, %s120
      %p126 = scmp.eq.s32.totalorder %s23, 0
      %p127 = por %p125, %p126
      %p128 = scmp.ne.s32.totalorder %s117, %s120
      %p129 = scmp.eq.s32.totalorder %s28, 1
      %p130 = por %p128, %p129
      %p131 = scmp.ne.s32.totalorder %s120, %s121
      %p132 = scmp.eq.s32.totalorder %s28, 0
      %p133 = por %p131, %p132
      %p134 = scmp.ne.s32.totalorder %s120, %s121
      %p135 = scmp.eq.s32.totalorder %s29, 1
      %p136 = por %p134, %p135
      %p138 = scmp.ne.s32.totalorder %s121, %s137
      %p139 = scmp.eq.s32.totalorder %s29, 0
      %p140 = por %p138, %p139
      %s141 = ssub.s32 %s23, %s30
      %p142 = scmp.eq.s32.totalorder %s141, 0
      %s144 = sadd.s32 %s143, 1
      %s145 = scalar_select %p142, %s143, %s144
      %p148 = pneg %p142
      %p149 = scmp.eq.s32.totalorder %s23, 1
      %p150 = por %p148, %p149
      %p151 = scmp.ne.s32.totalorder %s143, %s146
      %p152 = scmp.eq.s32.totalorder %s23, 0
      %p153 = por %p151, %p152
      %p154 = scmp.ne.s32.totalorder %s143, %s146
      %p155 = scmp.eq.s32.totalorder %s28, 1
      %p156 = por %p154, %p155
      %p157 = scmp.ne.s32.totalorder %s146, %s147
      %p158 = scmp.eq.s32.totalorder %s28, 0
      %p159 = por %p157, %p158
      %p160 = scmp.ne.s32.totalorder %s146, %s147
      %p161 = scmp.eq.s32.totalorder %s29, 1
      %p162 = por %p160, %p161
      %p164 = scmp.ne.s32.totalorder %s147, %s163
      %p165 = scmp.eq.s32.totalorder %s29, 0
      %p166 = por %p164, %p165
      %s168 = sadd.s32 %s167, 1
      %p171 = scmp.eq.s32.totalorder %s23, 1
      %p172 = scmp.ne.s32.totalorder %s167, %s169
      %p173 = scmp.eq.s32.totalorder %s23, 0
      %p174 = por %p172, %p173
      %p175 = scmp.ne.s32.totalorder %s167, %s169
      %p176 = scmp.eq.s32.totalorder %s28, 1
      %p177 = por %p175, %p176
      %p178 = scmp.ne.s32.totalorder %s169, %s170
      %p179 = scmp.eq.s32.totalorder %s28, 0
      %p180 = por %p178, %p179
      %p181 = scmp.ne.s32.totalorder %s169, %s170
      %p182 = scmp.eq.s32.totalorder %s29, 1
      %p183 = por %p181, %p182
      %p185 = scmp.ne.s32.totalorder %s170, %s184
      %p186 = scmp.eq.s32.totalorder %s29, 0
      %p187 = por %p185, %p186
      %s189 = sadd.s32 %s188, 1
      %p192 = scmp.eq.s32.totalorder %s23, 1
      %p193 = scmp.ne.s32.totalorder %s188, %s190
      %p194 = scmp.eq.s32.totalorder %s23, 0
      %p195 = por %p193, %p194
      %p196 = scmp.ne.s32.totalorder %s188, %s190
      %p197 = scmp.eq.s32.totalorder %s28, 1
      %p198 = por %p196, %p197
      %p199 = scmp.ne.s32.totalorder %s190, %s191
      %p200 = scmp.eq.s32.totalorder %s28, 0
      %p201 = por %p199, %p200
      %p202 = scmp.ne.s32.totalorder %s190, %s191
      %p203 = scmp.eq.s32.totalorder %s29, 1
      %p204 = por %p202, %p203
      %p206 = scmp.ne.s32.totalorder %s191, %s205
      %p207 = scmp.eq.s32.totalorder %s29, 0
      %p208 = por %p206, %p207
      %s209 = ssub.s32 %s23, %s30
      %p210 = scmp.eq.s32.totalorder %s209, 0
      %s212 = sadd.s32 %s211, 1
      %s213 = scalar_select %p210, %s211, %s212
      %p216 = pneg %p210
      %p217 = scmp.eq.s32.totalorder %s23, 1
      %p218 = por %p216, %p217
      %p219 = scmp.ne.s32.totalorder %s211, %s214
      %p220 = scmp.eq.s32.totalorder %s23, 0
      %p221 = por %p219, %p220
      %p222 = scmp.ne.s32.totalorder %s211, %s214
      %p223 = scmp.eq.s32.totalorder %s28, 1
      %p224 = por %p222, %p223
      %p225 = scmp.ne.s32.totalorder %s214, %s215
      %p226 = scmp.eq.s32.totalorder %s28, 0
      %p227 = por %p225, %p226
      %p228 = scmp.ne.s32.totalorder %s214, %s215
      %p229 = scmp.eq.s32.totalorder %s29, 1
      %p230 = por %p228, %p229
      %p232 = scmp.ne.s32.totalorder %s215, %s231
      %p233 = scmp.eq.s32.totalorder %s29, 0
      %p234 = por %p232, %p233
      %s235 = ssub.s32 %s23, %s30
      %p236 = scmp.eq.s32.totalorder %s235, 0
      %s238 = sadd.s32 %s237, 1
      %s239 = scalar_select %p236, %s237, %s238
      %p242 = pneg %p236
      %p243 = scmp.eq.s32.totalorder %s23, 1
      %p244 = por %p242, %p243
      %p245 = scmp.ne.s32.totalorder %s237, %s240
      %p246 = scmp.eq.s32.totalorder %s23, 0
      %p247 = por %p245, %p246
      %p248 = scmp.ne.s32.totalorder %s237, %s240
      %p249 = scmp.eq.s32.totalorder %s28, 1
      %p250 = por %p248, %p249
      %p251 = scmp.ne.s32.totalorder %s240, %s241
      %p252 = scmp.eq.s32.totalorder %s28, 0
      %p253 = por %p251, %p252
      %p254 = scmp.ne.s32.totalorder %s240, %s241
      %p255 = scmp.eq.s32.totalorder %s29, 1
      %p256 = por %p254, %p255
      %p258 = scmp.ne.s32.totalorder %s241, %s257
      %p259 = scmp.eq.s32.totalorder %s29, 0
      %p260 = por %p258, %p259
      %s261 = ssub.s32 %s23, %s30
      %p262 = scmp.eq.s32.totalorder %s261, 0
      %s264 = sadd.s32 %s263, 1
      %s265 = scalar_select %p262, %s263, %s264
      %p268 = pneg %p262
      %p269 = scmp.eq.s32.totalorder %s23, 1
      %p270 = por %p268, %p269
      %p271 = scmp.ne.s32.totalorder %s263, %s266
      %p272 = scmp.eq.s32.totalorder %s23, 0
      %p273 = por %p271, %p272
      %p274 = scmp.ne.s32.totalorder %s263, %s266
      %p275 = scmp.eq.s32.totalorder %s28, 1
      %p276 = por %p274, %p275
      %p277 = scmp.ne.s32.totalorder %s266, %s267
      %p278 = scmp.eq.s32.totalorder %s28, 0
      %p279 = por %p277, %p278
      %p280 = scmp.ne.s32.totalorder %s266, %s267
      %p281 = scmp.eq.s32.totalorder %s29, 1
      %p282 = por %p280, %p281
      %p284 = scmp.ne.s32.totalorder %s267, %s283
      %p285 = scmp.eq.s32.totalorder %s29, 0
      %p286 = por %p284, %p285
      %s287 = ssub.s32 %s23, %s30
      %p288 = scmp.eq.s32.totalorder %s287, 0
      %s290 = sadd.s32 %s289, 1
      %s291 = scalar_select %p288, %s289, %s290
      %p294 = pneg %p288
      %p295 = scmp.eq.s32.totalorder %s23, 1
      %p296 = por %p294, %p295
      %p297 = scmp.ne.s32.totalorder %s289, %s292
      %p298 = scmp.eq.s32.totalorder %s23, 0
      %p299 = por %p297, %p298
      %p300 = scmp.ne.s32.totalorder %s289, %s292
      %p301 = scmp.eq.s32.totalorder %s28, 1
      %p302 = por %p300, %p301
      %p303 = scmp.ne.s32.totalorder %s292, %s293
      %p304 = scmp.eq.s32.totalorder %s28, 0
      %p305 = por %p303, %p304
      %p306 = scmp.ne.s32.totalorder %s292, %s293
      %p307 = scmp.eq.s32.totalorder %s29, 1
      %p308 = por %p306, %p307
      %p310 = scmp.ne.s32.totalorder %s293, %s309
      %p311 = scmp.eq.s32.totalorder %s29, 0
      %p312 = por %p310, %p311
      %s313 = ssub.s32 %s23, %s30
      %p314 = scmp.eq.s32.totalorder %s313, 0
      %s316 = sadd.s32 %s315, 1
      %s317 = scalar_select %p314, %s315, %s316
      %p320 = pneg %p314
      %p321 = scmp.eq.s32.totalorder %s23, 1
      %p322 = por %p320, %p321
      %p323 = scmp.ne.s32.totalorder %s315, %s318
      %p324 = scmp.eq.s32.totalorder %s23, 0
      %p325 = por %p323, %p324
      %p326 = scmp.ne.s32.totalorder %s315, %s318
      %p327 = scmp.eq.s32.totalorder %s28, 1
      %p328 = por %p326, %p327
      %p329 = scmp.ne.s32.totalorder %s318, %s319
      %p330 = scmp.eq.s32.totalorder %s28, 0
      %p331 = por %p329, %p330
      %p332 = scmp.ne.s32.totalorder %s318, %s319
      %p333 = scmp.eq.s32.totalorder %s29, 1
      %p334 = por %p332, %p333
      %p336 = scmp.ne.s32.totalorder %s319, %s335
      %p337 = scmp.eq.s32.totalorder %s29, 0
      %p338 = por %p336, %p337
      %s339 = ssub.s32 %s23, %s30
      %p340 = scmp.eq.s32.totalorder %s339, 0
      %s342 = sadd.s32 %s341, 1
      %s343 = scalar_select %p340, %s341, %s342
      %p346 = pneg %p340
      %p347 = scmp.eq.s32.totalorder %s23, 1
      %p348 = por %p346, %p347
      %p349 = scmp.ne.s32.totalorder %s341, %s344
      %p350 = scmp.eq.s32.totalorder %s23, 0
      %p351 = por %p349, %p350
      %p352 = scmp.ne.s32.totalorder %s341, %s344
      %p353 = scmp.eq.s32.totalorder %s28, 1
      %p354 = por %p352, %p353
      %p355 = scmp.ne.s32.totalorder %s344, %s345
      %p356 = scmp.eq.s32.totalorder %s28, 0
      %p357 = por %p355, %p356
      %p358 = scmp.ne.s32.totalorder %s344, %s345
      %p359 = scmp.eq.s32.totalorder %s29, 1
      %p360 = por %p358, %p359
      %p362 = scmp.ne.s32.totalorder %s345, %s361
      %p363 = scmp.eq.s32.totalorder %s29, 0
      %p364 = por %p362, %p363
      %s365 = ssub.s32 %s23, %s30
      %p366 = scmp.eq.s32.totalorder %s365, 0
      %s368 = sadd.s32 %s367, 1
      %s369 = scalar_select %p366, %s367, %s368
      %p372 = pneg %p366
      %p373 = scmp.eq.s32.totalorder %s23, 1
      %p374 = por %p372, %p373
      %p375 = scmp.ne.s32.totalorder %s367, %s370
      %p376 = scmp.eq.s32.totalorder %s23, 0
      %p377 = por %p375, %p376
      %p378 = scmp.ne.s32.totalorder %s367, %s370
      %p379 = scmp.eq.s32.totalorder %s28, 1
      %p380 = por %p378, %p379
      %p381 = scmp.ne.s32.totalorder %s370, %s371
      %p382 = scmp.eq.s32.totalorder %s28, 0
      %p383 = por %p381, %p382
      %p384 = scmp.ne.s32.totalorder %s370, %s371
      %p385 = scmp.eq.s32.totalorder %s29, 1
      %p386 = por %p384, %p385
      %p388 = scmp.ne.s32.totalorder %s371, %s387
      %p389 = scmp.eq.s32.totalorder %s29, 0
      %p390 = por %p388, %p389
      %s391 = ssub.s32 %s23, %s30
      %p392 = scmp.eq.s32.totalorder %s391, 0
      %s394 = sadd.s32 %s393, 1
      %s395 = scalar_select %p392, %s393, %s394
      %p398 = pneg %p392
      %p399 = scmp.eq.s32.totalorder %s23, 1
      %p400 = por %p398, %p399
      %p401 = scmp.ne.s32.totalorder %s393, %s396
      %p402 = scmp.eq.s32.totalorder %s23, 0
      %p403 = por %p401, %p402
      %p404 = scmp.ne.s32.totalorder %s393, %s396
      %p405 = scmp.eq.s32.totalorder %s28, 1
      %p406 = por %p404, %p405
      %p407 = scmp.ne.s32.totalorder %s396, %s397
      %p408 = scmp.eq.s32.totalorder %s28, 0
      %p409 = por %p407, %p408
      %p410 = scmp.ne.s32.totalorder %s396, %s397
      %p411 = scmp.eq.s32.totalorder %s29, 1
      %p412 = por %p410, %p411
      %p414 = scmp.ne.s32.totalorder %s397, %s413
      %p415 = scmp.eq.s32.totalorder %s29, 0
      %p416 = por %p414, %p415
      %s418 = sadd.s32 %s417, 1
      %p421 = scmp.eq.s32.totalorder %s23, 1
      %p422 = scmp.ne.s32.totalorder %s417, %s419
      %p423 = scmp.eq.s32.totalorder %s23, 0
      %p424 = por %p422, %p423
      %p425 = scmp.ne.s32.totalorder %s417, %s419
      %p426 = scmp.eq.s32.totalorder %s28, 1
      %p427 = por %p425, %p426
      %p428 = scmp.ne.s32.totalorder %s419, %s420
      %p429 = scmp.eq.s32.totalorder %s28, 0
      %p430 = por %p428, %p429
      %p431 = scmp.ne.s32.totalorder %s419, %s420
      %p432 = scmp.eq.s32.totalorder %s29, 1
      %p433 = por %p431, %p432
      %p435 = scmp.ne.s32.totalorder %s420, %s434
      %p436 = scmp.eq.s32.totalorder %s29, 0
      %p437 = por %p435, %p436
      %p438 = scmp.le.s32.totalorder 1, %s23
      %p439 = scmp.lt.s32.totalorder %s23, 3
      %p440 = pnand %p438, %p439
      %p441 = pneg %p440
      // Predicated region
      $region9: #{encoder_forward.1} parent=5 // pred_check
        _
      $region10: #{encoder_forward.1} parent=5 // pred_check_branch
        %443 = sbr.rel (%p440) target = $region12
      $region11: #{encoder_forward.1} parent=5 // pred_region
        %s444 = ssub.s32 %s23, 1
        // Predicated region
        $region13: #{encoder_forward.1} parent=11 // pred_check
          %p445 = pneg %p44
        $region14: #{encoder_forward.1} parent=11 // pred_check_branch
          %447 = sbr.rel (%p445) target = $region16
        $region15: #{encoder_forward.1} parent=11 // pred_region
          _
        $region16: #{encoder_forward.1} parent=11 // pred_fallthru
          _
        // Predicated region
        $region17: #{encoder_forward.1} parent=11 // pred_check
          %p448 = pneg %p65
        $region18: #{encoder_forward.1} parent=11 // pred_check_branch
          %450 = sbr.rel (%p448) target = $region20
        $region19: #{encoder_forward.1} parent=11 // pred_region
          _
        $region20: #{encoder_forward.1} parent=11 // pred_fallthru
          _
        // Predicated region
        $region21: #{encoder_forward.1} parent=11 // pred_check
          %p451 = pneg %p86
        $region22: #{encoder_forward.1} parent=11 // pred_check_branch
          %453 = sbr.rel (%p451) target = $region24
        $region23: #{encoder_forward.1} parent=11 // pred_region
          _
        $region24: #{encoder_forward.1} parent=11 // pred_fallthru
          _
        // Predicated region
        $region25: #{encoder_forward.1} parent=11 // pred_check
          %p454 = pneg %p107
        $region26: #{encoder_forward.1} parent=11 // pred_check_branch
          %456 = sbr.rel (%p454) target = $region28
        $region27: #{encoder_forward.1} parent=11 // pred_region
          _
        $region28: #{encoder_forward.1} parent=11 // pred_fallthru
          _
        // Predicated region
        $region29: #{encoder_forward.1} parent=11 // pred_check
          %p457 = pneg %p180
        $region30: #{encoder_forward.1} parent=11 // pred_check_branch
          %459 = sbr.rel (%p457) target = $region32
        $region31: #{encoder_forward.1} parent=11 // pred_region
          _
        $region32: #{encoder_forward.1} parent=11 // pred_fallthru
          _
        // Predicated region
        $region33: #{encoder_forward.1} parent=11 // pred_check
          %p460 = pneg %p201
        $region34: #{encoder_forward.1} parent=11 // pred_check_branch
          %462 = sbr.rel (%p460) target = $region36
        $region35: #{encoder_forward.1} parent=11 // pred_region
          _
        $region36: #{encoder_forward.1} parent=11 // pred_fallthru
          _
      $region12: #{encoder_forward.1} parent=5 // pred_fallthru
        _
      %p463 = scmp.lt.s32.totalorder %s23, 2
      // Predicated region
      $region37: #{encoder_forward.1} parent=5 // pred_check
        %p464 = pneg %p463
      $region38: #{encoder_forward.1} parent=5 // pred_check_branch
        %466 = sbr.rel (%p464) target = $region40
      $region39: #{encoder_forward.1} parent=5 // pred_region
        // Predicated region
        $region41: #{encoder_forward.1} parent=39 // pred_check
          %p467 = pneg %p127
        $region42: #{encoder_forward.1} parent=39 // pred_check_branch
          %469 = sbr.rel (%p467) target = $region44
        $region43: #{encoder_forward.1} parent=39 // pred_region
          %p470 = scmp.lt.s32.totalorder %s23, 1
          %s471 = scalar_select %p470, %s23, 1
          %s472 = smul.addr %s471, 2
          %s473 = scalar_lea.vmem %s4, %s472
        $region44: #{encoder_forward.1} parent=39 // pred_fallthru
          _
        // Predicated region
        $region45: #{encoder_forward.1} parent=39 // pred_check
          %p474 = pneg %p153
        $region46: #{encoder_forward.1} parent=39 // pred_check_branch
          %476 = sbr.rel (%p474) target = $region48
        $region47: #{encoder_forward.1} parent=39 // pred_region
          %p477 = scmp.lt.s32.totalorder %s23, 1
          %s478 = scalar_select %p477, %s23, 1
          %s479 = smul.addr %s478, 2
          %s480 = scalar_lea.vmem %s5, %s479
        $region48: #{encoder_forward.1} parent=39 // pred_fallthru
          _
        // Predicated region
        $region49: #{encoder_forward.1} parent=39 // pred_check
          %p481 = pneg %p221
        $region50: #{encoder_forward.1} parent=39 // pred_check_branch
          %483 = sbr.rel (%p481) target = $region52
        $region51: #{encoder_forward.1} parent=39 // pred_region
          %p484 = scmp.lt.s32.totalorder %s23, 1
          %s485 = scalar_select %p484, %s23, 1
          %s486 = smul.addr %s485, 4
          %s487 = smul.addr %s486, 8
          %s488 = scalar_lea.vmem %s8, %s487
        $region52: #{encoder_forward.1} parent=39 // pred_fallthru
          _
        // Predicated region
        $region53: #{encoder_forward.1} parent=39 // pred_check
          %p489 = pneg %p247
        $region54: #{encoder_forward.1} parent=39 // pred_check_branch
          %491 = sbr.rel (%p489) target = $region56
        $region55: #{encoder_forward.1} parent=39 // pred_region
          %p492 = scmp.lt.s32.totalorder %s23, 1
          %s493 = scalar_select %p492, %s23, 1
          %s494 = scalar_lea.vmem %s9, %s493
        $region56: #{encoder_forward.1} parent=39 // pred_fallthru
          _
        // Predicated region
        $region57: #{encoder_forward.1} parent=39 // pred_check
          %p495 = pneg %p273
        $region58: #{encoder_forward.1} parent=39 // pred_check_branch
          %497 = sbr.rel (%p495) target = $region60
        $region59: #{encoder_forward.1} parent=39 // pred_region
          %p498 = scmp.lt.s32.totalorder %s23, 1
          %s499 = scalar_select %p498, %s23, 1
          %s500 = smul.addr %s499, 4
          %s501 = smul.addr %s500, 8
          %s502 = scalar_lea.vmem %s10, %s501
        $region60: #{encoder_forward.1} parent=39 // pred_fallthru
          _
        // Predicated region
        $region61: #{encoder_forward.1} parent=39 // pred_check
          %p503 = pneg %p299
        $region62: #{encoder_forward.1} parent=39 // pred_check_branch
          %505 = sbr.rel (%p503) target = $region64
        $region63: #{encoder_forward.1} parent=39 // pred_region
          %p506 = scmp.lt.s32.totalorder %s23, 1
          %s507 = scalar_select %p506, %s23, 1
          %s508 = scalar_lea.vmem %s11, %s507
        $region64: #{encoder_forward.1} parent=39 // pred_fallthru
          _
        // Predicated region
        $region65: #{encoder_forward.1} parent=39 // pred_check
          %p509 = pneg %p325
        $region66: #{encoder_forward.1} parent=39 // pred_check_branch
          %511 = sbr.rel (%p509) target = $region68
        $region67: #{encoder_forward.1} parent=39 // pred_region
          %p512 = scmp.lt.s32.totalorder %s23, 1
          %s513 = scalar_select %p512, %s23, 1
          %s514 = smul.addr %s513, 64
          %s515 = smul.addr %s514, 4
          %s516 = scalar_lea.vmem %s12, %s515
        $region68: #{encoder_forward.1} parent=39 // pred_fallthru
          _
        // Predicated region
        $region69: #{encoder_forward.1} parent=39 // pred_check
          %p517 = pneg %p351
        $region70: #{encoder_forward.1} parent=39 // pred_check_branch
          %519 = sbr.rel (%p517) target = $region72
        $region71: #{encoder_forward.1} parent=39 // pred_region
          %p520 = scmp.lt.s32.totalorder %s23, 1
          %s521 = scalar_select %p520, %s23, 1
          %s522 = smul.addr %s521, 16
          %s523 = scalar_lea.vmem %s13, %s522
        $region72: #{encoder_forward.1} parent=39 // pred_fallthru
          _
        // Predicated region
        $region73: #{encoder_forward.1} parent=39 // pred_check
          %p524 = pneg %p377
        $region74: #{encoder_forward.1} parent=39 // pred_check_branch
          %526 = sbr.rel (%p524) target = $region76
        $region75: #{encoder_forward.1} parent=39 // pred_region
          %p527 = scmp.lt.s32.totalorder %s23, 1
          %s528 = scalar_select %p527, %s23, 1
          %s529 = smul.addr %s528, 256
          %s530 = smul.addr %s529, 4
          %s531 = scalar_lea.vmem %s14, %s530
        $region76: #{encoder_forward.1} parent=39 // pred_fallthru
          _
        // Predicated region
        $region77: #{encoder_forward.1} parent=39 // pred_check
          %p532 = pneg %p403
        $region78: #{encoder_forward.1} parent=39 // pred_check_branch
          %534 = sbr.rel (%p532) target = $region80
        $region79: #{encoder_forward.1} parent=39 // pred_region
          %p535 = scmp.lt.s32.totalorder %s23, 1
          %s536 = scalar_select %p535, %s23, 1
          %s537 = scalar_lea.vmem %s15, %s536
        $region80: #{encoder_forward.1} parent=39 // pred_fallthru
          _
      $region40: #{encoder_forward.1} parent=5 // pred_fallthru
        _
      %p538 = scmp.le.s32.totalorder 1, %s23
      %p539 = scmp.lt.s32.totalorder %s23, 3
      %p540 = pnand %p538, %p539
      %p541 = pneg %p540
      // Predicated region
      $region81: #{encoder_forward.1} parent=5 // pred_check
        _
      $region82: #{encoder_forward.1} parent=5 // pred_check_branch
        %543 = sbr.rel (%p540) target = $region84
      $region83: #{encoder_forward.1} parent=5 // pred_region
        %s544 = ssub.s32 %s23, 1
        %p545 = pneg %p44
        %p546 = pneg %p41
        %p547 = pneg %p65
        %p548 = pneg %p62
        %p549 = pneg %p86
        %p550 = pneg %p83
        %p551 = pneg %p107
        %p552 = pneg %p104
        %p553 = scmp.lt.s32.totalorder %s28, 1
        %s554 = scalar_select %p553, %s28, 1
        %s555 = smul.addr %s554, 2
        %s556 = scalar_lea.vmem %s4, %s555
        %p557 = pneg %p133
        %p558 = pneg %p130
        %p559 = scmp.lt.s32.totalorder %s28, 1
        %s560 = scalar_select %p559, %s28, 1
        %s561 = smul.addr %s560, 2
        %s562 = scalar_lea.vmem %s5, %s561
        %p563 = pneg %p159
        %p564 = pneg %p156
        %p565 = pneg %p180
        %p566 = pneg %p177
        %p567 = pneg %p201
        %p568 = pneg %p198
        %p569 = scmp.lt.s32.totalorder %s28, 1
        %s570 = scalar_select %p569, %s28, 1
        %s571 = smul.addr %s570, 4
        %s572 = smul.addr %s571, 8
        %s573 = scalar_lea.vmem %s8, %s572
        %p574 = pneg %p227
        %p575 = pneg %p224
        %p576 = scmp.lt.s32.totalorder %s28, 1
        %s577 = scalar_select %p576, %s28, 1
        %s578 = scalar_lea.vmem %s9, %s577
        %p579 = pneg %p253
        %p580 = pneg %p250
        %p581 = scmp.lt.s32.totalorder %s28, 1
        %s582 = scalar_select %p581, %s28, 1
        %s583 = smul.addr %s582, 4
        %s584 = smul.addr %s583, 8
        %s585 = scalar_lea.vmem %s10, %s584
        %p586 = pneg %p279
        %p587 = pneg %p276
        %p588 = scmp.lt.s32.totalorder %s28, 1
        %s589 = scalar_select %p588, %s28, 1
        %s590 = scalar_lea.vmem %s11, %s589
        %p591 = pneg %p305
        %p592 = pneg %p302
        %p593 = scmp.lt.s32.totalorder %s28, 1
        %s594 = scalar_select %p593, %s28, 1
        %s595 = smul.addr %s594, 64
        %s596 = smul.addr %s595, 4
        %s597 = scalar_lea.vmem %s12, %s596
        %p598 = pneg %p331
        %p599 = pneg %p328
        %p600 = scmp.lt.s32.totalorder %s28, 1
        %s601 = scalar_select %p600, %s28, 1
        %s602 = smul.addr %s601, 16
        %s603 = scalar_lea.vmem %s13, %s602
        %p604 = pneg %p357
        %p605 = pneg %p354
        %p606 = scmp.lt.s32.totalorder %s28, 1
        %s607 = scalar_select %p606, %s28, 1
        %s608 = smul.addr %s607, 256
        %s609 = smul.addr %s608, 4
        %s610 = scalar_lea.vmem %s14, %s609
        %p611 = pneg %p383
        %p612 = pneg %p380
        %p613 = scmp.lt.s32.totalorder %s28, 1
        %s614 = scalar_select %p613, %s28, 1
        %s615 = scalar_lea.vmem %s15, %s614
        %p616 = pneg %p409
        %p617 = pneg %p406
        %p618 = pneg %p430
        %p619 = pneg %p427
        %p620 = scmp.lt.s32.totalorder %s28, 1
        %s621 = scalar_select %p620, %s28, 1
        %s622 = smul.addr %s621, 2
        %s623 = scalar_lea.vmem %s4, %s622
        %p624 = scmp.lt.s32.totalorder %s28, 1
        %s625 = scalar_select %p624, %s28, 1
        %s626 = smul.addr %s625, 2
        %s627 = scalar_lea.vmem %s5, %s626
        %p628 = scmp.lt.s32.totalorder %s28, 1
        %s629 = scalar_select %p628, %s28, 1
        %s630 = smul.addr %s629, 4
        %s631 = smul.addr %s630, 8
        %s632 = scalar_lea.vmem %s8, %s631
        %p633 = scmp.lt.s32.totalorder %s28, 1
        %s634 = scalar_select %p633, %s28, 1
        %s635 = scalar_lea.vmem %s9, %s634
        %p636 = scmp.lt.s32.totalorder %s28, 1
        %s637 = scalar_select %p636, %s28, 1
        %s638 = smul.addr %s637, 4
        %s639 = smul.addr %s638, 8
        %s640 = scalar_lea.vmem %s10, %s639
        %p641 = scmp.lt.s32.totalorder %s28, 1
        %s642 = scalar_select %p641, %s28, 1
        %s643 = scalar_lea.vmem %s11, %s642
        %p644 = scmp.lt.s32.totalorder %s28, 1
        %s645 = scalar_select %p644, %s28, 1
        %s646 = smul.addr %s645, 64
        %s647 = smul.addr %s646, 4
        %s648 = scalar_lea.vmem %s12, %s647
        %p649 = scmp.lt.s32.totalorder %s28, 1
        %s650 = scalar_select %p649, %s28, 1
        %s651 = smul.addr %s650, 16
        %s652 = scalar_lea.vmem %s13, %s651
        %p653 = scmp.lt.s32.totalorder %s28, 1
        %s654 = scalar_select %p653, %s28, 1
        %s655 = smul.addr %s654, 256
        %s656 = smul.addr %s655, 4
        %s657 = scalar_lea.vmem %s14, %s656
        %p658 = scmp.lt.s32.totalorder %s28, 1
        %s659 = scalar_select %p658, %s28, 1
        %s660 = scalar_lea.vmem %s15, %s659
        %p662 = scmp.eq.s32.totalorder %s28, 0
        // Predicated region
        $region85: #{encoder_forward.1} parent=83 // pred_check
          %p663 = pneg %p662
        $region86: #{encoder_forward.1} parent=83 // pred_check_branch
          %665 = sbr.rel (%p663) target = $region88
        $region87: #{encoder_forward.1} parent=83 // pred_region
          %v666 = vld [vmem:[%s0] sm:$0xff]
          %v667 = vld [vmem:[%s0 + $0x8] sm:$0xff]
          %vm668 = vcmask 261120
          %669 = vst.msk [vmem:[#allocation2] sm:$0xff] %vm668, %v666
          %670 = vst.msk [vmem:[#allocation2 + $0x8] sm:$0xff] %vm668, %v667
        $region88: #{encoder_forward.1} parent=83 // pred_fallthru
          _
        %v671 = vld [vmem:[#allocation2] sm:$0xff]
        %v672 = vld [vmem:[#allocation2 + $0x8] sm:$0xff]
        %v673 = vld [vmem:[%s623] sm:$0x3]
        %v674 = vld [vmem:[%s627] sm:$0x3]
        %vm675 = vcmask 261120
        %v676 = vsel %vm675, %v671, 0.0
        %677 = vadd.xlane.f32.xlu0 %v676
        %v678 = vpop.xlane.xlu0 %677
        %v679 = vsel %vm675, %v672, 0.0
        %680 = vadd.xlane.f32.xlu0 %v679
        %v681 = vpop.xlane.xlu0 %680
        %v682 = vrcp.pop 32.0
        %v683 = vmul.f32 32.0, %v682
        %v684 = vsub.f32 1.0, %v683
        %v685 = vmul.f32 %v682, %v684
        %v686 = vadd.f32 %v682, %v685
        %vm687 = vweird.f32 %v682
        %v688 = vsel %vm687, %v682, %v686
        %v689 = vmul.f32 %v678, %v688
        %v690 = vmul.f32 %v681, %v688
        %v691 = vsub.f32 %v671, %v689
        %v692 = vsub.f32 %v672, %v690
        %v693 = vmul.f32 %v691, %v691
        %v694 = vmul.f32 %v692, %v692
        %v695 = vsel %vm675, %v693, 0.0
        %696 = vadd.xlane.f32.xlu0 %v695
        %v697 = vpop.xlane.xlu0 %696
        %v698 = vsel %vm675, %v694, 0.0
        %699 = vadd.xlane.f32.xlu0 %v698
        %v700 = vpop.xlane.xlu0 %699
        %v701 = vmul.f32 %v697, 0.032258064
        %v702 = vmul.f32 %v700, 0.032258064
        %v703 = vperm.slane %v673, 0
        %v704 = vmul.f32 %v703, %v691
        %v705 = vmul.f32 %v703, %v692
        %v706 = vrsqrt.pop %v701
        %v707 = vmul.f32 %v706, %v701
        %v708 = vmul.f32 %v707, %v706
        %v709 = vmul.f32 0.5, %v708
        %v710 = vsub.f32 1.5, %v709
        %v711 = vmul.f32 %v706, %v710
        %v712 = vmul.f32 %v701, %v711
        %vm713 = vcmp.eq.f32.partialorder %v701, inf
        %v714 = vsel %vm713, %v701, %v712
        %vm715 = vcmp.eq.f32.partialorder %v701, 0.0
        %v716 = vand.u32 %v701, 2147483648
        %v717 = vsel %vm715, %v716, %v714
        %v718 = vrsqrt.pop %v702
        %v719 = vmul.f32 %v718, %v702
        %v720 = vmul.f32 %v719, %v718
        %v721 = vmul.f32 0.5, %v720
        %v722 = vsub.f32 1.5, %v721
        %v723 = vmul.f32 %v718, %v722
        %v724 = vmul.f32 %v702, %v723
        %vm725 = vcmp.eq.f32.partialorder %v702, inf
        %v726 = vsel %vm725, %v702, %v724
        %vm727 = vcmp.eq.f32.partialorder %v702, 0.0
        %v728 = vand.u32 %v702, 2147483648
        %v729 = vsel %vm727, %v728, %v726
        %v730 = vadd.f32 %v717, 1e-06
        %v731 = vadd.f32 %v729, 1e-06
        %v732 = vrcp.pop %v730
        %v733 = vmul.f32 %v730, %v732
        %v734 = vsub.f32 1.0, %v733
        %v735 = vmul.f32 %v732, %v734
        %v736 = vadd.f32 %v732, %v735
        %vm737 = vweird.f32 %v730
        %vm738 = vweird.f32 %v732
        %vm739 = vmor %vm737, %vm738
        %v740 = vsel %vm739, %v732, %v736
        %v741 = vand.u32 2147483647, %v730
        %vm742 = vcmp.eq.f32.partialorder %v741, 8.507059e+37
        %v743 = vand.u32 %v730, 2147483648
        %v744 = vor.u32 1.1754944e-38, %v743
        %v745 = vsel %vm742, %v744, %v740
        %v746 = vmul.f32 %v704, %v745
        %v747 = vrcp.pop %v731
        %v748 = vmul.f32 %v731, %v747
        %v749 = vsub.f32 1.0, %v748
        %v750 = vmul.f32 %v747, %v749
        %v751 = vadd.f32 %v747, %v750
        %vm752 = vweird.f32 %v731
        %vm753 = vweird.f32 %v747
        %vm754 = vmor %vm752, %vm753
        %v755 = vsel %vm754, %v747, %v751
        %v756 = vand.u32 2147483647, %v731
        %vm757 = vcmp.eq.f32.partialorder %v756, 8.507059e+37
        %v758 = vand.u32 %v731, 2147483648
        %v759 = vor.u32 1.1754944e-38, %v758
        %v760 = vsel %vm757, %v759, %v755
        %v761 = vmul.f32 %v705, %v760
        %v762 = vperm.slane %v674, 0
        %v763 = vadd.f32 %v746, %v762
        %v764 = vadd.f32 %v761, %v762
        %v765 = vld [vmem:[%s632] sm:$0xff]
        %v766 = vld [vmem:[%s632 + $0x8] sm:$0xff]
        %v767 = vld [vmem:[%s632 + $0x10] sm:$0xff]
        %v768 = vld [vmem:[%s632 + $0x18] sm:$0xff]
        %v769 = vld [vmem:[%s635] sm:$0x1]
        %v771 = vperm.slane %v769, 0
        %v774 = vsel %vm675, %v763, 0
        %v777 = vsel %vm675, %v764, 0
        %779 = vmatpush.msra.mxu0 0.0
        %780 = vmatpush.msra.mxu0 0.0
        %781 = vmatpush.msra.mxu0 0.0
        %782 = vmatpush.msra.mxu0 0.0
        %783 = vmatpush.msra.mxu0 0.0
        %784 = vmatpush.msra.mxu0 0.0
        %785 = vmatpush.msra.mxu0 0.0
        %786 = vmatpush.msra.mxu0 0.0
        %787 = vmatpush.msra.mxu0 0.0
        %788 = vmatpush.msra.mxu0 0.0
        %789 = vmatpush.msra.mxu0 0.0
        %790 = vmatpush.msra.mxu0 0.0
        %791 = vmatpush.msra.mxu0 %v768
        %792 = vmatpush.msra.mxu0 %v767
        %793 = vmatpush.msra.mxu0 %v766
        %794 = vmatpush.msra.mxu0 %v765
        %795 = vmatmul.f32.gmra.mxu0 %v774
        %v796 = vpop.f32.mrf.mxu0
        %v797 = vadd.f32 %v771, %v796
        %798 = vmatmul.f32.gmra.mxu0 %v777
        %v799 = vpop.f32.mrf.mxu0
        %v800 = vadd.f32 %v771, %v799
        %801 = vdwg.mxu0
        %802 = vxpose.xlu0.b32.start [1/16] %v797, 128
        %803 = vxpose.xlu0.b32.cont [2/16] %v800, 128
        %804 = vxpose.xlu0.b32.cont [3/16] 0.0, 128
        %805 = vxpose.xlu0.b32.cont [4/16] 0.0, 128
        %806 = vxpose.xlu0.b32.cont [5/16] 0.0, 128
        %807 = vxpose.xlu0.b32.cont [6/16] 0.0, 128
        %808 = vxpose.xlu0.b32.cont [7/16] 0.0, 128
        %809 = vxpose.xlu0.b32.cont [8/16] 0.0, 128
        %810 = vxpose.xlu0.b32.cont [9/16] 0.0, 128
        %811 = vxpose.xlu0.b32.cont [10/16] 0.0, 128
        %812 = vxpose.xlu0.b32.cont [11/16] 0.0, 128
        %813 = vxpose.xlu0.b32.cont [12/16] 0.0, 128
        %814 = vxpose.xlu0.b32.cont [13/16] 0.0, 128
        %815 = vxpose.xlu0.b32.cont [14/16] 0.0, 128
        %816 = vxpose.xlu0.b32.cont [15/16] 0.0, 128
        %817 = vxpose.xlu0.b32.end [16/16] 0.0, 128
        %v818 = vpop.trf.xlu0
        %v819 = vpop.trf.xlu0
        %v820 = vpop.trf.xlu0
        %v821 = vpop.trf.xlu0
        %v822 = vpop.trf.xlu0
        %v823 = vpop.trf.xlu0
        %v824 = vpop.trf.xlu0
        %v825 = vpop.trf.xlu0
        %v826 = vpop.trf.xlu0
        %v827 = vpop.trf.xlu0
        %v828 = vpop.trf.xlu0
        %v829 = vpop.trf.xlu0
        %v830 = vpop.trf.xlu0
        %v831 = vpop.trf.xlu0
        %v832 = vpop.trf.xlu0
        %v833 = vpop.trf.xlu0
        %v834 = vld [vmem:[%s2] sm:$0xff]
        %v835 = vld [vmem:[%s2 + $0x8] sm:$0xff]
        %v836 = vld [vmem:[%s3] sm:$0xff]
        %v837 = vld [vmem:[%s3 + $0x8] sm:$0xff]
        %v838 = vmul.f32 %v818, %v834
        %v839 = vmul.f32 %v819, %v835
        %v840 = vmul.f32 %v820, %v836
        %v841 = vmul.f32 %v821, %v837
        %v842 = vsub.f32 %v838, %v840
        %v843 = vsub.f32 %v839, %v841
        %v844 = vmul.f32 %v820, %v834
        %v845 = vmul.f32 %v821, %v835
        %v846 = vmul.f32 %v818, %v836
        %v847 = vmul.f32 %v819, %v837
        %v848 = vadd.f32 %v844, %v846
        %v849 = vadd.f32 %v845, %v847
        %v850 = vmul.f32 %v822, %v834
        %v851 = vmul.f32 %v823, %v835
        %v852 = vmul.f32 %v824, %v836
        %v853 = vmul.f32 %v825, %v837
        %v854 = vsub.f32 %v850, %v852
        %v855 = vsub.f32 %v851, %v853
        %v856 = vmul.f32 %v824, %v834
        %v857 = vmul.f32 %v825, %v835
        %v858 = vmul.f32 %v822, %v836
        %v859 = vmul.f32 %v823, %v837
        %v860 = vadd.f32 %v856, %v858
        %v861 = vadd.f32 %v857, %v859
        %v864 = vrot.slane %v842, 4
        %v865 = vrot.slane %v843, 4
        %v870 = vrot.slane %v848, 4
        %v871 = vrot.slane %v849, 4
        %v876 = vrot.slane %v854, 4
        %v877 = vrot.slane %v855, 4
        %v880 = vrot.slane %v860, 4
        %v881 = vrot.slane %v861, 4
        %882 = vxpose.xlu0.b32.start [1/16] %v848, 128
        %883 = vxpose.xlu0.b32.cont [2/16] 0.0, 128
        %884 = vxpose.xlu0.b32.cont [3/16] 0.0, 128
        %885 = vxpose.xlu0.b32.cont [4/16] 0.0, 128
        %886 = vxpose.xlu0.b32.cont [5/16] 0.0, 128
        %887 = vxpose.xlu0.b32.cont [6/16] 0.0, 128
        %888 = vxpose.xlu0.b32.cont [7/16] 0.0, 128
        %889 = vxpose.xlu0.b32.cont [8/16] 0.0, 128
        %890 = vxpose.xlu0.b32.cont [9/16] 0.0, 128
        %891 = vxpose.xlu0.b32.cont [10/16] 0.0, 128
        %892 = vxpose.xlu0.b32.cont [11/16] 0.0, 128
        %893 = vxpose.xlu0.b32.cont [12/16] 0.0, 128
        %894 = vxpose.xlu0.b32.cont [13/16] 0.0, 128
        %895 = vxpose.xlu0.b32.cont [14/16] 0.0, 128
        %896 = vxpose.xlu0.b32.cont [15/16] 0.0, 128
        %897 = vxpose.xlu0.b32.end [16/16] 0.0, 128
        %v898 = vpop.trf.xlu0
        %v899 = vpop.trf.xlu0
        %v900 = vpop.trf.xlu0
        %v901 = vpop.trf.xlu0
        %v902 = vpop.trf.xlu0
        %v903 = vpop.trf.xlu0
        %v904 = vpop.trf.xlu0
        %v905 = vpop.trf.xlu0
        %v906 = vpop.trf.xlu0
        %v907 = vpop.trf.xlu0
        %v908 = vpop.trf.xlu0
        %v909 = vpop.trf.xlu0
        %v910 = vpop.trf.xlu0
        %v911 = vpop.trf.xlu0
        %v912 = vpop.trf.xlu0
        %v913 = vpop.trf.xlu0
        %vm914 = vcmask 31744
        %v916 = vsel %vm914, %v898, 0
        %v919 = vsel %vm914, %v899, 0
        %vm921 = vcmask 1043456
        %v922 = vsel %vm921, %v860, 0
        %924 = vmatpush.msra.mxu0 0.0
        %925 = vmatpush.msra.mxu0 0.0
        %926 = vmatpush.msra.mxu0 0.0
        %927 = vmatpush.msra.mxu0 0.0
        %928 = vmatpush.msra.mxu0 0.0
        %929 = vmatpush.msra.mxu0 0.0
        %930 = vmatpush.msra.mxu0 0.0
        %931 = vmatpush.msra.mxu0 0.0
        %932 = vmatpush.msra.mxu0 0.0
        %933 = vmatpush.msra.mxu0 0.0
        %934 = vmatpush.msra.mxu0 0.0
        %935 = vmatpush.msra.mxu0 0.0
        %936 = vmatpush.msra.mxu0 0.0
        %937 = vmatpush.msra.mxu0 0.0
        %938 = vmatpush.msra.mxu0 0.0
        %939 = vmatpush.msra.mxu0 %v922
        %940 = vmatmul.f32.gmra.mxu0 %v916
        %v941 = vpop.f32.mrf.mxu0
        %v942 = vadd.f32 0.0, %v941
        %943 = vmatmul.f32.gmra.mxu0 %v919
        %v944 = vpop.f32.mrf.mxu0
        %v945 = vadd.f32 0.0, %v944
        %946 = vdwg.mxu0
        %947 = vxpose.xlu0.b32.start [1/16] %v870, 128
        %948 = vxpose.xlu0.b32.cont [2/16] 0.0, 128
        %949 = vxpose.xlu0.b32.cont [3/16] 0.0, 128
        %950 = vxpose.xlu0.b32.cont [4/16] 0.0, 128
        %951 = vxpose.xlu0.b32.cont [5/16] 0.0, 128
        %952 = vxpose.xlu0.b32.cont [6/16] 0.0, 128
        %953 = vxpose.xlu0.b32.cont [7/16] 0.0, 128
        %954 = vxpose.xlu0.b32.cont [8/16] 0.0, 128
        %955 = vxpose.xlu0.b32.cont [9/16] 0.0, 128
        %956 = vxpose.xlu0.b32.cont [10/16] 0.0, 128
        %957 = vxpose.xlu0.b32.cont [11/16] 0.0, 128
        %958 = vxpose.xlu0.b32.cont [12/16] 0.0, 128
        %959 = vxpose.xlu0.b32.cont [13/16] 0.0, 128
        %960 = vxpose.xlu0.b32.cont [14/16] 0.0, 128
        %961 = vxpose.xlu0.b32.cont [15/16] 0.0, 128
        %962 = vxpose.xlu0.b32.end [16/16] 0.0, 128
        %v963 = vpop.trf.xlu0
        %v964 = vpop.trf.xlu0
        %v965 = vpop.trf.xlu0
        %v966 = vpop.trf.xlu0
        %v967 = vpop.trf.xlu0
        %v968 = vpop.trf.xlu0
        %v969 = vpop.trf.xlu0
        %v970 = vpop.trf.xlu0
        %v971 = vpop.trf.xlu0
        %v972 = vpop.trf.xlu0
        %v973 = vpop.trf.xlu0
        %v974 = vpop.trf.xlu0
        %v975 = vpop.trf.xlu0
        %v976 = vpop.trf.xlu0
        %v977 = vpop.trf.xlu0
        %v978 = vpop.trf.xlu0
        %v980 = vsel %vm914, %v963, 0
        %v983 = vsel %vm914, %v964, 0
        %v985 = vsel %vm921, %v880, 0
        %987 = vmatpush.msra.mxu0 0.0
        %988 = vmatpush.msra.mxu0 0.0
        %989 = vmatpush.msra.mxu0 0.0
        %990 = vmatpush.msra.mxu0 0.0
        %991 = vmatpush.msra.mxu0 0.0
        %992 = vmatpush.msra.mxu0 0.0
        %993 = vmatpush.msra.mxu0 0.0
        %994 = vmatpush.msra.mxu0 0.0
        %995 = vmatpush.msra.mxu0 0.0
        %996 = vmatpush.msra.mxu0 0.0
        %997 = vmatpush.msra.mxu0 0.0
        %998 = vmatpush.msra.mxu0 0.0
        %999 = vmatpush.msra.mxu0 0.0
        %1000 = vmatpush.msra.mxu0 0.0
        %1001 = vmatpush.msra.mxu0 0.0
        %1002 = vmatpush.msra.mxu0 %v985
        %1003 = vmatmul.f32.gmra.mxu0 %v980
        %v1004 = vpop.f32.mrf.mxu0
        %v1005 = vadd.f32 0.0, %v1004
        %1006 = vmatmul.f32.gmra.mxu0 %v983
        %v1007 = vpop.f32.mrf.mxu0
        %v1008 = vadd.f32 0.0, %v1007
        %1009 = vdwg.mxu0
        %1010 = vxpose.xlu0.b32.start [1/16] %v849, 128
        %1011 = vxpose.xlu0.b32.cont [2/16] 0.0, 128
        %1012 = vxpose.xlu0.b32.cont [3/16] 0.0, 128
        %1013 = vxpose.xlu0.b32.cont [4/16] 0.0, 128
        %1014 = vxpose.xlu0.b32.cont [5/16] 0.0, 128
        %1015 = vxpose.xlu0.b32.cont [6/16] 0.0, 128
        %1016 = vxpose.xlu0.b32.cont [7/16] 0.0, 128
        %1017 = vxpose.xlu0.b32.cont [8/16] 0.0, 128
        %1018 = vxpose.xlu0.b32.cont [9/16] 0.0, 128
        %1019 = vxpose.xlu0.b32.cont [10/16] 0.0, 128
        %1020 = vxpose.xlu0.b32.cont [11/16] 0.0, 128
        %1021 = vxpose.xlu0.b32.cont [12/16] 0.0, 128
        %1022 = vxpose.xlu0.b32.cont [13/16] 0.0, 128
        %1023 = vxpose.xlu0.b32.cont [14/16] 0.0, 128
        %1024 = vxpose.xlu0.b32.cont [15/16] 0.0, 128
        %1025 = vxpose.xlu0.b32.end [16/16] 0.0, 128
        %v1026 = vpop.trf.xlu0
        %v1027 = vpop.trf.xlu0
        %v1028 = vpop.trf.xlu0
        %v1029 = vpop.trf.xlu0
        %v1030 = vpop.trf.xlu0
        %v1031 = vpop.trf.xlu0
        %v1032 = vpop.trf.xlu0
        %v1033 = vpop.trf.xlu0
        %v1034 = vpop.trf.xlu0
        %v1035 = vpop.trf.xlu0
        %v1036 = vpop.trf.xlu0
        %v1037 = vpop.trf.xlu0
        %v1038 = vpop.trf.xlu0
        %v1039 = vpop.trf.xlu0
        %v1040 = vpop.trf.xlu0
        %v1041 = vpop.trf.xlu0
        %v1043 = vsel %vm914, %v1026, 0
        %v1046 = vsel %vm914, %v1027, 0
        %v1048 = vsel %vm921, %v861, 0
        %1050 = vmatpush.msra.mxu0 0.0
        %1051 = vmatpush.msra.mxu0 0.0
        %1052 = vmatpush.msra.mxu0 0.0
        %1053 = vmatpush.msra.mxu0 0.0
        %1054 = vmatpush.msra.mxu0 0.0
        %1055 = vmatpush.msra.mxu0 0.0
        %1056 = vmatpush.msra.mxu0 0.0
        %1057 = vmatpush.msra.mxu0 0.0
        %1058 = vmatpush.msra.mxu0 0.0
        %1059 = vmatpush.msra.mxu0 0.0
        %1060 = vmatpush.msra.mxu0 0.0
        %1061 = vmatpush.msra.mxu0 0.0
        %1062 = vmatpush.msra.mxu0 0.0
        %1063 = vmatpush.msra.mxu0 0.0
        %1064 = vmatpush.msra.mxu0 0.0
        %1065 = vmatpush.msra.mxu0 %v1048
        %1066 = vmatmul.f32.gmra.mxu0 %v1043
        %v1067 = vpop.f32.mrf.mxu0
        %v1068 = vadd.f32 0.0, %v1067
        %1069 = vmatmul.f32.gmra.mxu0 %v1046
        %v1070 = vpop.f32.mrf.mxu0
        %v1071 = vadd.f32 0.0, %v1070
        %1072 = vdwg.mxu0
        %1073 = vxpose.xlu0.b32.start [1/16] %v871, 128
        %1074 = vxpose.xlu0.b32.cont [2/16] 0.0, 128
        %1075 = vxpose.xlu0.b32.cont [3/16] 0.0, 128
        %1076 = vxpose.xlu0.b32.cont [4/16] 0.0, 128
        %1077 = vxpose.xlu0.b32.cont [5/16] 0.0, 128
        %1078 = vxpose.xlu0.b32.cont [6/16] 0.0, 128
        %1079 = vxpose.xlu0.b32.cont [7/16] 0.0, 128
        %1080 = vxpose.xlu0.b32.cont [8/16] 0.0, 128
        %1081 = vxpose.xlu0.b32.cont [9/16] 0.0, 128
        %1082 = vxpose.xlu0.b32.cont [10/16] 0.0, 128
        %1083 = vxpose.xlu0.b32.cont [11/16] 0.0, 128
        %1084 = vxpose.xlu0.b32.cont [12/16] 0.0, 128
        %1085 = vxpose.xlu0.b32.cont [13/16] 0.0, 128
        %1086 = vxpose.xlu0.b32.cont [14/16] 0.0, 128
        %1087 = vxpose.xlu0.b32.cont [15/16] 0.0, 128
        %1088 = vxpose.xlu0.b32.end [16/16] 0.0, 128
        %v1089 = vpop.trf.xlu0
        %v1090 = vpop.trf.xlu0
        %v1091 = vpop.trf.xlu0
        %v1092 = vpop.trf.xlu0
        %v1093 = vpop.trf.xlu0
        %v1094 = vpop.trf.xlu0
        %v1095 = vpop.trf.xlu0
        %v1096 = vpop.trf.xlu0
        %v1097 = vpop.trf.xlu0
        %v1098 = vpop.trf.xlu0
        %v1099 = vpop.trf.xlu0
        %v1100 = vpop.trf.xlu0
        %v1101 = vpop.trf.xlu0
        %v1102 = vpop.trf.xlu0
        %v1103 = vpop.trf.xlu0
        %v1104 = vpop.trf.xlu0
        %v1106 = vsel %vm914, %v1089, 0
        %v1109 = vsel %vm914, %v1090, 0
        %v1111 = vsel %vm921, %v881, 0
        %1113 = vmatpush.msra.mxu0 0.0
        %1114 = vmatpush.msra.mxu0 0.0
        %1115 = vmatpush.msra.mxu0 0.0
        %1116 = vmatpush.msra.mxu0 0.0
        %1117 = vmatpush.msra.mxu0 0.0
        %1118 = vmatpush.msra.mxu0 0.0
        %1119 = vmatpush.msra.mxu0 0.0
        %1120 = vmatpush.msra.mxu0 0.0
        %1121 = vmatpush.msra.mxu0 0.0
        %1122 = vmatpush.msra.mxu0 0.0
        %1123 = vmatpush.msra.mxu0 0.0
        %1124 = vmatpush.msra.mxu0 0.0
        %1125 = vmatpush.msra.mxu0 0.0
        %1126 = vmatpush.msra.mxu0 0.0
        %1127 = vmatpush.msra.mxu0 0.0
        %1128 = vmatpush.msra.mxu0 %v1111
        %1129 = vmatmul.f32.gmra.mxu0 %v1106
        %v1130 = vpop.f32.mrf.mxu0
        %v1131 = vadd.f32 0.0, %v1130
        %1132 = vmatmul.f32.gmra.mxu0 %v1109
        %v1133 = vpop.f32.mrf.mxu0
        %v1134 = vadd.f32 0.0, %v1133
        %1135 = vdwg.mxu0
        %1136 = vxpose.xlu0.b32.start [1/16] %v842, 128
        %1137 = vxpose.xlu0.b32.cont [2/16] 0.0, 128
        %1138 = vxpose.xlu0.b32.cont [3/16] 0.0, 128
        %1139 = vxpose.xlu0.b32.cont [4/16] 0.0, 128
        %1140 = vxpose.xlu0.b32.cont [5/16] 0.0, 128
        %1141 = vxpose.xlu0.b32.cont [6/16] 0.0, 128
        %1142 = vxpose.xlu0.b32.cont [7/16] 0.0, 128
        %1143 = vxpose.xlu0.b32.cont [8/16] 0.0, 128
        %1144 = vxpose.xlu0.b32.cont [9/16] 0.0, 128
        %1145 = vxpose.xlu0.b32.cont [10/16] 0.0, 128
        %1146 = vxpose.xlu0.b32.cont [11/16] 0.0, 128
        %1147 = vxpose.xlu0.b32.cont [12/16] 0.0, 128
        %1148 = vxpose.xlu0.b32.cont [13/16] 0.0, 128
        %1149 = vxpose.xlu0.b32.cont [14/16] 0.0, 128
        %1150 = vxpose.xlu0.b32.cont [15/16] 0.0, 128
        %1151 = vxpose.xlu0.b32.end [16/16] 0.0, 128
        %v1152 = vpop.trf.xlu0
        %v1153 = vpop.trf.xlu0
        %v1154 = vpop.trf.xlu0
        %v1155 = vpop.trf.xlu0
        %v1156 = vpop.trf.xlu0
        %v1157 = vpop.trf.xlu0
        %v1158 = vpop.trf.xlu0
        %v1159 = vpop.trf.xlu0
        %v1160 = vpop.trf.xlu0
        %v1161 = vpop.trf.xlu0
        %v1162 = vpop.trf.xlu0
        %v1163 = vpop.trf.xlu0
        %v1164 = vpop.trf.xlu0
        %v1165 = vpop.trf.xlu0
        %v1166 = vpop.trf.xlu0
        %v1167 = vpop.trf.xlu0
        %v1169 = vsel %vm914, %v1152, 0
        %v1172 = vsel %vm914, %v1153, 0
        %v1174 = vsel %vm921, %v854, 0
        %1176 = vmatpush.msra.mxu0 0.0
        %1177 = vmatpush.msra.mxu0 0.0
        %1178 = vmatpush.msra.mxu0 0.0
        %1179 = vmatpush.msra.mxu0 0.0
        %1180 = vmatpush.msra.mxu0 0.0
        %1181 = vmatpush.msra.mxu0 0.0
        %1182 = vmatpush.msra.mxu0 0.0
        %1183 = vmatpush.msra.mxu0 0.0
        %1184 = vmatpush.msra.mxu0 0.0
        %1185 = vmatpush.msra.mxu0 0.0
        %1186 = vmatpush.msra.mxu0 0.0
        %1187 = vmatpush.msra.mxu0 0.0
        %1188 = vmatpush.msra.mxu0 0.0
        %1189 = vmatpush.msra.mxu0 0.0
        %1190 = vmatpush.msra.mxu0 0.0
        %1191 = vmatpush.msra.mxu0 %v1174
        %1192 = vmatmul.f32.gmra.mxu0 %v1169
        %v1193 = vpop.f32.mrf.mxu0
        %v1194 = vadd.f32 %v942, %v1193
        %1195 = vmatmul.f32.gmra.mxu0 %v1172
        %v1196 = vpop.f32.mrf.mxu0
        %v1197 = vadd.f32 %v945, %v1196
        %1198 = vdwg.mxu0
        %1199 = vxpose.xlu0.b32.start [1/16] %v864, 128
        %1200 = vxpose.xlu0.b32.cont [2/16] 0.0, 128
        %1201 = vxpose.xlu0.b32.cont [3/16] 0.0, 128
        %1202 = vxpose.xlu0.b32.cont [4/16] 0.0, 128
        %1203 = vxpose.xlu0.b32.cont [5/16] 0.0, 128
        %1204 = vxpose.xlu0.b32.cont [6/16] 0.0, 128
        %1205 = vxpose.xlu0.b32.cont [7/16] 0.0, 128
        %1206 = vxpose.xlu0.b32.cont [8/16] 0.0, 128
        %1207 = vxpose.xlu0.b32.cont [9/16] 0.0, 128
        %1208 = vxpose.xlu0.b32.cont [10/16] 0.0, 128
        %1209 = vxpose.xlu0.b32.cont [11/16] 0.0, 128
        %1210 = vxpose.xlu0.b32.cont [12/16] 0.0, 128
        %1211 = vxpose.xlu0.b32.cont [13/16] 0.0, 128
        %1212 = vxpose.xlu0.b32.cont [14/16] 0.0, 128
        %1213 = vxpose.xlu0.b32.cont [15/16] 0.0, 128
        %1214 = vxpose.xlu0.b32.end [16/16] 0.0, 128
        %v1215 = vpop.trf.xlu0
        %v1216 = vpop.trf.xlu0
        %v1217 = vpop.trf.xlu0
        %v1218 = vpop.trf.xlu0
        %v1219 = vpop.trf.xlu0
        %v1220 = vpop.trf.xlu0
        %v1221 = vpop.trf.xlu0
        %v1222 = vpop.trf.xlu0
        %v1223 = vpop.trf.xlu0
        %v1224 = vpop.trf.xlu0
        %v1225 = vpop.trf.xlu0
        %v1226 = vpop.trf.xlu0
        %v1227 = vpop.trf.xlu0
        %v1228 = vpop.trf.xlu0
        %v1229 = vpop.trf.xlu0
        %v1230 = vpop.trf.xlu0
        %v1232 = vsel %vm914, %v1215, 0
        %v1235 = vsel %vm914, %v1216, 0
        %v1237 = vsel %vm921, %v876, 0
        %1239 = vmatpush.msra.mxu0 0.0
        %1240 = vmatpush.msra.mxu0 0.0
        %1241 = vmatpush.msra.mxu0 0.0
        %1242 = vmatpush.msra.mxu0 0.0
        %1243 = vmatpush.msra.mxu0 0.0
        %1244 = vmatpush.msra.mxu0 0.0
        %1245 = vmatpush.msra.mxu0 0.0
        %1246 = vmatpush.msra.mxu0 0.0
        %1247 = vmatpush.msra.mxu0 0.0
        %1248 = vmatpush.msra.mxu0 0.0
        %1249 = vmatpush.msra.mxu0 0.0
        %1250 = vmatpush.msra.mxu0 0.0
        %1251 = vmatpush.msra.mxu0 0.0
        %1252 = vmatpush.msra.mxu0 0.0
        %1253 = vmatpush.msra.mxu0 0.0
        %1254 = vmatpush.msra.mxu0 %v1237
        %1255 = vmatmul.f32.gmra.mxu0 %v1232
        %v1256 = vpop.f32.mrf.mxu0
        %v1257 = vadd.f32 %v1005, %v1256
        %1258 = vmatmul.f32.gmra.mxu0 %v1235
        %v1259 = vpop.f32.mrf.mxu0
        %v1260 = vadd.f32 %v1008, %v1259
        %1261 = vdwg.mxu0
        %1262 = vxpose.xlu0.b32.start [1/16] %v843, 128
        %1263 = vxpose.xlu0.b32.cont [2/16] 0.0, 128
        %1264 = vxpose.xlu0.b32.cont [3/16] 0.0, 128
        %1265 = vxpose.xlu0.b32.cont [4/16] 0.0, 128
        %1266 = vxpose.xlu0.b32.cont [5/16] 0.0, 128
        %1267 = vxpose.xlu0.b32.cont [6/16] 0.0, 128
        %1268 = vxpose.xlu0.b32.cont [7/16] 0.0, 128
        %1269 = vxpose.xlu0.b32.cont [8/16] 0.0, 128
        %1270 = vxpose.xlu0.b32.cont [9/16] 0.0, 128
        %1271 = vxpose.xlu0.b32.cont [10/16] 0.0, 128
        %1272 = vxpose.xlu0.b32.cont [11/16] 0.0, 128
        %1273 = vxpose.xlu0.b32.cont [12/16] 0.0, 128
        %1274 = vxpose.xlu0.b32.cont [13/16] 0.0, 128
        %1275 = vxpose.xlu0.b32.cont [14/16] 0.0, 128
        %1276 = vxpose.xlu0.b32.cont [15/16] 0.0, 128
        %1277 = vxpose.xlu0.b32.end [16/16] 0.0, 128
        %v1278 = vpop.trf.xlu0
        %v1279 = vpop.trf.xlu0
        %v1280 = vpop.trf.xlu0
        %v1281 = vpop.trf.xlu0
        %v1282 = vpop.trf.xlu0
        %v1283 = vpop.trf.xlu0
        %v1284 = vpop.trf.xlu0
        %v1285 = vpop.trf.xlu0
        %v1286 = vpop.trf.xlu0
        %v1287 = vpop.trf.xlu0
        %v1288 = vpop.trf.xlu0
        %v1289 = vpop.trf.xlu0
        %v1290 = vpop.trf.xlu0
        %v1291 = vpop.trf.xlu0
        %v1292 = vpop.trf.xlu0
        %v1293 = vpop.trf.xlu0
        %v1295 = vsel %vm914, %v1278, 0
        %v1298 = vsel %vm914, %v1279, 0
        %v1300 = vsel %vm921, %v855, 0
        %1302 = vmatpush.msra.mxu0 0.0
        %1303 = vmatpush.msra.mxu0 0.0
        %1304 = vmatpush.msra.mxu0 0.0
        %1305 = vmatpush.msra.mxu0 0.0
        %1306 = vmatpush.msra.mxu0 0.0
        %1307 = vmatpush.msra.mxu0 0.0
        %1308 = vmatpush.msra.mxu0 0.0
        %1309 = vmatpush.msra.mxu0 0.0
        %1310 = vmatpush.msra.mxu0 0.0
        %1311 = vmatpush.msra.mxu0 0.0
        %1312 = vmatpush.msra.mxu0 0.0
        %1313 = vmatpush.msra.mxu0 0.0
        %1314 = vmatpush.msra.mxu0 0.0
        %1315 = vmatpush.msra.mxu0 0.0
        %1316 = vmatpush.msra.mxu0 0.0
        %1317 = vmatpush.msra.mxu0 %v1300
        %1318 = vmatmul.f32.gmra.mxu0 %v1295
        %v1319 = vpop.f32.mrf.mxu0
        %v1320 = vadd.f32 %v1068, %v1319
        %1321 = vmatmul.f32.gmra.mxu0 %v1298
        %v1322 = vpop.f32.mrf.mxu0
        %v1323 = vadd.f32 %v1071, %v1322
        %1324 = vdwg.mxu0
        %1325 = vxpose.xlu0.b32.start [1/16] %v865, 128
        %1326 = vxpose.xlu0.b32.cont [2/16] 0.0, 128
        %1327 = vxpose.xlu0.b32.cont [3/16] 0.0, 128
        %1328 = vxpose.xlu0.b32.cont [4/16] 0.0, 128
        %1329 = vxpose.xlu0.b32.cont [5/16] 0.0, 128
        %1330 = vxpose.xlu0.b32.cont [6/16] 0.0, 128
        %1331 = vxpose.xlu0.b32.cont [7/16] 0.0, 128
        %1332 = vxpose.xlu0.b32.cont [8/16] 0.0, 128
        %1333 = vxpose.xlu0.b32.cont [9/16] 0.0, 128
        %1334 = vxpose.xlu0.b32.cont [10/16] 0.0, 128
        %1335 = vxpose.xlu0.b32.cont [11/16] 0.0, 128
        %1336 = vxpose.xlu0.b32.cont [12/16] 0.0, 128
        %1337 = vxpose.xlu0.b32.cont [13/16] 0.0, 128
        %1338 = vxpose.xlu0.b32.cont [14/16] 0.0, 128
        %1339 = vxpose.xlu0.b32.cont [15/16] 0.0, 128
        %1340 = vxpose.xlu0.b32.end [16/16] 0.0, 128
        %v1341 = vpop.trf.xlu0
        %v1342 = vpop.trf.xlu0
        %v1343 = vpop.trf.xlu0
        %v1344 = vpop.trf.xlu0
        %v1345 = vpop.trf.xlu0
        %v1346 = vpop.trf.xlu0
        %v1347 = vpop.trf.xlu0
        %v1348 = vpop.trf.xlu0
        %v1349 = vpop.trf.xlu0
        %v1350 = vpop.trf.xlu0
        %v1351 = vpop.trf.xlu0
        %v1352 = vpop.trf.xlu0
        %v1353 = vpop.trf.xlu0
        %v1354 = vpop.trf.xlu0
        %v1355 = vpop.trf.xlu0
        %v1356 = vpop.trf.xlu0
        %v1358 = vsel %vm914, %v1341, 0
        %v1361 = vsel %vm914, %v1342, 0
        %v1363 = vsel %vm921, %v877, 0
        %1365 = vmatpush.msra.mxu0 0.0
        %1366 = vmatpush.msra.mxu0 0.0
        %1367 = vmatpush.msra.mxu0 0.0
        %1368 = vmatpush.msra.mxu0 0.0
        %1369 = vmatpush.msra.mxu0 0.0
        %1370 = vmatpush.msra.mxu0 0.0
        %1371 = vmatpush.msra.mxu0 0.0
        %1372 = vmatpush.msra.mxu0 0.0
        %1373 = vmatpush.msra.mxu0 0.0
        %1374 = vmatpush.msra.mxu0 0.0
        %1375 = vmatpush.msra.mxu0 0.0
        %1376 = vmatpush.msra.mxu0 0.0
        %1377 = vmatpush.msra.mxu0 0.0
        %1378 = vmatpush.msra.mxu0 0.0
        %1379 = vmatpush.msra.mxu0 0.0
        %1380 = vmatpush.msra.mxu0 %v1363
        %1381 = vmatmul.f32.gmra.mxu0 %v1358
        %v1382 = vpop.f32.mrf.mxu0
        %v1383 = vadd.f32 %v1131, %v1382
        %1384 = vmatmul.f32.gmra.mxu0 %v1361
        %v1385 = vpop.f32.mrf.mxu0
        %v1386 = vadd.f32 %v1134, %v1385
        %1387 = vdwg.mxu0
        %v1388 = vld [vmem:[%s1] sm:$0xff]
        %v1389 = vld [vmem:[%s1 + $0x8] sm:$0xff]
        %v1390 = vadd.f32 %v1194, %v1388
        %v1391 = vadd.f32 %v1197, %v1389
        %v1392 = vadd.f32 %v1257, %v1388
        %v1393 = vadd.f32 %v1260, %v1389
        %v1394 = vadd.f32 %v1320, %v1388
        %v1395 = vadd.f32 %v1323, %v1389
        %v1396 = vadd.f32 %v1383, %v1388
        %v1397 = vadd.f32 %v1386, %v1389
        %vm1398 = vcmask 130048
        %v1399 = vsel %vm1398, %v1390, -inf
        %1400 = vmax.xlane.f32.xlu0 %v1399
        %v1401 = vpop.xlane.xlu0 %1400
        %v1402 = vsel %vm1398, %v1391, -inf
        %1403 = vmax.xlane.f32.xlu0 %v1402
        %v1404 = vpop.xlane.xlu0 %1403
        %v1405 = vsel %vm1398, %v1392, -inf
        %1406 = vmax.xlane.f32.xlu0 %v1405
        %v1407 = vpop.xlane.xlu0 %1406
        %v1408 = vsel %vm1398, %v1393, -inf
        %1409 = vmax.xlane.f32.xlu0 %v1408
        %v1410 = vpop.xlane.xlu0 %1409
        %v1411 = vsel %vm1398, %v1394, -inf
        %1412 = vmax.xlane.f32.xlu0 %v1411
        %v1413 = vpop.xlane.xlu0 %1412
        %v1414 = vsel %vm1398, %v1395, -inf
        %1415 = vmax.xlane.f32.xlu0 %v1414
        %v1416 = vpop.xlane.xlu0 %1415
        %v1417 = vsel %vm1398, %v1396, -inf
        %1418 = vmax.xlane.f32.xlu0 %v1417
        %v1419 = vpop.xlane.xlu0 %1418
        %v1420 = vsel %vm1398, %v1397, -inf
        %1421 = vmax.xlane.f32.xlu0 %v1420
        %v1422 = vpop.xlane.xlu0 %1421
        %v1423 = vsub.f32 %v1390, %v1401
        %v1424 = vsub.f32 %v1391, %v1404
        %v1425 = vsub.f32 %v1392, %v1407
        %v1426 = vsub.f32 %v1393, %v1410
        %v1427 = vsub.f32 %v1394, %v1413
        %v1428 = vsub.f32 %v1395, %v1416
        %v1429 = vsub.f32 %v1396, %v1419
        %v1430 = vsub.f32 %v1397, %v1422
        %v1431 = vmul.f32 %v1423, 1.442695
        %v1432 = vpow.pop %v1431
        %v1433 = vmul.f32 %v1424, 1.442695
        %v1434 = vpow.pop %v1433
        %v1435 = vmul.f32 %v1425, 1.442695
        %v1436 = vpow.pop %v1435
        %v1437 = vmul.f32 %v1426, 1.442695
        %v1438 = vpow.pop %v1437
        %v1439 = vmul.f32 %v1427, 1.442695
        %v1440 = vpow.pop %v1439
        %v1441 = vmul.f32 %v1428, 1.442695
        %v1442 = vpow.pop %v1441
        %v1443 = vmul.f32 %v1429, 1.442695
        %v1444 = vpow.pop %v1443
        %v1445 = vmul.f32 %v1430, 1.442695
        %v1446 = vpow.pop %v1445
        %v1447 = vsel %vm1398, %v1432, 0.0
        %1448 = vadd.xlane.f32.xlu0 %v1447
        %v1449 = vpop.xlane.xlu0 %1448
        %v1450 = vsel %vm1398, %v1434, 0.0
        %1451 = vadd.xlane.f32.xlu0 %v1450
        %v1452 = vpop.xlane.xlu0 %1451
        %v1453 = vsel %vm1398, %v1436, 0.0
        %1454 = vadd.xlane.f32.xlu0 %v1453
        %v1455 = vpop.xlane.xlu0 %1454
        %v1456 = vsel %vm1398, %v1438, 0.0
        %1457 = vadd.xlane.f32.xlu0 %v1456
        %v1458 = vpop.xlane.xlu0 %1457
        %v1459 = vsel %vm1398, %v1440, 0.0
        %1460 = vadd.xlane.f32.xlu0 %v1459
        %v1461 = vpop.xlane.xlu0 %1460
        %v1462 = vsel %vm1398, %v1442, 0.0
        %1463 = vadd.xlane.f32.xlu0 %v1462
        %v1464 = vpop.xlane.xlu0 %1463
        %v1465 = vsel %vm1398, %v1444, 0.0
        %1466 = vadd.xlane.f32.xlu0 %v1465
        %v1467 = vpop.xlane.xlu0 %1466
        %v1468 = vsel %vm1398, %v1446, 0.0
        %1469 = vadd.xlane.f32.xlu0 %v1468
        %v1470 = vpop.xlane.xlu0 %1469
        %v1471 = vrcp.pop %v1449
        %v1472 = vrcp.pop %v1452
        %v1473 = vrcp.pop %v1455
        %v1474 = vrcp.pop %v1458
        %v1475 = vrcp.pop %v1461
        %v1476 = vrcp.pop %v1464
        %v1477 = vrcp.pop %v1467
        %v1478 = vrcp.pop %v1470
        %v1479 = vmul.f32 %v1432, %v1471
        %v1480 = vmul.f32 %v1434, %v1472
        %v1481 = vmul.f32 %v1436, %v1473
        %v1482 = vmul.f32 %v1438, %v1474
        %v1483 = vmul.f32 %v1440, %v1475
        %v1484 = vmul.f32 %v1442, %v1476
        %v1485 = vmul.f32 %v1444, %v1477
        %v1486 = vmul.f32 %v1446, %v1478
        %v1488 = vsel %vm1398, %v826, 0
        %v1491 = vsel %vm1398, %v1479, 0
        %v1494 = vsel %vm1398, %v1480, 0
        %1496 = vmatpush.xpose.msra.mxu0 0.0
        %1497 = vmatpush.xpose.msra.mxu0 0.0
        %1498 = vmatpush.xpose.msra.mxu0 0.0
        %1499 = vmatpush.xpose.msra.mxu0 0.0
        %1500 = vmatpush.xpose.msra.mxu0 0.0
        %1501 = vmatpush.xpose.msra.mxu0 0.0
        %1502 = vmatpush.xpose.msra.mxu0 0.0
        %1503 = vmatpush.xpose.msra.mxu0 0.0
        %1504 = vmatpush.xpose.msra.mxu0 0.0
        %1505 = vmatpush.xpose.msra.mxu0 0.0
        %1506 = vmatpush.xpose.msra.mxu0 0.0
        %1507 = vmatpush.xpose.msra.mxu0 0.0
        %1508 = vmatpush.xpose.msra.mxu0 0.0
        %1509 = vmatpush.xpose.msra.mxu0 0.0
        %1510 = vmatpush.xpose.msra.mxu0 %v1494
        %1511 = vmatpush.xpose.msra.mxu0 %v1491
        %1512 = vmatmul.f32.gmra.mxu0 %v1488
        %v1513 = vpop.f32.mrf.mxu0
        %v1514 = vadd.f32 0.0, %v1513
        %1515 = vdwg.mxu0
        %v1517 = vsel %vm1398, %v827, 0
        %v1520 = vsel %vm1398, %v1481, 0
        %v1523 = vsel %vm1398, %v1482, 0
        %1525 = vmatpush.xpose.msra.mxu0 0.0
        %1526 = vmatpush.xpose.msra.mxu0 0.0
        %1527 = vmatpush.xpose.msra.mxu0 0.0
        %1528 = vmatpush.xpose.msra.mxu0 0.0
        %1529 = vmatpush.xpose.msra.mxu0 0.0
        %1530 = vmatpush.xpose.msra.mxu0 0.0
        %1531 = vmatpush.xpose.msra.mxu0 0.0
        %1532 = vmatpush.xpose.msra.mxu0 0.0
        %1533 = vmatpush.xpose.msra.mxu0 0.0
        %1534 = vmatpush.xpose.msra.mxu0 0.0
        %1535 = vmatpush.xpose.msra.mxu0 0.0
        %1536 = vmatpush.xpose.msra.mxu0 0.0
        %1537 = vmatpush.xpose.msra.mxu0 0.0
        %1538 = vmatpush.xpose.msra.mxu0 0.0
        %1539 = vmatpush.xpose.msra.mxu0 %v1523
        %1540 = vmatpush.xpose.msra.mxu0 %v1520
        %1541 = vmatmul.f32.gmra.mxu0 %v1517
        %v1542 = vpop.f32.mrf.mxu0
        %v1543 = vadd.f32 0.0, %v1542
        %1544 = vdwg.mxu0
        %v1546 = vsel %vm1398, %v828, 0
        %v1549 = vsel %vm1398, %v1483, 0
        %v1552 = vsel %vm1398, %v1484, 0
        %1554 = vmatpush.xpose.msra.mxu0 0.0
        %1555 = vmatpush.xpose.msra.mxu0 0.0
        %1556 = vmatpush.xpose.msra.mxu0 0.0
        %1557 = vmatpush.xpose.msra.mxu0 0.0
        %1558 = vmatpush.xpose.msra.mxu0 0.0
        %1559 = vmatpush.xpose.msra.mxu0 0.0
        %1560 = vmatpush.xpose.msra.mxu0 0.0
        %1561 = vmatpush.xpose.msra.mxu0 0.0
        %1562 = vmatpush.xpose.msra.mxu0 0.0
        %1563 = vmatpush.xpose.msra.mxu0 0.0
        %1564 = vmatpush.xpose.msra.mxu0 0.0
        %1565 = vmatpush.xpose.msra.mxu0 0.0
        %1566 = vmatpush.xpose.msra.mxu0 0.0
        %1567 = vmatpush.xpose.msra.mxu0 0.0
        %1568 = vmatpush.xpose.msra.mxu0 %v1552
        %1569 = vmatpush.xpose.msra.mxu0 %v1549
        %1570 = vmatmul.f32.gmra.mxu0 %v1546
        %v1571 = vpop.f32.mrf.mxu0
        %v1572 = vadd.f32 0.0, %v1571
        %1573 = vdwg.mxu0
        %v1575 = vsel %vm1398, %v829, 0
        %v1578 = vsel %vm1398, %v1485, 0
        %v1581 = vsel %vm1398, %v1486, 0
        %1583 = vmatpush.xpose.msra.mxu0 0.0
        %1584 = vmatpush.xpose.msra.mxu0 0.0
        %1585 = vmatpush.xpose.msra.mxu0 0.0
        %1586 = vmatpush.xpose.msra.mxu0 0.0
        %1587 = vmatpush.xpose.msra.mxu0 0.0
        %1588 = vmatpush.xpose.msra.mxu0 0.0
        %1589 = vmatpush.xpose.msra.mxu0 0.0
        %1590 = vmatpush.xpose.msra.mxu0 0.0
        %1591 = vmatpush.xpose.msra.mxu0 0.0
        %1592 = vmatpush.xpose.msra.mxu0 0.0
        %1593 = vmatpush.xpose.msra.mxu0 0.0
        %1594 = vmatpush.xpose.msra.mxu0 0.0
        %1595 = vmatpush.xpose.msra.mxu0 0.0
        %1596 = vmatpush.xpose.msra.mxu0 0.0
        %1597 = vmatpush.xpose.msra.mxu0 %v1581
        %1598 = vmatpush.xpose.msra.mxu0 %v1578
        %1599 = vmatmul.f32.gmra.mxu0 %v1575
        %v1600 = vpop.f32.mrf.mxu0
        %v1601 = vadd.f32 0.0, %v1600
        %1602 = vdwg.mxu0
        %1603 = vxpose.xlu0.b32.start [1/16] %v1514, 128
        %1604 = vxpose.xlu0.b32.cont [2/16] %v1543, 128
        %1605 = vxpose.xlu0.b32.cont [3/16] %v1572, 128
        %1606 = vxpose.xlu0.b32.cont [4/16] %v1601, 128
        %1607 = vxpose.xlu0.b32.cont [5/16] 0.0, 128
        %1608 = vxpose.xlu0.b32.cont [6/16] 0.0, 128
        %1609 = vxpose.xlu0.b32.cont [7/16] 0.0, 128
        %1610 = vxpose.xlu0.b32.cont [8/16] 0.0, 128
        %1611 = vxpose.xlu0.b32.cont [9/16] 0.0, 128
        %1612 = vxpose.xlu0.b32.cont [10/16] 0.0, 128
        %1613 = vxpose.xlu0.b32.cont [11/16] 0.0, 128
        %1614 = vxpose.xlu0.b32.cont [12/16] 0.0, 128
        %1615 = vxpose.xlu0.b32.cont [13/16] 0.0, 128
        %1616 = vxpose.xlu0.b32.cont [14/16] 0.0, 128
        %1617 = vxpose.xlu0.b32.cont [15/16] 0.0, 128
        %1618 = vxpose.xlu0.b32.end [16/16] 0.0, 128
        %v1619 = vpop.trf.xlu0
        %v1620 = vpop.trf.xlu0
        %v1621 = vpop.trf.xlu0
        %v1622 = vpop.trf.xlu0
        %v1623 = vpop.trf.xlu0
        %v1624 = vpop.trf.xlu0
        %v1625 = vpop.trf.xlu0
        %v1626 = vpop.trf.xlu0
        %v1627 = vpop.trf.xlu0
        %v1628 = vpop.trf.xlu0
        %v1629 = vpop.trf.xlu0
        %v1630 = vpop.trf.xlu0
        %v1631 = vpop.trf.xlu0
        %v1632 = vpop.trf.xlu0
        %v1633 = vpop.trf.xlu0
        %v1634 = vpop.trf.xlu0
        %v1635 = vld [vmem:[%s640] sm:$0xff]
        %v1636 = vld [vmem:[%s640 + $0x8] sm:$0xff]
        %v1637 = vld [vmem:[%s640 + $0x10] sm:$0xff]
        %v1638 = vld [vmem:[%s640 + $0x18] sm:$0xff]
        %v1639 = vld [vmem:[%s643] sm:$0x1]
        %v1641 = vperm.slane %v1639, 0
        %v1644 = vsel %vm675, %v1619, 0
        %v1647 = vsel %vm675, %v1620, 0
        %1649 = vmatpush.msra.mxu0 0.0
        %1650 = vmatpush.msra.mxu0 0.0
        %1651 = vmatpush.msra.mxu0 0.0
        %1652 = vmatpush.msra.mxu0 0.0
        %1653 = vmatpush.msra.mxu0 0.0
        %1654 = vmatpush.msra.mxu0 0.0
        %1655 = vmatpush.msra.mxu0 0.0
        %1656 = vmatpush.msra.mxu0 0.0
        %1657 = vmatpush.msra.mxu0 0.0
        %1658 = vmatpush.msra.mxu0 0.0
        %1659 = vmatpush.msra.mxu0 0.0
        %1660 = vmatpush.msra.mxu0 0.0
        %1661 = vmatpush.msra.mxu0 %v1638
        %1662 = vmatpush.msra.mxu0 %v1637
        %1663 = vmatpush.msra.mxu0 %v1636
        %1664 = vmatpush.msra.mxu0 %v1635
        %1665 = vmatmul.f32.gmra.mxu0 %v1644
        %v1666 = vpop.f32.mrf.mxu0
        %v1667 = vadd.f32 %v1641, %v1666
        %1668 = vmatmul.f32.gmra.mxu0 %v1647
        %v1669 = vpop.f32.mrf.mxu0
        %v1670 = vadd.f32 %v1641, %v1669
        %1671 = vdwg.mxu0
        %v1672 = vadd.f32 %v671, %v1667
        %v1673 = vadd.f32 %v672, %v1670
        %v1674 = vsel %vm675, %v1672, 0.0
        %1675 = vadd.xlane.f32.xlu0 %v1674
        %v1676 = vpop.xlane.xlu0 %1675
        %v1677 = vsel %vm675, %v1673, 0.0
        %1678 = vadd.xlane.f32.xlu0 %v1677
        %v1679 = vpop.xlane.xlu0 %1678
        %v1680 = vmul.f32 %v1676, %v688
        %v1681 = vmul.f32 %v1679, %v688
        %v1682 = vsub.f32 %v1672, %v1680
        %v1683 = vsub.f32 %v1673, %v1681
        %v1684 = vmul.f32 %v1682, %v1682
        %v1685 = vmul.f32 %v1683, %v1683
        %v1686 = vsel %vm675, %v1684, 0.0
        %1687 = vadd.xlane.f32.xlu0 %v1686
        %v1688 = vpop.xlane.xlu0 %1687
        %v1689 = vsel %vm675, %v1685, 0.0
        %1690 = vadd.xlane.f32.xlu0 %v1689
        %v1691 = vpop.xlane.xlu0 %1690
        %v1692 = vmul.f32 %v1688, 0.032258064
        %v1693 = vmul.f32 %v1691, 0.032258064
        %v1694 = vperm.slane %v673, 1
        %v1695 = vmul.f32 %v1694, %v1682
        %v1696 = vmul.f32 %v1694, %v1683
        %v1697 = vrsqrt.pop %v1692
        %v1698 = vmul.f32 %v1697, %v1692
        %v1699 = vmul.f32 %v1698, %v1697
        %v1700 = vmul.f32 0.5, %v1699
        %v1701 = vsub.f32 1.5, %v1700
        %v1702 = vmul.f32 %v1697, %v1701
        %v1703 = vmul.f32 %v1692, %v1702
        %vm1704 = vcmp.eq.f32.partialorder %v1692, inf
        %v1705 = vsel %vm1704, %v1692, %v1703
        %vm1706 = vcmp.eq.f32.partialorder %v1692, 0.0
        %v1707 = vand.u32 %v1692, 2147483648
        %v1708 = vsel %vm1706, %v1707, %v1705
        %v1709 = vrsqrt.pop %v1693
        %v1710 = vmul.f32 %v1709, %v1693
        %v1711 = vmul.f32 %v1710, %v1709
        %v1712 = vmul.f32 0.5, %v1711
        %v1713 = vsub.f32 1.5, %v1712
        %v1714 = vmul.f32 %v1709, %v1713
        %v1715 = vmul.f32 %v1693, %v1714
        %vm1716 = vcmp.eq.f32.partialorder %v1693, inf
        %v1717 = vsel %vm1716, %v1693, %v1715
        %vm1718 = vcmp.eq.f32.partialorder %v1693, 0.0
        %v1719 = vand.u32 %v1693, 2147483648
        %v1720 = vsel %vm1718, %v1719, %v1717
        %v1721 = vadd.f32 %v1708, 1e-06
        %v1722 = vadd.f32 %v1720, 1e-06
        %v1723 = vrcp.pop %v1721
        %v1724 = vmul.f32 %v1721, %v1723
        %v1725 = vsub.f32 1.0, %v1724
        %v1726 = vmul.f32 %v1723, %v1725
        %v1727 = vadd.f32 %v1723, %v1726
        %vm1728 = vweird.f32 %v1721
        %vm1729 = vweird.f32 %v1723
        %vm1730 = vmor %vm1728, %vm1729
        %v1731 = vsel %vm1730, %v1723, %v1727
        %v1732 = vand.u32 2147483647, %v1721
        %vm1733 = vcmp.eq.f32.partialorder %v1732, 8.507059e+37
        %v1734 = vand.u32 %v1721, 2147483648
        %v1735 = vor.u32 1.1754944e-38, %v1734
        %v1736 = vsel %vm1733, %v1735, %v1731
        %v1737 = vmul.f32 %v1695, %v1736
        %v1738 = vrcp.pop %v1722
        %v1739 = vmul.f32 %v1722, %v1738
        %v1740 = vsub.f32 1.0, %v1739
        %v1741 = vmul.f32 %v1738, %v1740
        %v1742 = vadd.f32 %v1738, %v1741
        %vm1743 = vweird.f32 %v1722
        %vm1744 = vweird.f32 %v1738
        %vm1745 = vmor %vm1743, %vm1744
        %v1746 = vsel %vm1745, %v1738, %v1742
        %v1747 = vand.u32 2147483647, %v1722
        %vm1748 = vcmp.eq.f32.partialorder %v1747, 8.507059e+37
        %v1749 = vand.u32 %v1722, 2147483648
        %v1750 = vor.u32 1.1754944e-38, %v1749
        %v1751 = vsel %vm1748, %v1750, %v1746
        %v1752 = vmul.f32 %v1696, %v1751
        %v1753 = vperm.slane %v674, 1
        %v1754 = vadd.f32 %v1737, %v1753
        %v1755 = vadd.f32 %v1752, %v1753
        %v1756 = vpack.c.bf16 %v1755, %v1754
        %v1757 = vld [vmem:[%s648] sm:$0xff]
        %v1758 = vld [vmem:[%s648 + $0x8] sm:$0xff]
        %v1759 = vld [vmem:[%s648 + $0x10] sm:$0xff]
        %v1760 = vld [vmem:[%s648 + $0x18] sm:$0xff]
        %v1761 = vld [vmem:[%s648 + $0x20] sm:$0xff]
        %v1762 = vld [vmem:[%s648 + $0x28] sm:$0xff]
        %v1763 = vld [vmem:[%s648 + $0x30] sm:$0xff]
        %v1764 = vld [vmem:[%s648 + $0x38] sm:$0xff]
        %v1765 = vld [vmem:[%s648 + $0x40] sm:$0xff]
        %v1766 = vld [vmem:[%s648 + $0x48] sm:$0xff]
        %v1767 = vld [vmem:[%s648 + $0x50] sm:$0xff]
        %v1768 = vld [vmem:[%s648 + $0x58] sm:$0xff]
        %v1769 = vld [vmem:[%s648 + $0x60] sm:$0xff]
        %v1770 = vld [vmem:[%s648 + $0x68] sm:$0xff]
        %v1771 = vld [vmem:[%s648 + $0x70] sm:$0xff]
        %v1772 = vld [vmem:[%s648 + $0x78] sm:$0xff]
        %v1773 = vld [vmem:[%s648 + $0x80] sm:$0xff]
        %v1774 = vld [vmem:[%s648 + $0x88] sm:$0xff]
        %v1775 = vld [vmem:[%s648 + $0x90] sm:$0xff]
        %v1776 = vld [vmem:[%s648 + $0x98] sm:$0xff]
        %v1777 = vld [vmem:[%s648 + $0xa0] sm:$0xff]
        %v1778 = vld [vmem:[%s648 + $0xa8] sm:$0xff]
        %v1779 = vld [vmem:[%s648 + $0xb0] sm:$0xff]
        %v1780 = vld [vmem:[%s648 + $0xb8] sm:$0xff]
        %v1781 = vld [vmem:[%s648 + $0xc0] sm:$0xff]
        %v1782 = vld [vmem:[%s648 + $0xc8] sm:$0xff]
        %v1783 = vld [vmem:[%s648 + $0xd0] sm:$0xff]
        %v1784 = vld [vmem:[%s648 + $0xd8] sm:$0xff]
        %v1785 = vld [vmem:[%s648 + $0xe0] sm:$0xff]
        %v1786 = vld [vmem:[%s648 + $0xe8] sm:$0xff]
        %v1787 = vld [vmem:[%s648 + $0xf0] sm:$0xff]
        %v1788 = vld [vmem:[%s648 + $0xf8] sm:$0xff]
        %v1789 = vld [vmem:[%s652] sm:$0xff]
        %v1790 = vld [vmem:[%s652 + $0x8] sm:$0xff]
        %v1793 = vperm.slane %v1789, 0
        %v1794 = vperm.slane %v1789, 1
        %v1795 = vperm.slane %v1789, 2
        %v1796 = vperm.slane %v1789, 3
        %v1797 = vperm.slane %v1789, 4
        %v1798 = vperm.slane %v1789, 5
        %v1799 = vperm.slane %v1789, 6
        %v1800 = vperm.slane %v1789, 7
        %v1801 = vperm.slane %v1790, 0
        %v1802 = vperm.slane %v1790, 1
        %v1803 = vperm.slane %v1790, 2
        %v1804 = vperm.slane %v1790, 3
        %v1805 = vperm.slane %v1790, 4
        %v1806 = vperm.slane %v1790, 5
        %v1807 = vperm.slane %v1790, 6
        %v1808 = vperm.slane %v1790, 7
        %v1857 = vunpack.c.l.b16 %v1757
        %v1858 = vunpack.c.h.b16 %v1757
        %v1859 = vunpack.c.l.b16 %v1758
        %v1860 = vunpack.c.h.b16 %v1758
        %v1861 = vunpack.c.l.b16 %v1759
        %v1862 = vunpack.c.h.b16 %v1759
        %v1863 = vunpack.c.l.b16 %v1760
        %v1864 = vunpack.c.h.b16 %v1760
        %v1865 = vunpack.c.l.b16 %v1761
        %v1866 = vunpack.c.h.b16 %v1761
        %v1867 = vunpack.c.l.b16 %v1762
        %v1868 = vunpack.c.h.b16 %v1762
        %v1869 = vunpack.c.l.b16 %v1763
        %v1870 = vunpack.c.h.b16 %v1763
        %v1871 = vunpack.c.l.b16 %v1764
        %v1872 = vunpack.c.h.b16 %v1764
        %v1873 = vunpack.c.l.b16 %v1765
        %v1874 = vunpack.c.h.b16 %v1765
        %v1875 = vunpack.c.l.b16 %v1766
        %v1876 = vunpack.c.h.b16 %v1766
        %v1877 = vunpack.c.l.b16 %v1767
        %v1878 = vunpack.c.h.b16 %v1767
        %v1879 = vunpack.c.l.b16 %v1768
        %v1880 = vunpack.c.h.b16 %v1768
        %v1881 = vunpack.c.l.b16 %v1769
        %v1882 = vunpack.c.h.b16 %v1769
        %v1883 = vunpack.c.l.b16 %v1770
        %v1884 = vunpack.c.h.b16 %v1770
        %v1885 = vunpack.c.l.b16 %v1771
        %v1886 = vunpack.c.h.b16 %v1771
        %v1887 = vunpack.c.l.b16 %v1772
        %v1888 = vunpack.c.h.b16 %v1772
        %v1889 = vunpack.c.l.b16 %v1773
        %v1890 = vunpack.c.h.b16 %v1773
        %v1891 = vunpack.c.l.b16 %v1774
        %v1892 = vunpack.c.h.b16 %v1774
        %v1893 = vunpack.c.l.b16 %v1775
        %v1894 = vunpack.c.h.b16 %v1775
        %v1895 = vunpack.c.l.b16 %v1776
        %v1896 = vunpack.c.h.b16 %v1776
        %v1897 = vunpack.c.l.b16 %v1777
        %v1898 = vunpack.c.h.b16 %v1777
        %v1899 = vunpack.c.l.b16 %v1778
        %v1900 = vunpack.c.h.b16 %v1778
        %v1901 = vunpack.c.l.b16 %v1779
        %v1902 = vunpack.c.h.b16 %v1779
        %v1903 = vunpack.c.l.b16 %v1780
        %v1904 = vunpack.c.h.b16 %v1780
        %v1905 = vunpack.c.l.b16 %v1781
        %v1906 = vunpack.c.h.b16 %v1781
        %v1907 = vunpack.c.l.b16 %v1782
        %v1908 = vunpack.c.h.b16 %v1782
        %v1909 = vunpack.c.l.b16 %v1783
        %v1910 = vunpack.c.h.b16 %v1783
        %v1911 = vunpack.c.l.b16 %v1784
        %v1912 = vunpack.c.h.b16 %v1784
        %v1913 = vunpack.c.l.b16 %v1785
        %v1914 = vunpack.c.h.b16 %v1785
        %v1915 = vunpack.c.l.b16 %v1786
        %v1916 = vunpack.c.h.b16 %v1786
        %v1917 = vunpack.c.l.b16 %v1787
        %v1918 = vunpack.c.h.b16 %v1787
        %v1919 = vunpack.c.l.b16 %v1788
        %v1920 = vunpack.c.h.b16 %v1788
        %v1921 = vpack.c.b16 %v1873, %v1857
        %v1922 = vpack.c.b16 %v1874, %v1858
        %v1923 = vpack.c.b16 %v1875, %v1859
        %v1924 = vpack.c.b16 %v1876, %v1860
        %v1925 = vpack.c.b16 %v1877, %v1861
        %v1926 = vpack.c.b16 %v1878, %v1862
        %v1927 = vpack.c.b16 %v1879, %v1863
        %v1928 = vpack.c.b16 %v1880, %v1864
        %v1929 = vpack.c.b16 %v1881, %v1865
        %v1930 = vpack.c.b16 %v1882, %v1866
        %v1931 = vpack.c.b16 %v1883, %v1867
        %v1932 = vpack.c.b16 %v1884, %v1868
        %v1933 = vpack.c.b16 %v1885, %v1869
        %v1934 = vpack.c.b16 %v1886, %v1870
        %v1935 = vpack.c.b16 %v1887, %v1871
        %v1936 = vpack.c.b16 %v1888, %v1872
        %v1937 = vpack.c.b16 %v1905, %v1889
        %v1938 = vpack.c.b16 %v1906, %v1890
        %v1939 = vpack.c.b16 %v1907, %v1891
        %v1940 = vpack.c.b16 %v1908, %v1892
        %v1941 = vpack.c.b16 %v1909, %v1893
        %v1942 = vpack.c.b16 %v1910, %v1894
        %v1943 = vpack.c.b16 %v1911, %v1895
        %v1944 = vpack.c.b16 %v1912, %v1896
        %v1945 = vpack.c.b16 %v1913, %v1897
        %v1946 = vpack.c.b16 %v1914, %v1898
        %v1947 = vpack.c.b16 %v1915, %v1899
        %v1948 = vpack.c.b16 %v1916, %v1900
        %v1949 = vpack.c.b16 %v1917, %v1901
        %v1950 = vpack.c.b16 %v1918, %v1902
        %v1951 = vpack.c.b16 %v1919, %v1903
        %v1952 = vpack.c.b16 %v1920, %v1904
        %v1986 = vsel %vm675, %v1756, 0
        %1988 = vmatpush.bf16.msra.mxu0 0
        %1989 = vmatpush.bf16.msra.mxu0 0
        %1990 = vmatpush.bf16.msra.mxu0 0
        %1991 = vmatpush.bf16.msra.mxu0 0
        %1992 = vmatpush.bf16.msra.mxu0 0
        %1993 = vmatpush.bf16.msra.mxu0 0
        %1994 = vmatpush.bf16.msra.mxu0 %v1937
        %1995 = vmatpush.bf16.msra.mxu0 %v1921
        %1996 = vmatmul.bf16.gmra.mxu0 %v1986
        %v1997 = vpop.f32.mrf.mxu0
        %v1998 = vadd.f32 %v1793, %v1997
        %v1999 = vpop.f32.mrf.mxu0
        %v2000 = vadd.f32 %v1793, %v1999
        %2001 = vdwg.mxu0
        %2002 = vmatpush.bf16.msra.mxu0 0
        %2003 = vmatpush.bf16.msra.mxu0 0
        %2004 = vmatpush.bf16.msra.mxu0 0
        %2005 = vmatpush.bf16.msra.mxu0 0
        %2006 = vmatpush.bf16.msra.mxu0 0
        %2007 = vmatpush.bf16.msra.mxu0 0
        %2008 = vmatpush.bf16.msra.mxu0 %v1938
        %2009 = vmatpush.bf16.msra.mxu0 %v1922
        %2010 = vmatmul.bf16.gmra.mxu0 %v1986
        %v2011 = vpop.f32.mrf.mxu0
        %v2012 = vadd.f32 %v1794, %v2011
        %v2013 = vpop.f32.mrf.mxu0
        %v2014 = vadd.f32 %v1794, %v2013
        %2015 = vdwg.mxu0
        %2016 = vmatpush.bf16.msra.mxu0 0
        %2017 = vmatpush.bf16.msra.mxu0 0
        %2018 = vmatpush.bf16.msra.mxu0 0
        %2019 = vmatpush.bf16.msra.mxu0 0
        %2020 = vmatpush.bf16.msra.mxu0 0
        %2021 = vmatpush.bf16.msra.mxu0 0
        %2022 = vmatpush.bf16.msra.mxu0 %v1939
        %2023 = vmatpush.bf16.msra.mxu0 %v1923
        %2024 = vmatmul.bf16.gmra.mxu0 %v1986
        %v2025 = vpop.f32.mrf.mxu0
        %v2026 = vadd.f32 %v1795, %v2025
        %v2027 = vpop.f32.mrf.mxu0
        %v2028 = vadd.f32 %v1795, %v2027
        %2029 = vdwg.mxu0
        %2030 = vmatpush.bf16.msra.mxu0 0
        %2031 = vmatpush.bf16.msra.mxu0 0
        %2032 = vmatpush.bf16.msra.mxu0 0
        %2033 = vmatpush.bf16.msra.mxu0 0
        %2034 = vmatpush.bf16.msra.mxu0 0
        %2035 = vmatpush.bf16.msra.mxu0 0
        %2036 = vmatpush.bf16.msra.mxu0 %v1940
        %2037 = vmatpush.bf16.msra.mxu0 %v1924
        %2038 = vmatmul.bf16.gmra.mxu0 %v1986
        %v2039 = vpop.f32.mrf.mxu0
        %v2040 = vadd.f32 %v1796, %v2039
        %v2041 = vpop.f32.mrf.mxu0
        %v2042 = vadd.f32 %v1796, %v2041
        %2043 = vdwg.mxu0
        %2044 = vmatpush.bf16.msra.mxu0 0
        %2045 = vmatpush.bf16.msra.mxu0 0
        %2046 = vmatpush.bf16.msra.mxu0 0
        %2047 = vmatpush.bf16.msra.mxu0 0
        %2048 = vmatpush.bf16.msra.mxu0 0
        %2049 = vmatpush.bf16.msra.mxu0 0
        %2050 = vmatpush.bf16.msra.mxu0 %v1941
        %2051 = vmatpush.bf16.msra.mxu0 %v1925
        %2052 = vmatmul.bf16.gmra.mxu0 %v1986
        %v2053 = vpop.f32.mrf.mxu0
        %v2054 = vadd.f32 %v1797, %v2053
        %v2055 = vpop.f32.mrf.mxu0
        %v2056 = vadd.f32 %v1797, %v2055
        %2057 = vdwg.mxu0
        %2058 = vmatpush.bf16.msra.mxu0 0
        %2059 = vmatpush.bf16.msra.mxu0 0
        %2060 = vmatpush.bf16.msra.mxu0 0
        %2061 = vmatpush.bf16.msra.mxu0 0
        %2062 = vmatpush.bf16.msra.mxu0 0
        %2063 = vmatpush.bf16.msra.mxu0 0
        %2064 = vmatpush.bf16.msra.mxu0 %v1942
        %2065 = vmatpush.bf16.msra.mxu0 %v1926
        %2066 = vmatmul.bf16.gmra.mxu0 %v1986
        %v2067 = vpop.f32.mrf.mxu0
        %v2068 = vadd.f32 %v1798, %v2067
        %v2069 = vpop.f32.mrf.mxu0
        %v2070 = vadd.f32 %v1798, %v2069
        %2071 = vdwg.mxu0
        %2072 = vmatpush.bf16.msra.mxu0 0
        %2073 = vmatpush.bf16.msra.mxu0 0
        %2074 = vmatpush.bf16.msra.mxu0 0
        %2075 = vmatpush.bf16.msra.mxu0 0
        %2076 = vmatpush.bf16.msra.mxu0 0
        %2077 = vmatpush.bf16.msra.mxu0 0
        %2078 = vmatpush.bf16.msra.mxu0 %v1943
        %2079 = vmatpush.bf16.msra.mxu0 %v1927
        %2080 = vmatmul.bf16.gmra.mxu0 %v1986
        %v2081 = vpop.f32.mrf.mxu0
        %v2082 = vadd.f32 %v1799, %v2081
        %v2083 = vpop.f32.mrf.mxu0
        %v2084 = vadd.f32 %v1799, %v2083
        %2085 = vdwg.mxu0
        %2086 = vmatpush.bf16.msra.mxu0 0
        %2087 = vmatpush.bf16.msra.mxu0 0
        %2088 = vmatpush.bf16.msra.mxu0 0
        %2089 = vmatpush.bf16.msra.mxu0 0
        %2090 = vmatpush.bf16.msra.mxu0 0
        %2091 = vmatpush.bf16.msra.mxu0 0
        %2092 = vmatpush.bf16.msra.mxu0 %v1944
        %2093 = vmatpush.bf16.msra.mxu0 %v1928
        %2094 = vmatmul.bf16.gmra.mxu0 %v1986
        %v2095 = vpop.f32.mrf.mxu0
        %v2096 = vadd.f32 %v1800, %v2095
        %v2097 = vpop.f32.mrf.mxu0
        %v2098 = vadd.f32 %v1800, %v2097
        %2099 = vdwg.mxu0
        %2100 = vmatpush.bf16.msra.mxu0 0
        %2101 = vmatpush.bf16.msra.mxu0 0
        %2102 = vmatpush.bf16.msra.mxu0 0
        %2103 = vmatpush.bf16.msra.mxu0 0
        %2104 = vmatpush.bf16.msra.mxu0 0
        %2105 = vmatpush.bf16.msra.mxu0 0
        %2106 = vmatpush.bf16.msra.mxu0 %v1945
        %2107 = vmatpush.bf16.msra.mxu0 %v1929
        %2108 = vmatmul.bf16.gmra.mxu0 %v1986
        %v2109 = vpop.f32.mrf.mxu0
        %v2110 = vadd.f32 %v1801, %v2109
        %v2111 = vpop.f32.mrf.mxu0
        %v2112 = vadd.f32 %v1801, %v2111
        %2113 = vdwg.mxu0
        %2114 = vmatpush.bf16.msra.mxu0 0
        %2115 = vmatpush.bf16.msra.mxu0 0
        %2116 = vmatpush.bf16.msra.mxu0 0
        %2117 = vmatpush.bf16.msra.mxu0 0
        %2118 = vmatpush.bf16.msra.mxu0 0
        %2119 = vmatpush.bf16.msra.mxu0 0
        %2120 = vmatpush.bf16.msra.mxu0 %v1946
        %2121 = vmatpush.bf16.msra.mxu0 %v1930
        %2122 = vmatmul.bf16.gmra.mxu0 %v1986
        %v2123 = vpop.f32.mrf.mxu0
        %v2124 = vadd.f32 %v1802, %v2123
        %v2125 = vpop.f32.mrf.mxu0
        %v2126 = vadd.f32 %v1802, %v2125
        %2127 = vdwg.mxu0
        %2128 = vmatpush.bf16.msra.mxu0 0
        %2129 = vmatpush.bf16.msra.mxu0 0
        %2130 = vmatpush.bf16.msra.mxu0 0
        %2131 = vmatpush.bf16.msra.mxu0 0
        %2132 = vmatpush.bf16.msra.mxu0 0
        %2133 = vmatpush.bf16.msra.mxu0 0
        %2134 = vmatpush.bf16.msra.mxu0 %v1947
        %2135 = vmatpush.bf16.msra.mxu0 %v1931
        %2136 = vmatmul.bf16.gmra.mxu0 %v1986
        %v2137 = vpop.f32.mrf.mxu0
        %v2138 = vadd.f32 %v1803, %v2137
        %v2139 = vpop.f32.mrf.mxu0
        %v2140 = vadd.f32 %v1803, %v2139
        %2141 = vdwg.mxu0
        %2142 = vmatpush.bf16.msra.mxu0 0
        %2143 = vmatpush.bf16.msra.mxu0 0
        %2144 = vmatpush.bf16.msra.mxu0 0
        %2145 = vmatpush.bf16.msra.mxu0 0
        %2146 = vmatpush.bf16.msra.mxu0 0
        %2147 = vmatpush.bf16.msra.mxu0 0
        %2148 = vmatpush.bf16.msra.mxu0 %v1948
        %2149 = vmatpush.bf16.msra.mxu0 %v1932
        %2150 = vmatmul.bf16.gmra.mxu0 %v1986
        %v2151 = vpop.f32.mrf.mxu0
        %v2152 = vadd.f32 %v1804, %v2151
        %v2153 = vpop.f32.mrf.mxu0
        %v2154 = vadd.f32 %v1804, %v2153
        %2155 = vdwg.mxu0
        %2156 = vmatpush.bf16.msra.mxu0 0
        %2157 = vmatpush.bf16.msra.mxu0 0
        %2158 = vmatpush.bf16.msra.mxu0 0
        %2159 = vmatpush.bf16.msra.mxu0 0
        %2160 = vmatpush.bf16.msra.mxu0 0
        %2161 = vmatpush.bf16.msra.mxu0 0
        %2162 = vmatpush.bf16.msra.mxu0 %v1949
        %2163 = vmatpush.bf16.msra.mxu0 %v1933
        %2164 = vmatmul.bf16.gmra.mxu0 %v1986
        %v2165 = vpop.f32.mrf.mxu0
        %v2166 = vadd.f32 %v1805, %v2165
        %v2167 = vpop.f32.mrf.mxu0
        %v2168 = vadd.f32 %v1805, %v2167
        %2169 = vdwg.mxu0
        %2170 = vmatpush.bf16.msra.mxu0 0
        %2171 = vmatpush.bf16.msra.mxu0 0
        %2172 = vmatpush.bf16.msra.mxu0 0
        %2173 = vmatpush.bf16.msra.mxu0 0
        %2174 = vmatpush.bf16.msra.mxu0 0
        %2175 = vmatpush.bf16.msra.mxu0 0
        %2176 = vmatpush.bf16.msra.mxu0 %v1950
        %2177 = vmatpush.bf16.msra.mxu0 %v1934
        %2178 = vmatmul.bf16.gmra.mxu0 %v1986
        %v2179 = vpop.f32.mrf.mxu0
        %v2180 = vadd.f32 %v1806, %v2179
        %v2181 = vpop.f32.mrf.mxu0
        %v2182 = vadd.f32 %v1806, %v2181
        %2183 = vdwg.mxu0
        %2184 = vmatpush.bf16.msra.mxu0 0
        %2185 = vmatpush.bf16.msra.mxu0 0
        %2186 = vmatpush.bf16.msra.mxu0 0
        %2187 = vmatpush.bf16.msra.mxu0 0
        %2188 = vmatpush.bf16.msra.mxu0 0
        %2189 = vmatpush.bf16.msra.mxu0 0
        %2190 = vmatpush.bf16.msra.mxu0 %v1951
        %2191 = vmatpush.bf16.msra.mxu0 %v1935
        %2192 = vmatmul.bf16.gmra.mxu0 %v1986
        %v2193 = vpop.f32.mrf.mxu0
        %v2194 = vadd.f32 %v1807, %v2193
        %v2195 = vpop.f32.mrf.mxu0
        %v2196 = vadd.f32 %v1807, %v2195
        %2197 = vdwg.mxu0
        %2198 = vmatpush.bf16.msra.mxu0 0
        %2199 = vmatpush.bf16.msra.mxu0 0
        %2200 = vmatpush.bf16.msra.mxu0 0
        %2201 = vmatpush.bf16.msra.mxu0 0
        %2202 = vmatpush.bf16.msra.mxu0 0
        %2203 = vmatpush.bf16.msra.mxu0 0
        %2204 = vmatpush.bf16.msra.mxu0 %v1952
        %2205 = vmatpush.bf16.msra.mxu0 %v1936
        %2206 = vmatmul.bf16.gmra.mxu0 %v1986
        %v2207 = vpop.f32.mrf.mxu0
        %v2208 = vadd.f32 %v1808, %v2207
        %v2209 = vpop.f32.mrf.mxu0
        %v2210 = vadd.f32 %v1808, %v2209
        %2211 = vdwg.mxu0
        %v2212 = vmax.f32 %v1998, 0.0
        %v2213 = vmax.f32 %v2012, 0.0
        %v2214 = vmax.f32 %v2026, 0.0
        %v2215 = vmax.f32 %v2040, 0.0
        %v2216 = vmax.f32 %v2054, 0.0
        %v2217 = vmax.f32 %v2068, 0.0
        %v2218 = vmax.f32 %v2082, 0.0
        %v2219 = vmax.f32 %v2096, 0.0
        %v2220 = vmax.f32 %v2110, 0.0
        %v2221 = vmax.f32 %v2124, 0.0
        %v2222 = vmax.f32 %v2138, 0.0
        %v2223 = vmax.f32 %v2152, 0.0
        %v2224 = vmax.f32 %v2166, 0.0
        %v2225 = vmax.f32 %v2180, 0.0
        %v2226 = vmax.f32 %v2194, 0.0
        %v2227 = vmax.f32 %v2208, 0.0
        %v2228 = vmax.f32 %v2000, 0.0
        %v2229 = vmax.f32 %v2014, 0.0
        %v2230 = vmax.f32 %v2028, 0.0
        %v2231 = vmax.f32 %v2042, 0.0
        %v2232 = vmax.f32 %v2056, 0.0
        %v2233 = vmax.f32 %v2070, 0.0
        %v2234 = vmax.f32 %v2084, 0.0
        %v2235 = vmax.f32 %v2098, 0.0
        %v2236 = vmax.f32 %v2112, 0.0
        %v2237 = vmax.f32 %v2126, 0.0
        %v2238 = vmax.f32 %v2140, 0.0
        %v2239 = vmax.f32 %v2154, 0.0
        %v2240 = vmax.f32 %v2168, 0.0
        %v2241 = vmax.f32 %v2182, 0.0
        %v2242 = vmax.f32 %v2196, 0.0
        %v2243 = vmax.f32 %v2210, 0.0
        %v2244 = vpack.c.bf16 %v2228, %v2212
        %v2245 = vpack.c.bf16 %v2229, %v2213
        %v2246 = vpack.c.bf16 %v2230, %v2214
        %v2247 = vpack.c.bf16 %v2231, %v2215
        %v2248 = vpack.c.bf16 %v2232, %v2216
        %v2249 = vpack.c.bf16 %v2233, %v2217
        %v2250 = vpack.c.bf16 %v2234, %v2218
        %v2251 = vpack.c.bf16 %v2235, %v2219
        %v2252 = vpack.c.bf16 %v2236, %v2220
        %v2253 = vpack.c.bf16 %v2237, %v2221
        %v2254 = vpack.c.bf16 %v2238, %v2222
        %v2255 = vpack.c.bf16 %v2239, %v2223
        %v2256 = vpack.c.bf16 %v2240, %v2224
        %v2257 = vpack.c.bf16 %v2241, %v2225
        %v2258 = vpack.c.bf16 %v2242, %v2226
        %v2259 = vpack.c.bf16 %v2243, %v2227
        %v2260 = vld [vmem:[%s657] sm:$0xf]
        %v2261 = vld [vmem:[%s657 + $0x4] sm:$0xf]
        %v2262 = vld [vmem:[%s657 + $0x8] sm:$0xf]
        %v2263 = vld [vmem:[%s657 + $0xc] sm:$0xf]
        %v2264 = vld [vmem:[%s657 + $0x10] sm:$0xf]
        %v2265 = vld [vmem:[%s657 + $0x14] sm:$0xf]
        %v2266 = vld [vmem:[%s657 + $0x18] sm:$0xf]
        %v2267 = vld [vmem:[%s657 + $0x1c] sm:$0xf]
        %v2268 = vld [vmem:[%s657 + $0x20] sm:$0xf]
        %v2269 = vld [vmem:[%s657 + $0x24] sm:$0xf]
        %v2270 = vld [vmem:[%s657 + $0x28] sm:$0xf]
        %v2271 = vld [vmem:[%s657 + $0x2c] sm:$0xf]
        %v2272 = vld [vmem:[%s657 + $0x30] sm:$0xf]
        %v2273 = vld [vmem:[%s657 + $0x34] sm:$0xf]
        %v2274 = vld [vmem:[%s657 + $0x38] sm:$0xf]
        %v2275 = vld [vmem:[%s657 + $0x3c] sm:$0xf]
        %v2276 = vld [vmem:[%s657 + $0x40] sm:$0xf]
        %v2277 = vld [vmem:[%s657 + $0x44] sm:$0xf]
        %v2278 = vld [vmem:[%s657 + $0x48] sm:$0xf]
        %v2279 = vld [vmem:[%s657 + $0x4c] sm:$0xf]
        %v2280 = vld [vmem:[%s657 + $0x50] sm:$0xf]
        %v2281 = vld [vmem:[%s657 + $0x54] sm:$0xf]
        %v2282 = vld [vmem:[%s657 + $0x58] sm:$0xf]
        %v2283 = vld [vmem:[%s657 + $0x5c] sm:$0xf]
        %v2284 = vld [vmem:[%s657 + $0x60] sm:$0xf]
        %v2285 = vld [vmem:[%s657 + $0x64] sm:$0xf]
        %v2286 = vld [vmem:[%s657 + $0x68] sm:$0xf]
        %v2287 = vld [vmem:[%s657 + $0x6c] sm:$0xf]
        %v2288 = vld [vmem:[%s657 + $0x70] sm:$0xf]
        %v2289 = vld [vmem:[%s657 + $0x74] sm:$0xf]
        %v2290 = vld [vmem:[%s657 + $0x78] sm:$0xf]
        %v2291 = vld [vmem:[%s657 + $0x7c] sm:$0xf]
        %v2292 = vld [vmem:[%s657 + $0x80] sm:$0xf]
        %v2293 = vld [vmem:[%s657 + $0x84] sm:$0xf]
        %v2294 = vld [vmem:[%s657 + $0x88] sm:$0xf]
        %v2295 = vld [vmem:[%s657 + $0x8c] sm:$0xf]
        %v2296 = vld [vmem:[%s657 + $0x90] sm:$0xf]
        %v2297 = vld [vmem:[%s657 + $0x94] sm:$0xf]
        %v2298 = vld [vmem:[%s657 + $0x98] sm:$0xf]
        %v2299 = vld [vmem:[%s657 + $0x9c] sm:$0xf]
        %v2300 = vld [vmem:[%s657 + $0xa0] sm:$0xf]
        %v2301 = vld [vmem:[%s657 + $0xa4] sm:$0xf]
        %v2302 = vld [vmem:[%s657 + $0xa8] sm:$0xf]
        %v2303 = vld [vmem:[%s657 + $0xac] sm:$0xf]
        %v2304 = vld [vmem:[%s657 + $0xb0] sm:$0xf]
        %v2305 = vld [vmem:[%s657 + $0xb4] sm:$0xf]
        %v2306 = vld [vmem:[%s657 + $0xb8] sm:$0xf]
        %v2307 = vld [vmem:[%s657 + $0xbc] sm:$0xf]
        %v2308 = vld [vmem:[%s657 + $0xc0] sm:$0xf]
        %v2309 = vld [vmem:[%s657 + $0xc4] sm:$0xf]
        %v2310 = vld [vmem:[%s657 + $0xc8] sm:$0xf]
        %v2311 = vld [vmem:[%s657 + $0xcc] sm:$0xf]
        %v2312 = vld [vmem:[%s657 + $0xd0] sm:$0xf]
        %v2313 = vld [vmem:[%s657 + $0xd4] sm:$0xf]
        %v2314 = vld [vmem:[%s657 + $0xd8] sm:$0xf]
        %v2315 = vld [vmem:[%s657 + $0xdc] sm:$0xf]
        %v2316 = vld [vmem:[%s657 + $0xe0] sm:$0xf]
        %v2317 = vld [vmem:[%s657 + $0xe4] sm:$0xf]
        %v2318 = vld [vmem:[%s657 + $0xe8] sm:$0xf]
        %v2319 = vld [vmem:[%s657 + $0xec] sm:$0xf]
        %v2320 = vld [vmem:[%s657 + $0xf0] sm:$0xf]
        %v2321 = vld [vmem:[%s657 + $0xf4] sm:$0xf]
        %v2322 = vld [vmem:[%s657 + $0xf8] sm:$0xf]
        %v2323 = vld [vmem:[%s657 + $0xfc] sm:$0xf]
        %v2324 = vld [vmem:[%s657 + $0x100] sm:$0xf]
        %v2325 = vld [vmem:[%s657 + $0x104] sm:$0xf]
        %v2326 = vld [vmem:[%s657 + $0x108] sm:$0xf]
        %v2327 = vld [vmem:[%s657 + $0x10c] sm:$0xf]
        %v2328 = vld [vmem:[%s657 + $0x110] sm:$0xf]
        %v2329 = vld [vmem:[%s657 + $0x114] sm:$0xf]
        %v2330 = vld [vmem:[%s657 + $0x118] sm:$0xf]
        %v2331 = vld [vmem:[%s657 + $0x11c] sm:$0xf]
        %v2332 = vld [vmem:[%s657 + $0x120] sm:$0xf]
        %v2333 = vld [vmem:[%s657 + $0x124] sm:$0xf]
        %v2334 = vld [vmem:[%s657 + $0x128] sm:$0xf]
        %v2335 = vld [vmem:[%s657 + $0x12c] sm:$0xf]
        %v2336 = vld [vmem:[%s657 + $0x130] sm:$0xf]
        %v2337 = vld [vmem:[%s657 + $0x134] sm:$0xf]
        %v2338 = vld [vmem:[%s657 + $0x138] sm:$0xf]
        %v2339 = vld [vmem:[%s657 + $0x13c] sm:$0xf]
        %v2340 = vld [vmem:[%s657 + $0x140] sm:$0xf]
        %v2341 = vld [vmem:[%s657 + $0x144] sm:$0xf]
        %v2342 = vld [vmem:[%s657 + $0x148] sm:$0xf]
        %v2343 = vld [vmem:[%s657 + $0x14c] sm:$0xf]
        %v2344 = vld [vmem:[%s657 + $0x150] sm:$0xf]
        %v2345 = vld [vmem:[%s657 + $0x154] sm:$0xf]
        %v2346 = vld [vmem:[%s657 + $0x158] sm:$0xf]
        %v2347 = vld [vmem:[%s657 + $0x15c] sm:$0xf]
        %v2348 = vld [vmem:[%s657 + $0x160] sm:$0xf]
        %v2349 = vld [vmem:[%s657 + $0x164] sm:$0xf]
        %v2350 = vld [vmem:[%s657 + $0x168] sm:$0xf]
        %v2351 = vld [vmem:[%s657 + $0x16c] sm:$0xf]
        %v2352 = vld [vmem:[%s657 + $0x170] sm:$0xf]
        %v2353 = vld [vmem:[%s657 + $0x174] sm:$0xf]
        %v2354 = vld [vmem:[%s657 + $0x178] sm:$0xf]
        %v2355 = vld [vmem:[%s657 + $0x17c] sm:$0xf]
        %v2356 = vld [vmem:[%s657 + $0x180] sm:$0xf]
        %v2357 = vld [vmem:[%s657 + $0x184] sm:$0xf]
        %v2358 = vld [vmem:[%s657 + $0x188] sm:$0xf]
        %v2359 = vld [vmem:[%s657 + $0x18c] sm:$0xf]
        %v2360 = vld [vmem:[%s657 + $0x190] sm:$0xf]
        %v2361 = vld [vmem:[%s657 + $0x194] sm:$0xf]
        %v2362 = vld [vmem:[%s657 + $0x198] sm:$0xf]
        %v2363 = vld [vmem:[%s657 + $0x19c] sm:$0xf]
        %v2364 = vld [vmem:[%s657 + $0x1a0] sm:$0xf]
        %v2365 = vld [vmem:[%s657 + $0x1a4] sm:$0xf]
        %v2366 = vld [vmem:[%s657 + $0x1a8] sm:$0xf]
        %v2367 = vld [vmem:[%s657 + $0x1ac] sm:$0xf]
        %v2368 = vld [vmem:[%s657 + $0x1b0] sm:$0xf]
        %v2369 = vld [vmem:[%s657 + $0x1b4] sm:$0xf]
        %v2370 = vld [vmem:[%s657 + $0x1b8] sm:$0xf]
        %v2371 = vld [vmem:[%s657 + $0x1bc] sm:$0xf]
        %v2372 = vld [vmem:[%s657 + $0x1c0] sm:$0xf]
        %v2373 = vld [vmem:[%s657 + $0x1c4] sm:$0xf]
        %v2374 = vld [vmem:[%s657 + $0x1c8] sm:$0xf]
        %v2375 = vld [vmem:[%s657 + $0x1cc] sm:$0xf]
        %v2376 = vld [vmem:[%s657 + $0x1d0] sm:$0xf]
        %v2377 = vld [vmem:[%s657 + $0x1d4] sm:$0xf]
        %v2378 = vld [vmem:[%s657 + $0x1d8] sm:$0xf]
        %v2379 = vld [vmem:[%s657 + $0x1dc] sm:$0xf]
        %v2380 = vld [vmem:[%s657 + $0x1e0] sm:$0xf]
        %v2381 = vld [vmem:[%s657 + $0x1e4] sm:$0xf]
        %v2382 = vld [vmem:[%s657 + $0x1e8] sm:$0xf]
        %v2383 = vld [vmem:[%s657 + $0x1ec] sm:$0xf]
        %v2384 = vld [vmem:[%s657 + $0x1f0] sm:$0xf]
        %v2385 = vld [vmem:[%s657 + $0x1f4] sm:$0xf]
        %v2386 = vld [vmem:[%s657 + $0x1f8] sm:$0xf]
        %v2387 = vld [vmem:[%s657 + $0x1fc] sm:$0xf]
        %v2388 = vld [vmem:[%s657 + $0x200] sm:$0xf]
        %v2389 = vld [vmem:[%s657 + $0x204] sm:$0xf]
        %v2390 = vld [vmem:[%s657 + $0x208] sm:$0xf]
        %v2391 = vld [vmem:[%s657 + $0x20c] sm:$0xf]
        %v2392 = vld [vmem:[%s657 + $0x210] sm:$0xf]
        %v2393 = vld [vmem:[%s657 + $0x214] sm:$0xf]
        %v2394 = vld [vmem:[%s657 + $0x218] sm:$0xf]
        %v2395 = vld [vmem:[%s657 + $0x21c] sm:$0xf]
        %v2396 = vld [vmem:[%s657 + $0x220] sm:$0xf]
        %v2397 = vld [vmem:[%s657 + $0x224] sm:$0xf]
        %v2398 = vld [vmem:[%s657 + $0x228] sm:$0xf]
        %v2399 = vld [vmem:[%s657 + $0x22c] sm:$0xf]
        %v2400 = vld [vmem:[%s657 + $0x230] sm:$0xf]
        %v2401 = vld [vmem:[%s657 + $0x234] sm:$0xf]
        %v2402 = vld [vmem:[%s657 + $0x238] sm:$0xf]
        %v2403 = vld [vmem:[%s657 + $0x23c] sm:$0xf]
        %v2404 = vld [vmem:[%s657 + $0x240] sm:$0xf]
        %v2405 = vld [vmem:[%s657 + $0x244] sm:$0xf]
        %v2406 = vld [vmem:[%s657 + $0x248] sm:$0xf]
        %v2407 = vld [vmem:[%s657 + $0x24c] sm:$0xf]
        %v2408 = vld [vmem:[%s657 + $0x250] sm:$0xf]
        %v2409 = vld [vmem:[%s657 + $0x254] sm:$0xf]
        %v2410 = vld [vmem:[%s657 + $0x258] sm:$0xf]
        %v2411 = vld [vmem:[%s657 + $0x25c] sm:$0xf]
        %v2412 = vld [vmem:[%s657 + $0x260] sm:$0xf]
        %v2413 = vld [vmem:[%s657 + $0x264] sm:$0xf]
        %v2414 = vld [vmem:[%s657 + $0x268] sm:$0xf]
        %v2415 = vld [vmem:[%s657 + $0x26c] sm:$0xf]
        %v2416 = vld [vmem:[%s657 + $0x270] sm:$0xf]
        %v2417 = vld [vmem:[%s657 + $0x274] sm:$0xf]
        %v2418 = vld [vmem:[%s657 + $0x278] sm:$0xf]
        %v2419 = vld [vmem:[%s657 + $0x27c] sm:$0xf]
        %v2420 = vld [vmem:[%s657 + $0x280] sm:$0xf]
        %v2421 = vld [vmem:[%s657 + $0x284] sm:$0xf]
        %v2422 = vld [vmem:[%s657 + $0x288] sm:$0xf]
        %v2423 = vld [vmem:[%s657 + $0x28c] sm:$0xf]
        %v2424 = vld [vmem:[%s657 + $0x290] sm:$0xf]
        %v2425 = vld [vmem:[%s657 + $0x294] sm:$0xf]
        %v2426 = vld [vmem:[%s657 + $0x298] sm:$0xf]
        %v2427 = vld [vmem:[%s657 + $0x29c] sm:$0xf]
        %v2428 = vld [vmem:[%s657 + $0x2a0] sm:$0xf]
        %v2429 = vld [vmem:[%s657 + $0x2a4] sm:$0xf]
        %v2430 = vld [vmem:[%s657 + $0x2a8] sm:$0xf]
        %v2431 = vld [vmem:[%s657 + $0x2ac] sm:$0xf]
        %v2432 = vld [vmem:[%s657 + $0x2b0] sm:$0xf]
        %v2433 = vld [vmem:[%s657 + $0x2b4] sm:$0xf]
        %v2434 = vld [vmem:[%s657 + $0x2b8] sm:$0xf]
        %v2435 = vld [vmem:[%s657 + $0x2bc] sm:$0xf]
        %v2436 = vld [vmem:[%s657 + $0x2c0] sm:$0xf]
        %v2437 = vld [vmem:[%s657 + $0x2c4] sm:$0xf]
        %v2438 = vld [vmem:[%s657 + $0x2c8] sm:$0xf]
        %v2439 = vld [vmem:[%s657 + $0x2cc] sm:$0xf]
        %v2440 = vld [vmem:[%s657 + $0x2d0] sm:$0xf]
        %v2441 = vld [vmem:[%s657 + $0x2d4] sm:$0xf]
        %v2442 = vld [vmem:[%s657 + $0x2d8] sm:$0xf]
        %v2443 = vld [vmem:[%s657 + $0x2dc] sm:$0xf]
        %v2444 = vld [vmem:[%s657 + $0x2e0] sm:$0xf]
        %v2445 = vld [vmem:[%s657 + $0x2e4] sm:$0xf]
        %v2446 = vld [vmem:[%s657 + $0x2e8] sm:$0xf]
        %v2447 = vld [vmem:[%s657 + $0x2ec] sm:$0xf]
        %v2448 = vld [vmem:[%s657 + $0x2f0] sm:$0xf]
        %v2449 = vld [vmem:[%s657 + $0x2f4] sm:$0xf]
        %v2450 = vld [vmem:[%s657 + $0x2f8] sm:$0xf]
        %v2451 = vld [vmem:[%s657 + $0x2fc] sm:$0xf]
        %v2452 = vld [vmem:[%s657 + $0x300] sm:$0xf]
        %v2453 = vld [vmem:[%s657 + $0x304] sm:$0xf]
        %v2454 = vld [vmem:[%s657 + $0x308] sm:$0xf]
        %v2455 = vld [vmem:[%s657 + $0x30c] sm:$0xf]
        %v2456 = vld [vmem:[%s657 + $0x310] sm:$0xf]
        %v2457 = vld [vmem:[%s657 + $0x314] sm:$0xf]
        %v2458 = vld [vmem:[%s657 + $0x318] sm:$0xf]
        %v2459 = vld [vmem:[%s657 + $0x31c] sm:$0xf]
        %v2460 = vld [vmem:[%s657 + $0x320] sm:$0xf]
        %v2461 = vld [vmem:[%s657 + $0x324] sm:$0xf]
        %v2462 = vld [vmem:[%s657 + $0x328] sm:$0xf]
        %v2463 = vld [vmem:[%s657 + $0x32c] sm:$0xf]
        %v2464 = vld [vmem:[%s657 + $0x330] sm:$0xf]
        %v2465 = vld [vmem:[%s657 + $0x334] sm:$0xf]
        %v2466 = vld [vmem:[%s657 + $0x338] sm:$0xf]
        %v2467 = vld [vmem:[%s657 + $0x33c] sm:$0xf]
        %v2468 = vld [vmem:[%s657 + $0x340] sm:$0xf]
        %v2469 = vld [vmem:[%s657 + $0x344] sm:$0xf]
        %v2470 = vld [vmem:[%s657 + $0x348] sm:$0xf]
        %v2471 = vld [vmem:[%s657 + $0x34c] sm:$0xf]
        %v2472 = vld [vmem:[%s657 + $0x350] sm:$0xf]
        %v2473 = vld [vmem:[%s657 + $0x354] sm:$0xf]
        %v2474 = vld [vmem:[%s657 + $0x358] sm:$0xf]
        %v2475 = vld [vmem:[%s657 + $0x35c] sm:$0xf]
        %v2476 = vld [vmem:[%s657 + $0x360] sm:$0xf]
        %v2477 = vld [vmem:[%s657 + $0x364] sm:$0xf]
        %v2478 = vld [vmem:[%s657 + $0x368] sm:$0xf]
        %v2479 = vld [vmem:[%s657 + $0x36c] sm:$0xf]
        %v2480 = vld [vmem:[%s657 + $0x370] sm:$0xf]
        %v2481 = vld [vmem:[%s657 + $0x374] sm:$0xf]
        %v2482 = vld [vmem:[%s657 + $0x378] sm:$0xf]
        %v2483 = vld [vmem:[%s657 + $0x37c] sm:$0xf]
        %v2484 = vld [vmem:[%s657 + $0x380] sm:$0xf]
        %v2485 = vld [vmem:[%s657 + $0x384] sm:$0xf]
        %v2486 = vld [vmem:[%s657 + $0x388] sm:$0xf]
        %v2487 = vld [vmem:[%s657 + $0x38c] sm:$0xf]
        %v2488 = vld [vmem:[%s657 + $0x390] sm:$0xf]
        %v2489 = vld [vmem:[%s657 + $0x394] sm:$0xf]
        %v2490 = vld [vmem:[%s657 + $0x398] sm:$0xf]
        %v2491 = vld [vmem:[%s657 + $0x39c] sm:$0xf]
        %v2492 = vld [vmem:[%s657 + $0x3a0] sm:$0xf]
        %v2493 = vld [vmem:[%s657 + $0x3a4] sm:$0xf]
        %v2494 = vld [vmem:[%s657 + $0x3a8] sm:$0xf]
        %v2495 = vld [vmem:[%s657 + $0x3ac] sm:$0xf]
        %v2496 = vld [vmem:[%s657 + $0x3b0] sm:$0xf]
        %v2497 = vld [vmem:[%s657 + $0x3b4] sm:$0xf]
        %v2498 = vld [vmem:[%s657 + $0x3b8] sm:$0xf]
        %v2499 = vld [vmem:[%s657 + $0x3bc] sm:$0xf]
        %v2500 = vld [vmem:[%s657 + $0x3c0] sm:$0xf]
        %v2501 = vld [vmem:[%s657 + $0x3c4] sm:$0xf]
        %v2502 = vld [vmem:[%s657 + $0x3c8] sm:$0xf]
        %v2503 = vld [vmem:[%s657 + $0x3cc] sm:$0xf]
        %v2504 = vld [vmem:[%s657 + $0x3d0] sm:$0xf]
        %v2505 = vld [vmem:[%s657 + $0x3d4] sm:$0xf]
        %v2506 = vld [vmem:[%s657 + $0x3d8] sm:$0xf]
        %v2507 = vld [vmem:[%s657 + $0x3dc] sm:$0xf]
        %v2508 = vld [vmem:[%s657 + $0x3e0] sm:$0xf]
        %v2509 = vld [vmem:[%s657 + $0x3e4] sm:$0xf]
        %v2510 = vld [vmem:[%s657 + $0x3e8] sm:$0xf]
        %v2511 = vld [vmem:[%s657 + $0x3ec] sm:$0xf]
        %v2512 = vld [vmem:[%s657 + $0x3f0] sm:$0xf]
        %v2513 = vld [vmem:[%s657 + $0x3f4] sm:$0xf]
        %v2514 = vld [vmem:[%s657 + $0x3f8] sm:$0xf]
        %v2515 = vld [vmem:[%s657 + $0x3fc] sm:$0xf]
        %v2516 = vld [vmem:[%s660] sm:$0x1]
        %v2518 = vperm.slane %v2516, 0
        %v2776 = vunpack.c.l.b16 %v2260
        %v2777 = vunpack.c.l.b16 %v2261
        %v2778 = vunpack.c.l.b16 %v2262
        %v2779 = vunpack.c.l.b16 %v2263
        %v2780 = vunpack.c.l.b16 %v2264
        %v2781 = vunpack.c.l.b16 %v2265
        %v2782 = vunpack.c.l.b16 %v2266
        %v2783 = vunpack.c.l.b16 %v2267
        %v2784 = vunpack.c.l.b16 %v2268
        %v2785 = vunpack.c.l.b16 %v2269
        %v2786 = vunpack.c.l.b16 %v2270
        %v2787 = vunpack.c.l.b16 %v2271
        %v2788 = vunpack.c.l.b16 %v2272
        %v2789 = vunpack.c.l.b16 %v2273
        %v2790 = vunpack.c.l.b16 %v2274
        %v2791 = vunpack.c.l.b16 %v2275
        %v2792 = vunpack.c.l.b16 %v2276
        %v2793 = vunpack.c.l.b16 %v2277
        %v2794 = vunpack.c.l.b16 %v2278
        %v2795 = vunpack.c.l.b16 %v2279
        %v2796 = vunpack.c.l.b16 %v2280
        %v2797 = vunpack.c.l.b16 %v2281
        %v2798 = vunpack.c.l.b16 %v2282
        %v2799 = vunpack.c.l.b16 %v2283
        %v2800 = vunpack.c.l.b16 %v2284
        %v2801 = vunpack.c.l.b16 %v2285
        %v2802 = vunpack.c.l.b16 %v2286
        %v2803 = vunpack.c.l.b16 %v2287
        %v2804 = vunpack.c.l.b16 %v2288
        %v2805 = vunpack.c.l.b16 %v2289
        %v2806 = vunpack.c.l.b16 %v2290
        %v2807 = vunpack.c.l.b16 %v2291
        %v2808 = vunpack.c.l.b16 %v2292
        %v2809 = vunpack.c.l.b16 %v2293
        %v2810 = vunpack.c.l.b16 %v2294
        %v2811 = vunpack.c.l.b16 %v2295
        %v2812 = vunpack.c.l.b16 %v2296
        %v2813 = vunpack.c.l.b16 %v2297
        %v2814 = vunpack.c.l.b16 %v2298
        %v2815 = vunpack.c.l.b16 %v2299
        %v2816 = vunpack.c.l.b16 %v2300
        %v2817 = vunpack.c.l.b16 %v2301
        %v2818 = vunpack.c.l.b16 %v2302
        %v2819 = vunpack.c.l.b16 %v2303
        %v2820 = vunpack.c.l.b16 %v2304
        %v2821 = vunpack.c.l.b16 %v2305
        %v2822 = vunpack.c.l.b16 %v2306
        %v2823 = vunpack.c.l.b16 %v2307
        %v2824 = vunpack.c.l.b16 %v2308
        %v2825 = vunpack.c.l.b16 %v2309
        %v2826 = vunpack.c.l.b16 %v2310
        %v2827 = vunpack.c.l.b16 %v2311
        %v2828 = vunpack.c.l.b16 %v2312
        %v2829 = vunpack.c.l.b16 %v2313
        %v2830 = vunpack.c.l.b16 %v2314
        %v2831 = vunpack.c.l.b16 %v2315
        %v2832 = vunpack.c.l.b16 %v2316
        %v2833 = vunpack.c.l.b16 %v2317
        %v2834 = vunpack.c.l.b16 %v2318
        %v2835 = vunpack.c.l.b16 %v2319
        %v2836 = vunpack.c.l.b16 %v2320
        %v2837 = vunpack.c.l.b16 %v2321
        %v2838 = vunpack.c.l.b16 %v2322
        %v2839 = vunpack.c.l.b16 %v2323
        %v2840 = vunpack.c.l.b16 %v2324
        %v2841 = vunpack.c.l.b16 %v2325
        %v2842 = vunpack.c.l.b16 %v2326
        %v2843 = vunpack.c.l.b16 %v2327
        %v2844 = vunpack.c.l.b16 %v2328
        %v2845 = vunpack.c.l.b16 %v2329
        %v2846 = vunpack.c.l.b16 %v2330
        %v2847 = vunpack.c.l.b16 %v2331
        %v2848 = vunpack.c.l.b16 %v2332
        %v2849 = vunpack.c.l.b16 %v2333
        %v2850 = vunpack.c.l.b16 %v2334
        %v2851 = vunpack.c.l.b16 %v2335
        %v2852 = vunpack.c.l.b16 %v2336
        %v2853 = vunpack.c.l.b16 %v2337
        %v2854 = vunpack.c.l.b16 %v2338
        %v2855 = vunpack.c.l.b16 %v2339
        %v2856 = vunpack.c.l.b16 %v2340
        %v2857 = vunpack.c.l.b16 %v2341
        %v2858 = vunpack.c.l.b16 %v2342
        %v2859 = vunpack.c.l.b16 %v2343
        %v2860 = vunpack.c.l.b16 %v2344
        %v2861 = vunpack.c.l.b16 %v2345
        %v2862 = vunpack.c.l.b16 %v2346
        %v2863 = vunpack.c.l.b16 %v2347
        %v2864 = vunpack.c.l.b16 %v2348
        %v2865 = vunpack.c.l.b16 %v2349
        %v2866 = vunpack.c.l.b16 %v2350
        %v2867 = vunpack.c.l.b16 %v2351
        %v2868 = vunpack.c.l.b16 %v2352
        %v2869 = vunpack.c.l.b16 %v2353
        %v2870 = vunpack.c.l.b16 %v2354
        %v2871 = vunpack.c.l.b16 %v2355
        %v2872 = vunpack.c.l.b16 %v2356
        %v2873 = vunpack.c.l.b16 %v2357
        %v2874 = vunpack.c.l.b16 %v2358
        %v2875 = vunpack.c.l.b16 %v2359
        %v2876 = vunpack.c.l.b16 %v2360
        %v2877 = vunpack.c.l.b16 %v2361
        %v2878 = vunpack.c.l.b16 %v2362
        %v2879 = vunpack.c.l.b16 %v2363
        %v2880 = vunpack.c.l.b16 %v2364
        %v2881 = vunpack.c.l.b16 %v2365
        %v2882 = vunpack.c.l.b16 %v2366
        %v2883 = vunpack.c.l.b16 %v2367
        %v2884 = vunpack.c.l.b16 %v2368
        %v2885 = vunpack.c.l.b16 %v2369
        %v2886 = vunpack.c.l.b16 %v2370
        %v2887 = vunpack.c.l.b16 %v2371
        %v2888 = vunpack.c.l.b16 %v2372
        %v2889 = vunpack.c.l.b16 %v2373
        %v2890 = vunpack.c.l.b16 %v2374
        %v2891 = vunpack.c.l.b16 %v2375
        %v2892 = vunpack.c.l.b16 %v2376
        %v2893 = vunpack.c.l.b16 %v2377
        %v2894 = vunpack.c.l.b16 %v2378
        %v2895 = vunpack.c.l.b16 %v2379
        %v2896 = vunpack.c.l.b16 %v2380
        %v2897 = vunpack.c.l.b16 %v2381
        %v2898 = vunpack.c.l.b16 %v2382
        %v2899 = vunpack.c.l.b16 %v2383
        %v2900 = vunpack.c.l.b16 %v2384
        %v2901 = vunpack.c.l.b16 %v2385
        %v2902 = vunpack.c.l.b16 %v2386
        %v2903 = vunpack.c.l.b16 %v2387
        %v2904 = vunpack.c.l.b16 %v2388
        %v2905 = vunpack.c.l.b16 %v2389
        %v2906 = vunpack.c.l.b16 %v2390
        %v2907 = vunpack.c.l.b16 %v2391
        %v2908 = vunpack.c.l.b16 %v2392
        %v2909 = vunpack.c.l.b16 %v2393
        %v2910 = vunpack.c.l.b16 %v2394
        %v2911 = vunpack.c.l.b16 %v2395
        %v2912 = vunpack.c.l.b16 %v2396
        %v2913 = vunpack.c.l.b16 %v2397
        %v2914 = vunpack.c.l.b16 %v2398
        %v2915 = vunpack.c.l.b16 %v2399
        %v2916 = vunpack.c.l.b16 %v2400
        %v2917 = vunpack.c.l.b16 %v2401
        %v2918 = vunpack.c.l.b16 %v2402
        %v2919 = vunpack.c.l.b16 %v2403
        %v2920 = vunpack.c.l.b16 %v2404
        %v2921 = vunpack.c.l.b16 %v2405
        %v2922 = vunpack.c.l.b16 %v2406
        %v2923 = vunpack.c.l.b16 %v2407
        %v2924 = vunpack.c.l.b16 %v2408
        %v2925 = vunpack.c.l.b16 %v2409
        %v2926 = vunpack.c.l.b16 %v2410
        %v2927 = vunpack.c.l.b16 %v2411
        %v2928 = vunpack.c.l.b16 %v2412
        %v2929 = vunpack.c.l.b16 %v2413
        %v2930 = vunpack.c.l.b16 %v2414
        %v2931 = vunpack.c.l.b16 %v2415
        %v2932 = vunpack.c.l.b16 %v2416
        %v2933 = vunpack.c.l.b16 %v2417
        %v2934 = vunpack.c.l.b16 %v2418
        %v2935 = vunpack.c.l.b16 %v2419
        %v2936 = vunpack.c.l.b16 %v2420
        %v2937 = vunpack.c.l.b16 %v2421
        %v2938 = vunpack.c.l.b16 %v2422
        %v2939 = vunpack.c.l.b16 %v2423
        %v2940 = vunpack.c.l.b16 %v2424
        %v2941 = vunpack.c.l.b16 %v2425
        %v2942 = vunpack.c.l.b16 %v2426
        %v2943 = vunpack.c.l.b16 %v2427
        %v2944 = vunpack.c.l.b16 %v2428
        %v2945 = vunpack.c.l.b16 %v2429
        %v2946 = vunpack.c.l.b16 %v2430
        %v2947 = vunpack.c.l.b16 %v2431
        %v2948 = vunpack.c.l.b16 %v2432
        %v2949 = vunpack.c.l.b16 %v2433
        %v2950 = vunpack.c.l.b16 %v2434
        %v2951 = vunpack.c.l.b16 %v2435
        %v2952 = vunpack.c.l.b16 %v2436
        %v2953 = vunpack.c.l.b16 %v2437
        %v2954 = vunpack.c.l.b16 %v2438
        %v2955 = vunpack.c.l.b16 %v2439
        %v2956 = vunpack.c.l.b16 %v2440
        %v2957 = vunpack.c.l.b16 %v2441
        %v2958 = vunpack.c.l.b16 %v2442
        %v2959 = vunpack.c.l.b16 %v2443
        %v2960 = vunpack.c.l.b16 %v2444
        %v2961 = vunpack.c.l.b16 %v2445
        %v2962 = vunpack.c.l.b16 %v2446
        %v2963 = vunpack.c.l.b16 %v2447
        %v2964 = vunpack.c.l.b16 %v2448
        %v2965 = vunpack.c.l.b16 %v2449
        %v2966 = vunpack.c.l.b16 %v2450
        %v2967 = vunpack.c.l.b16 %v2451
        %v2968 = vunpack.c.l.b16 %v2452
        %v2969 = vunpack.c.l.b16 %v2453
        %v2970 = vunpack.c.l.b16 %v2454
        %v2971 = vunpack.c.l.b16 %v2455
        %v2972 = vunpack.c.l.b16 %v2456
        %v2973 = vunpack.c.l.b16 %v2457
        %v2974 = vunpack.c.l.b16 %v2458
        %v2975 = vunpack.c.l.b16 %v2459
        %v2976 = vunpack.c.l.b16 %v2460
        %v2977 = vunpack.c.l.b16 %v2461
        %v2978 = vunpack.c.l.b16 %v2462
        %v2979 = vunpack.c.l.b16 %v2463
        %v2980 = vunpack.c.l.b16 %v2464
        %v2981 = vunpack.c.l.b16 %v2465
        %v2982 = vunpack.c.l.b16 %v2466
        %v2983 = vunpack.c.l.b16 %v2467
        %v2984 = vunpack.c.l.b16 %v2468
        %v2985 = vunpack.c.l.b16 %v2469
        %v2986 = vunpack.c.l.b16 %v2470
        %v2987 = vunpack.c.l.b16 %v2471
        %v2988 = vunpack.c.l.b16 %v2472
        %v2989 = vunpack.c.l.b16 %v2473
        %v2990 = vunpack.c.l.b16 %v2474
        %v2991 = vunpack.c.l.b16 %v2475
        %v2992 = vunpack.c.l.b16 %v2476
        %v2993 = vunpack.c.l.b16 %v2477
        %v2994 = vunpack.c.l.b16 %v2478
        %v2995 = vunpack.c.l.b16 %v2479
        %v2996 = vunpack.c.l.b16 %v2480
        %v2997 = vunpack.c.l.b16 %v2481
        %v2998 = vunpack.c.l.b16 %v2482
        %v2999 = vunpack.c.l.b16 %v2483
        %v3000 = vunpack.c.l.b16 %v2484
        %v3001 = vunpack.c.l.b16 %v2485
        %v3002 = vunpack.c.l.b16 %v2486
        %v3003 = vunpack.c.l.b16 %v2487
        %v3004 = vunpack.c.l.b16 %v2488
        %v3005 = vunpack.c.l.b16 %v2489
        %v3006 = vunpack.c.l.b16 %v2490
        %v3007 = vunpack.c.l.b16 %v2491
        %v3008 = vunpack.c.l.b16 %v2492
        %v3009 = vunpack.c.l.b16 %v2493
        %v3010 = vunpack.c.l.b16 %v2494
        %v3011 = vunpack.c.l.b16 %v2495
        %v3012 = vunpack.c.l.b16 %v2496
        %v3013 = vunpack.c.l.b16 %v2497
        %v3014 = vunpack.c.l.b16 %v2498
        %v3015 = vunpack.c.l.b16 %v2499
        %v3016 = vunpack.c.l.b16 %v2500
        %v3017 = vunpack.c.l.b16 %v2501
        %v3018 = vunpack.c.l.b16 %v2502
        %v3019 = vunpack.c.l.b16 %v2503
        %v3020 = vunpack.c.l.b16 %v2504
        %v3021 = vunpack.c.l.b16 %v2505
        %v3022 = vunpack.c.l.b16 %v2506
        %v3023 = vunpack.c.l.b16 %v2507
        %v3024 = vunpack.c.l.b16 %v2508
        %v3025 = vunpack.c.l.b16 %v2509
        %v3026 = vunpack.c.l.b16 %v2510
        %v3027 = vunpack.c.l.b16 %v2511
        %v3028 = vunpack.c.l.b16 %v2512
        %v3029 = vunpack.c.l.b16 %v2513
        %v3030 = vunpack.c.l.b16 %v2514
        %v3031 = vunpack.c.l.b16 %v2515
        %v3032 = vpack.c.b16 %v2777, %v2776
        %v3033 = vpack.c.b16 %v2779, %v2778
        %v3034 = vpack.c.b16 %v2781, %v2780
        %v3035 = vpack.c.b16 %v2783, %v2782
        %v3036 = vpack.c.b16 %v2785, %v2784
        %v3037 = vpack.c.b16 %v2787, %v2786
        %v3038 = vpack.c.b16 %v2789, %v2788
        %v3039 = vpack.c.b16 %v2791, %v2790
        %v3040 = vpack.c.b16 %v2793, %v2792
        %v3041 = vpack.c.b16 %v2795, %v2794
        %v3042 = vpack.c.b16 %v2797, %v2796
        %v3043 = vpack.c.b16 %v2799, %v2798
        %v3044 = vpack.c.b16 %v2801, %v2800
        %v3045 = vpack.c.b16 %v2803, %v2802
        %v3046 = vpack.c.b16 %v2805, %v2804
        %v3047 = vpack.c.b16 %v2807, %v2806
        %v3048 = vpack.c.b16 %v2809, %v2808
        %v3049 = vpack.c.b16 %v2811, %v2810
        %v3050 = vpack.c.b16 %v2813, %v2812
        %v3051 = vpack.c.b16 %v2815, %v2814
        %v3052 = vpack.c.b16 %v2817, %v2816
        %v3053 = vpack.c.b16 %v2819, %v2818
        %v3054 = vpack.c.b16 %v2821, %v2820
        %v3055 = vpack.c.b16 %v2823, %v2822
        %v3056 = vpack.c.b16 %v2825, %v2824
        %v3057 = vpack.c.b16 %v2827, %v2826
        %v3058 = vpack.c.b16 %v2829, %v2828
        %v3059 = vpack.c.b16 %v2831, %v2830
        %v3060 = vpack.c.b16 %v2833, %v2832
        %v3061 = vpack.c.b16 %v2835, %v2834
        %v3062 = vpack.c.b16 %v2837, %v2836
        %v3063 = vpack.c.b16 %v2839, %v2838
        %v3064 = vpack.c.b16 %v2841, %v2840
        %v3065 = vpack.c.b16 %v2843, %v2842
        %v3066 = vpack.c.b16 %v2845, %v2844
        %v3067 = vpack.c.b16 %v2847, %v2846
        %v3068 = vpack.c.b16 %v2849, %v2848
        %v3069 = vpack.c.b16 %v2851, %v2850
        %v3070 = vpack.c.b16 %v2853, %v2852
        %v3071 = vpack.c.b16 %v2855, %v2854
        %v3072 = vpack.c.b16 %v2857, %v2856
        %v3073 = vpack.c.b16 %v2859, %v2858
        %v3074 = vpack.c.b16 %v2861, %v2860
        %v3075 = vpack.c.b16 %v2863, %v2862
        %v3076 = vpack.c.b16 %v2865, %v2864
        %v3077 = vpack.c.b16 %v2867, %v2866
        %v3078 = vpack.c.b16 %v2869, %v2868
        %v3079 = vpack.c.b16 %v2871, %v2870
        %v3080 = vpack.c.b16 %v2873, %v2872
        %v3081 = vpack.c.b16 %v2875, %v2874
        %v3082 = vpack.c.b16 %v2877, %v2876
        %v3083 = vpack.c.b16 %v2879, %v2878
        %v3084 = vpack.c.b16 %v2881, %v2880
        %v3085 = vpack.c.b16 %v2883, %v2882
        %v3086 = vpack.c.b16 %v2885, %v2884
        %v3087 = vpack.c.b16 %v2887, %v2886
        %v3088 = vpack.c.b16 %v2889, %v2888
        %v3089 = vpack.c.b16 %v2891, %v2890
        %v3090 = vpack.c.b16 %v2893, %v2892
        %v3091 = vpack.c.b16 %v2895, %v2894
        %v3092 = vpack.c.b16 %v2897, %v2896
        %v3093 = vpack.c.b16 %v2899, %v2898
        %v3094 = vpack.c.b16 %v2901, %v2900
        %v3095 = vpack.c.b16 %v2903, %v2902
        %v3096 = vpack.c.b16 %v2905, %v2904
        %v3097 = vpack.c.b16 %v2907, %v2906
        %v3098 = vpack.c.b16 %v2909, %v2908
        %v3099 = vpack.c.b16 %v2911, %v2910
        %v3100 = vpack.c.b16 %v2913, %v2912
        %v3101 = vpack.c.b16 %v2915, %v2914
        %v3102 = vpack.c.b16 %v2917, %v2916
        %v3103 = vpack.c.b16 %v2919, %v2918
        %v3104 = vpack.c.b16 %v2921, %v2920
        %v3105 = vpack.c.b16 %v2923, %v2922
        %v3106 = vpack.c.b16 %v2925, %v2924
        %v3107 = vpack.c.b16 %v2927, %v2926
        %v3108 = vpack.c.b16 %v2929, %v2928
        %v3109 = vpack.c.b16 %v2931, %v2930
        %v3110 = vpack.c.b16 %v2933, %v2932
        %v3111 = vpack.c.b16 %v2935, %v2934
        %v3112 = vpack.c.b16 %v2937, %v2936
        %v3113 = vpack.c.b16 %v2939, %v2938
        %v3114 = vpack.c.b16 %v2941, %v2940
        %v3115 = vpack.c.b16 %v2943, %v2942
        %v3116 = vpack.c.b16 %v2945, %v2944
        %v3117 = vpack.c.b16 %v2947, %v2946
        %v3118 = vpack.c.b16 %v2949, %v2948
        %v3119 = vpack.c.b16 %v2951, %v2950
        %v3120 = vpack.c.b16 %v2953, %v2952
        %v3121 = vpack.c.b16 %v2955, %v2954
        %v3122 = vpack.c.b16 %v2957, %v2956
        %v3123 = vpack.c.b16 %v2959, %v2958
        %v3124 = vpack.c.b16 %v2961, %v2960
        %v3125 = vpack.c.b16 %v2963, %v2962
        %v3126 = vpack.c.b16 %v2965, %v2964
        %v3127 = vpack.c.b16 %v2967, %v2966
        %v3128 = vpack.c.b16 %v2969, %v2968
        %v3129 = vpack.c.b16 %v2971, %v2970
        %v3130 = vpack.c.b16 %v2973, %v2972
        %v3131 = vpack.c.b16 %v2975, %v2974
        %v3132 = vpack.c.b16 %v2977, %v2976
        %v3133 = vpack.c.b16 %v2979, %v2978
        %v3134 = vpack.c.b16 %v2981, %v2980
        %v3135 = vpack.c.b16 %v2983, %v2982
        %v3136 = vpack.c.b16 %v2985, %v2984
        %v3137 = vpack.c.b16 %v2987, %v2986
        %v3138 = vpack.c.b16 %v2989, %v2988
        %v3139 = vpack.c.b16 %v2991, %v2990
        %v3140 = vpack.c.b16 %v2993, %v2992
        %v3141 = vpack.c.b16 %v2995, %v2994
        %v3142 = vpack.c.b16 %v2997, %v2996
        %v3143 = vpack.c.b16 %v2999, %v2998
        %v3144 = vpack.c.b16 %v3001, %v3000
        %v3145 = vpack.c.b16 %v3003, %v3002
        %v3146 = vpack.c.b16 %v3005, %v3004
        %v3147 = vpack.c.b16 %v3007, %v3006
        %v3148 = vpack.c.b16 %v3009, %v3008
        %v3149 = vpack.c.b16 %v3011, %v3010
        %v3150 = vpack.c.b16 %v3013, %v3012
        %v3151 = vpack.c.b16 %v3015, %v3014
        %v3152 = vpack.c.b16 %v3017, %v3016
        %v3153 = vpack.c.b16 %v3019, %v3018
        %v3154 = vpack.c.b16 %v3021, %v3020
        %v3155 = vpack.c.b16 %v3023, %v3022
        %v3156 = vpack.c.b16 %v3025, %v3024
        %v3157 = vpack.c.b16 %v3027, %v3026
        %v3158 = vpack.c.b16 %v3029, %v3028
        %v3159 = vpack.c.b16 %v3031, %v3030
        %3288 = vmatpush.bf16.msra.mxu0 %v3039
        %3289 = vmatpush.bf16.msra.mxu0 %v3038
        %3290 = vmatpush.bf16.msra.mxu0 %v3037
        %3291 = vmatpush.bf16.msra.mxu0 %v3036
        %3292 = vmatpush.bf16.msra.mxu0 %v3035
        %3293 = vmatpush.bf16.msra.mxu0 %v3034
        %3294 = vmatpush.bf16.msra.mxu0 %v3033
        %3295 = vmatpush.bf16.msra.mxu0 %v3032
        %3296 = vmatmul.bf16.gmra.mxu0 %v2244
        %v3297 = vpop.f32.mrf.mxu0
        %v3298 = vadd.f32 %v2518, %v3297
        %v3299 = vpop.f32.mrf.mxu0
        %v3300 = vadd.f32 %v2518, %v3299
        %3301 = vdwg.mxu0
        %3302 = vmatpush.bf16.msra.mxu0 %v3047
        %3303 = vmatpush.bf16.msra.mxu0 %v3046
        %3304 = vmatpush.bf16.msra.mxu0 %v3045
        %3305 = vmatpush.bf16.msra.mxu0 %v3044
        %3306 = vmatpush.bf16.msra.mxu0 %v3043
        %3307 = vmatpush.bf16.msra.mxu0 %v3042
        %3308 = vmatpush.bf16.msra.mxu0 %v3041
        %3309 = vmatpush.bf16.msra.mxu0 %v3040
        %3310 = vmatmul.bf16.gmra.mxu0 %v2245
        %v3311 = vpop.f32.mrf.mxu0
        %v3312 = vadd.f32 %v3298, %v3311
        %v3313 = vpop.f32.mrf.mxu0
        %v3314 = vadd.f32 %v3300, %v3313
        %3315 = vdwg.mxu0
        %3316 = vmatpush.bf16.msra.mxu0 %v3055
        %3317 = vmatpush.bf16.msra.mxu0 %v3054
        %3318 = vmatpush.bf16.msra.mxu0 %v3053
        %3319 = vmatpush.bf16.msra.mxu0 %v3052
        %3320 = vmatpush.bf16.msra.mxu0 %v3051
        %3321 = vmatpush.bf16.msra.mxu0 %v3050
        %3322 = vmatpush.bf16.msra.mxu0 %v3049
        %3323 = vmatpush.bf16.msra.mxu0 %v3048
        %3324 = vmatmul.bf16.gmra.mxu0 %v2246
        %v3325 = vpop.f32.mrf.mxu0
        %v3326 = vadd.f32 %v3312, %v3325
        %v3327 = vpop.f32.mrf.mxu0
        %v3328 = vadd.f32 %v3314, %v3327
        %3329 = vdwg.mxu0
        %3330 = vmatpush.bf16.msra.mxu0 %v3063
        %3331 = vmatpush.bf16.msra.mxu0 %v3062
        %3332 = vmatpush.bf16.msra.mxu0 %v3061
        %3333 = vmatpush.bf16.msra.mxu0 %v3060
        %3334 = vmatpush.bf16.msra.mxu0 %v3059
        %3335 = vmatpush.bf16.msra.mxu0 %v3058
        %3336 = vmatpush.bf16.msra.mxu0 %v3057
        %3337 = vmatpush.bf16.msra.mxu0 %v3056
        %3338 = vmatmul.bf16.gmra.mxu0 %v2247
        %v3339 = vpop.f32.mrf.mxu0
        %v3340 = vadd.f32 %v3326, %v3339
        %v3341 = vpop.f32.mrf.mxu0
        %v3342 = vadd.f32 %v3328, %v3341
        %3343 = vdwg.mxu0
        %3344 = vmatpush.bf16.msra.mxu0 %v3071
        %3345 = vmatpush.bf16.msra.mxu0 %v3070
        %3346 = vmatpush.bf16.msra.mxu0 %v3069
        %3347 = vmatpush.bf16.msra.mxu0 %v3068
        %3348 = vmatpush.bf16.msra.mxu0 %v3067
        %3349 = vmatpush.bf16.msra.mxu0 %v3066
        %3350 = vmatpush.bf16.msra.mxu0 %v3065
        %3351 = vmatpush.bf16.msra.mxu0 %v3064
        %3352 = vmatmul.bf16.gmra.mxu0 %v2248
        %v3353 = vpop.f32.mrf.mxu0
        %v3354 = vadd.f32 %v3340, %v3353
        %v3355 = vpop.f32.mrf.mxu0
        %v3356 = vadd.f32 %v3342, %v3355
        %3357 = vdwg.mxu0
        %3358 = vmatpush.bf16.msra.mxu0 %v3079
        %3359 = vmatpush.bf16.msra.mxu0 %v3078
        %3360 = vmatpush.bf16.msra.mxu0 %v3077
        %3361 = vmatpush.bf16.msra.mxu0 %v3076
        %3362 = vmatpush.bf16.msra.mxu0 %v3075
        %3363 = vmatpush.bf16.msra.mxu0 %v3074
        %3364 = vmatpush.bf16.msra.mxu0 %v3073
        %3365 = vmatpush.bf16.msra.mxu0 %v3072
        %3366 = vmatmul.bf16.gmra.mxu0 %v2249
        %v3367 = vpop.f32.mrf.mxu0
        %v3368 = vadd.f32 %v3354, %v3367
        %v3369 = vpop.f32.mrf.mxu0
        %v3370 = vadd.f32 %v3356, %v3369
        %3371 = vdwg.mxu0
        %3372 = vmatpush.bf16.msra.mxu0 %v3087
        %3373 = vmatpush.bf16.msra.mxu0 %v3086
        %3374 = vmatpush.bf16.msra.mxu0 %v3085
        %3375 = vmatpush.bf16.msra.mxu0 %v3084
        %3376 = vmatpush.bf16.msra.mxu0 %v3083
        %3377 = vmatpush.bf16.msra.mxu0 %v3082
        %3378 = vmatpush.bf16.msra.mxu0 %v3081
        %3379 = vmatpush.bf16.msra.mxu0 %v3080
        %3380 = vmatmul.bf16.gmra.mxu0 %v2250
        %v3381 = vpop.f32.mrf.mxu0
        %v3382 = vadd.f32 %v3368, %v3381
        %v3383 = vpop.f32.mrf.mxu0
        %v3384 = vadd.f32 %v3370, %v3383
        %3385 = vdwg.mxu0
        %3386 = vmatpush.bf16.msra.mxu0 %v3095
        %3387 = vmatpush.bf16.msra.mxu0 %v3094
        %3388 = vmatpush.bf16.msra.mxu0 %v3093
        %3389 = vmatpush.bf16.msra.mxu0 %v3092
        %3390 = vmatpush.bf16.msra.mxu0 %v3091
        %3391 = vmatpush.bf16.msra.mxu0 %v3090
        %3392 = vmatpush.bf16.msra.mxu0 %v3089
        %3393 = vmatpush.bf16.msra.mxu0 %v3088
        %3394 = vmatmul.bf16.gmra.mxu0 %v2251
        %v3395 = vpop.f32.mrf.mxu0
        %v3396 = vadd.f32 %v3382, %v3395
        %v3397 = vpop.f32.mrf.mxu0
        %v3398 = vadd.f32 %v3384, %v3397
        %3399 = vdwg.mxu0
        %3400 = vmatpush.bf16.msra.mxu0 %v3103
        %3401 = vmatpush.bf16.msra.mxu0 %v3102
        %3402 = vmatpush.bf16.msra.mxu0 %v3101
        %3403 = vmatpush.bf16.msra.mxu0 %v3100
        %3404 = vmatpush.bf16.msra.mxu0 %v3099
        %3405 = vmatpush.bf16.msra.mxu0 %v3098
        %3406 = vmatpush.bf16.msra.mxu0 %v3097
        %3407 = vmatpush.bf16.msra.mxu0 %v3096
        %3408 = vmatmul.bf16.gmra.mxu0 %v2252
        %v3409 = vpop.f32.mrf.mxu0
        %v3410 = vadd.f32 %v3396, %v3409
        %v3411 = vpop.f32.mrf.mxu0
        %v3412 = vadd.f32 %v3398, %v3411
        %3413 = vdwg.mxu0
        %3414 = vmatpush.bf16.msra.mxu0 %v3111
        %3415 = vmatpush.bf16.msra.mxu0 %v3110
        %3416 = vmatpush.bf16.msra.mxu0 %v3109
        %3417 = vmatpush.bf16.msra.mxu0 %v3108
        %3418 = vmatpush.bf16.msra.mxu0 %v3107
        %3419 = vmatpush.bf16.msra.mxu0 %v3106
        %3420 = vmatpush.bf16.msra.mxu0 %v3105
        %3421 = vmatpush.bf16.msra.mxu0 %v3104
        %3422 = vmatmul.bf16.gmra.mxu0 %v2253
        %v3423 = vpop.f32.mrf.mxu0
        %v3424 = vadd.f32 %v3410, %v3423
        %v3425 = vpop.f32.mrf.mxu0
        %v3426 = vadd.f32 %v3412, %v3425
        %3427 = vdwg.mxu0
        %3428 = vmatpush.bf16.msra.mxu0 %v3119
        %3429 = vmatpush.bf16.msra.mxu0 %v3118
        %3430 = vmatpush.bf16.msra.mxu0 %v3117
        %3431 = vmatpush.bf16.msra.mxu0 %v3116
        %3432 = vmatpush.bf16.msra.mxu0 %v3115
        %3433 = vmatpush.bf16.msra.mxu0 %v3114
        %3434 = vmatpush.bf16.msra.mxu0 %v3113
        %3435 = vmatpush.bf16.msra.mxu0 %v3112
        %3436 = vmatmul.bf16.gmra.mxu0 %v2254
        %v3437 = vpop.f32.mrf.mxu0
        %v3438 = vadd.f32 %v3424, %v3437
        %v3439 = vpop.f32.mrf.mxu0
        %v3440 = vadd.f32 %v3426, %v3439
        %3441 = vdwg.mxu0
        %3442 = vmatpush.bf16.msra.mxu0 %v3127
        %3443 = vmatpush.bf16.msra.mxu0 %v3126
        %3444 = vmatpush.bf16.msra.mxu0 %v3125
        %3445 = vmatpush.bf16.msra.mxu0 %v3124
        %3446 = vmatpush.bf16.msra.mxu0 %v3123
        %3447 = vmatpush.bf16.msra.mxu0 %v3122
        %3448 = vmatpush.bf16.msra.mxu0 %v3121
        %3449 = vmatpush.bf16.msra.mxu0 %v3120
        %3450 = vmatmul.bf16.gmra.mxu0 %v2255
        %v3451 = vpop.f32.mrf.mxu0
        %v3452 = vadd.f32 %v3438, %v3451
        %v3453 = vpop.f32.mrf.mxu0
        %v3454 = vadd.f32 %v3440, %v3453
        %3455 = vdwg.mxu0
        %3456 = vmatpush.bf16.msra.mxu0 %v3135
        %3457 = vmatpush.bf16.msra.mxu0 %v3134
        %3458 = vmatpush.bf16.msra.mxu0 %v3133
        %3459 = vmatpush.bf16.msra.mxu0 %v3132
        %3460 = vmatpush.bf16.msra.mxu0 %v3131
        %3461 = vmatpush.bf16.msra.mxu0 %v3130
        %3462 = vmatpush.bf16.msra.mxu0 %v3129
        %3463 = vmatpush.bf16.msra.mxu0 %v3128
        %3464 = vmatmul.bf16.gmra.mxu0 %v2256
        %v3465 = vpop.f32.mrf.mxu0
        %v3466 = vadd.f32 %v3452, %v3465
        %v3467 = vpop.f32.mrf.mxu0
        %v3468 = vadd.f32 %v3454, %v3467
        %3469 = vdwg.mxu0
        %3470 = vmatpush.bf16.msra.mxu0 %v3143
        %3471 = vmatpush.bf16.msra.mxu0 %v3142
        %3472 = vmatpush.bf16.msra.mxu0 %v3141
        %3473 = vmatpush.bf16.msra.mxu0 %v3140
        %3474 = vmatpush.bf16.msra.mxu0 %v3139
        %3475 = vmatpush.bf16.msra.mxu0 %v3138
        %3476 = vmatpush.bf16.msra.mxu0 %v3137
        %3477 = vmatpush.bf16.msra.mxu0 %v3136
        %3478 = vmatmul.bf16.gmra.mxu0 %v2257
        %v3479 = vpop.f32.mrf.mxu0
        %v3480 = vadd.f32 %v3466, %v3479
        %v3481 = vpop.f32.mrf.mxu0
        %v3482 = vadd.f32 %v3468, %v3481
        %3483 = vdwg.mxu0
        %3484 = vmatpush.bf16.msra.mxu0 %v3151
        %3485 = vmatpush.bf16.msra.mxu0 %v3150
        %3486 = vmatpush.bf16.msra.mxu0 %v3149
        %3487 = vmatpush.bf16.msra.mxu0 %v3148
        %3488 = vmatpush.bf16.msra.mxu0 %v3147
        %3489 = vmatpush.bf16.msra.mxu0 %v3146
        %3490 = vmatpush.bf16.msra.mxu0 %v3145
        %3491 = vmatpush.bf16.msra.mxu0 %v3144
        %3492 = vmatmul.bf16.gmra.mxu0 %v2258
        %v3493 = vpop.f32.mrf.mxu0
        %v3494 = vadd.f32 %v3480, %v3493
        %v3495 = vpop.f32.mrf.mxu0
        %v3496 = vadd.f32 %v3482, %v3495
        %3497 = vdwg.mxu0
        %3498 = vmatpush.bf16.msra.mxu0 %v3159
        %3499 = vmatpush.bf16.msra.mxu0 %v3158
        %3500 = vmatpush.bf16.msra.mxu0 %v3157
        %3501 = vmatpush.bf16.msra.mxu0 %v3156
        %3502 = vmatpush.bf16.msra.mxu0 %v3155
        %3503 = vmatpush.bf16.msra.mxu0 %v3154
        %3504 = vmatpush.bf16.msra.mxu0 %v3153
        %3505 = vmatpush.bf16.msra.mxu0 %v3152
        %3506 = vmatmul.bf16.gmra.mxu0 %v2259
        %v3507 = vpop.f32.mrf.mxu0
        %v3508 = vadd.f32 %v3494, %v3507
        %v3509 = vpop.f32.mrf.mxu0
        %v3510 = vadd.f32 %v3496, %v3509
        %3511 = vdwg.mxu0
        %v3512 = vadd.f32 %v1672, %v3508
        %v3513 = vadd.f32 %v1673, %v3510
        %3514 = vst.msk [vmem:[#allocation2] sm:$0xff] %vm675, %v3512
        %3515 = vst.msk [vmem:[#allocation2 + $0x8] sm:$0xff] %vm675, %v3513
        %p3516 = scmp.eq.s32.totalorder %s28, 1
        // Predicated region
        $region89: #{encoder_forward.1} parent=83 // pred_check
          %p3517 = pneg %p3516
        $region90: #{encoder_forward.1} parent=83 // pred_check_branch
          %3519 = sbr.rel (%p3517) target = $region92
        $region91: #{encoder_forward.1} parent=83 // pred_region
          %v3520 = vld [vmem:[%s6] sm:$0x1]
          %v3521 = vld [vmem:[%s7] sm:$0x1]
          %v3522 = vsel %vm675, %v3512, 0.0
          %3523 = vadd.xlane.f32.xlu0 %v3522
          %v3524 = vpop.xlane.xlu0 %3523
          %v3525 = vsel %vm675, %v3513, 0.0
          %3526 = vadd.xlane.f32.xlu0 %v3525
          %v3527 = vpop.xlane.xlu0 %3526
          %v3528 = vmul.f32 %v3524, %v688
          %v3529 = vmul.f32 %v3527, %v688
          %v3530 = vsub.f32 %v3512, %v3528
          %v3531 = vsub.f32 %v3513, %v3529
          %v3532 = vmul.f32 %v3530, %v3530
          %v3533 = vmul.f32 %v3531, %v3531
          %v3534 = vsel %vm675, %v3532, 0.0
          %3535 = vadd.xlane.f32.xlu0 %v3534
          %v3536 = vpop.xlane.xlu0 %3535
          %v3537 = vsel %vm675, %v3533, 0.0
          %3538 = vadd.xlane.f32.xlu0 %v3537
          %v3539 = vpop.xlane.xlu0 %3538
          %v3540 = vmul.f32 %v3536, 0.032258064
          %v3541 = vmul.f32 %v3539, 0.032258064
          %v3543 = vperm.slane %v3520, 0
          %v3545 = vmul.f32 %v3543, %v3530
          %v3546 = vmul.f32 %v3543, %v3531
          %v3547 = vrsqrt.pop %v3540
          %v3548 = vmul.f32 %v3547, %v3540
          %v3549 = vmul.f32 %v3548, %v3547
          %v3550 = vmul.f32 0.5, %v3549
          %v3551 = vsub.f32 1.5, %v3550
          %v3552 = vmul.f32 %v3547, %v3551
          %v3553 = vmul.f32 %v3540, %v3552
          %vm3554 = vcmp.eq.f32.partialorder %v3540, inf
          %v3555 = vsel %vm3554, %v3540, %v3553
          %vm3556 = vcmp.eq.f32.partialorder %v3540, 0.0
          %v3557 = vand.u32 %v3540, 2147483648
          %v3558 = vsel %vm3556, %v3557, %v3555
          %v3559 = vrsqrt.pop %v3541
          %v3560 = vmul.f32 %v3559, %v3541
          %v3561 = vmul.f32 %v3560, %v3559
          %v3562 = vmul.f32 0.5, %v3561
          %v3563 = vsub.f32 1.5, %v3562
          %v3564 = vmul.f32 %v3559, %v3563
          %v3565 = vmul.f32 %v3541, %v3564
          %vm3566 = vcmp.eq.f32.partialorder %v3541, inf
          %v3567 = vsel %vm3566, %v3541, %v3565
          %vm3568 = vcmp.eq.f32.partialorder %v3541, 0.0
          %v3569 = vand.u32 %v3541, 2147483648
          %v3570 = vsel %vm3568, %v3569, %v3567
          %v3571 = vadd.f32 %v3558, 1e-06
          %v3572 = vadd.f32 %v3570, 1e-06
          %v3573 = vrcp.pop %v3571
          %v3574 = vmul.f32 %v3571, %v3573
          %v3575 = vsub.f32 1.0, %v3574
          %v3576 = vmul.f32 %v3573, %v3575
          %v3577 = vadd.f32 %v3573, %v3576
          %vm3578 = vweird.f32 %v3571
          %vm3579 = vweird.f32 %v3573
          %vm3580 = vmor %vm3578, %vm3579
          %v3581 = vsel %vm3580, %v3573, %v3577
          %v3582 = vand.u32 2147483647, %v3571
          %vm3583 = vcmp.eq.f32.partialorder %v3582, 8.507059e+37
          %v3584 = vand.u32 %v3571, 2147483648
          %v3585 = vor.u32 1.1754944e-38, %v3584
          %v3586 = vsel %vm3583, %v3585, %v3581
          %v3587 = vmul.f32 %v3545, %v3586
          %v3588 = vrcp.pop %v3572
          %v3589 = vmul.f32 %v3572, %v3588
          %v3590 = vsub.f32 1.0, %v3589
          %v3591 = vmul.f32 %v3588, %v3590
          %v3592 = vadd.f32 %v3588, %v3591
          %vm3593 = vweird.f32 %v3572
          %vm3594 = vweird.f32 %v3588
          %vm3595 = vmor %vm3593, %vm3594
          %v3596 = vsel %vm3595, %v3588, %v3592
          %v3597 = vand.u32 2147483647, %v3572
          %vm3598 = vcmp.eq.f32.partialorder %v3597, 8.507059e+37
          %v3599 = vand.u32 %v3572, 2147483648
          %v3600 = vor.u32 1.1754944e-38, %v3599
          %v3601 = vsel %vm3598, %v3600, %v3596
          %v3602 = vmul.f32 %v3546, %v3601
          %v3604 = vperm.slane %v3521, 0
          %v3606 = vadd.f32 %v3587, %v3604
          %v3607 = vadd.f32 %v3602, %v3604
          %3608 = vst.msk [vmem:[#allocation3] sm:$0xff] %vm675, %v3606
          %3609 = vst.msk [vmem:[#allocation3 + $0x8] sm:$0xff] %vm675, %v3607
        $region92: #{encoder_forward.1} parent=83 // pred_fallthru
          _
        // Predicated region
        $region93: #{encoder_forward.1} parent=83 // pred_check
          %p3610 = pneg %p427
        $region94: #{encoder_forward.1} parent=83 // pred_check_branch
          %3612 = sbr.rel (%p3610) target = $region96
        $region95: #{encoder_forward.1} parent=83 // pred_region
          %3614 = vsyncadd [#allocation4], 0
          %s3615 = sshll.u32 [#allocation3], 4
          %s3616 = int_to_ptr.vmem [resolvable:$true] %s3615
          %s3617 = sshll.u32 %s16, 4
          %s3618 = int_to_ptr.hbm [resolvable:$true] %s3617
          %3623 = dma.vmem_to_hbm [thread:$0]  %s3616, 256, %s3618, [#allocation4], 128, 128, 8
        $region96: #{encoder_forward.1} parent=83 // pred_fallthru
          _
        // Predicated region
        $region97: #{encoder_forward.1} parent=83 // pred_check
          %p3624 = pneg %p427
        $region98: #{encoder_forward.1} parent=83 // pred_check_branch
          %3626 = sbr.rel (%p3624) target = $region100
        $region99: #{encoder_forward.1} parent=83 // pred_region
          %3628 = dma.done [#allocation4], 256
        $region100: #{encoder_forward.1} parent=83 // pred_fallthru
          _
      $region84: #{encoder_forward.1} parent=5 // pred_fallthru
        _
      %p3629 = scmp.le.s32.totalorder 2, %s23
      // Predicated region
      $region101: #{encoder_forward.1} parent=5 // pred_check
        %p3630 = pneg %p3629
      $region102: #{encoder_forward.1} parent=5 // pred_check_branch
        %3632 = sbr.rel (%p3630) target = $region104
      $region103: #{encoder_forward.1} parent=5 // pred_region
        %s3633 = ssub.s32 %s23, 2
      $region104: #{encoder_forward.1} parent=5 // pred_fallthru
        _
    $region6: #{encoder_forward.1} parent=1 // loop_footer
      %s27 = sadd.s32 1, %s23
    $region7: #{encoder_forward.1} parent=1 // loop_footer_branch
      %22 = sbr.rel target = $region3
    $region8: #{encoder_forward.1} parent=1 // loop_exit
      _
    %3634 = vsyncpa [#allocation4], 1
    %s3635 = scalar_lea.sflag [#allocation4], 1
    %3636 = vsyncpa %s3635, 1

</llo_original>
